<compile_context>
chip_gen: v5e
topology: v5e:2x2
jax: 0.10.0
libtpu: 0.0.40
codegen_flags: <defaults>
</compile_context>

<pallas_src>
import jax
import jax.numpy as jnp
from jax.experimental import pallas as pl
from jax.experimental.pallas import tpu as pltpu


# ----------------------------- shared math ---------------------------------

def _round_up(x, m):
    return (x + m - 1) // m * m


def _layernorm(x, gamma, beta, eps=1e-5):
    # var = E[x^2] - mu^2: the two cross-lane reductions are independent
    # (shorter XLU/VPU critical path than the serialized (x - mu)**2 form).
    mu = jnp.mean(x, axis=-1, keepdims=True)
    var = jnp.maximum(jnp.mean(x * x, axis=-1, keepdims=True) - mu * mu, 0.0)
    return (x - mu) * jax.lax.rsqrt(var + eps) * gamma + beta


def _recip(x, approx):
    if approx:
        return pl.reciprocal(x, approx=True)   # EUP slot inside the kernel
    return 1.0 / x                              # exact path for the reference


# Row layout of the packed `vecs` (10, D) f32 input.
(_G_MED, _B_MED, _G_FF, _B_FF, _B2,
 _G_FIN, _B_FIN, _G_POOL, _B_POOL, _W_POOL) = range(10)

PREP_PARAM_NAMES = (
    "vecs",       # (10, D) f32  packed LN gammas/betas, FFN b2, pooling weight row
    "lat_stats",  # (2, N)  f32  hoisted latent-softmax stats [m_l ; sum_l]
    "latents",    # (N, D)  f32  resampler latents (residual base)
    "pv_l0",      # (N, D)  f32  hoisted  sum_l exp(sim_l - m_l) @ v_l
    "w_xv",       # (D, D)  bf16 media value projection
    "w_xs",       # (D, N)  bf16 media score projection (w_k @ q^T, scale folded)
    "wo",         # (D, D)  bf16 attention output projection
    "w1", "b1", "w2",            # FFN
    "wc1", "bc1", "wc2", "bc2",  # classifier (wc2/bc2 lane-padded)
)


def _forward_block(x, p, *, approx_recip=False):
    """Forward for a block of BB batch elements. x: (BB, v, D) -> (BB, C_pad) f32."""
    f32 = jnp.float32
    BB, v, D = x.shape
    vecs = p["vecs"].astype(f32)
    stats = p["lat_stats"].astype(f32)
    lat0 = p["latents"].astype(f32)
    pv_l0 = p["pv_l0"].astype(f32)
    N = lat0.shape[0]
    mxu = p["w_xv"].dtype                        # bf16 MXU operands, f32 accumulation

    m_l = stats[0:1]                             # (1, N) hoisted row-max of sim_l
    sum_l = stats[1:2]                           # (1, N) hoisted exp-sum of sim_l

    # --- media branch: LayerNorm + flat value / score projections -------------
    x_n = _layernorm(x.reshape(BB * v, D).astype(f32),
                     vecs[_G_MED], vecs[_B_MED]).astype(mxu)             # (BB*v, D)
    v_x = jnp.dot(x_n, p["w_xv"], preferred_element_type=f32)            # (BB*v, D)
    sim_x = jnp.dot(x_n, p["w_xs"], preferred_element_type=f32)          # (BB*v, N)
    sim_x = sim_x.reshape(BB, v, N)

    # --- two-piece softmax over [media keys ; latent keys] --------------------
    # The latent-key piece is batch-invariant and hoisted to the wrapper; only
    # the media piece + the merge (correction factors a_x / a_l) happen here.
    m_x3 = sim_x.max(axis=1, keepdims=True)                              # (BB, 1, N)
    e_x = jnp.exp(sim_x - m_x3)                                          # (BB, v, N)
    s_x = e_x.sum(axis=1).reshape(BB, N)
    m_x = m_x3.reshape(BB, N)
    pv_x = jnp.einsum("bvn,bvd->bnd", e_x.astype(mxu),
                      v_x.reshape(BB, v, D).astype(mxu),
                      preferred_element_type=f32)                        # (BB, N, D)
    # TODO(synk): pv_x is the one remaining batched matmul; a single-GEMM form
    #   needs a block-diagonal score matrix (BBx the FLOPs) -> not a win.

    m = jnp.maximum(m_x, m_l)                                            # (BB, N)
    a_x = jnp.exp(m_x - m)
    a_l = jnp.exp(m_l - m)
    inv = _recip(a_x * s_x + a_l * sum_l, approx_recip)
    w_x = (a_x * inv)[:, :, None]                                        # (BB, N, 1)
    w_l = (a_l * inv)[:, :, None]
    attn = pv_x * w_x + pv_l0[None] * w_l                                # (BB, N, D)

    # --- residual + output projection (flat GEMM) ------------------------------
    lat = lat0[None] + jnp.dot(attn.reshape(BB * N, D).astype(mxu), p["wo"],
                               preferred_element_type=f32).reshape(BB, N, D)

    # --- FeedForward (flat (BB*N, .) GEMMs) ------------------------------------
    lat_f = lat.reshape(BB * N, D)
    h = _layernorm(lat_f, vecs[_G_FF], vecs[_B_FF]).astype(mxu)
    h = jnp.dot(h, p["w1"], preferred_element_type=f32) + p["b1"]
    h = jax.nn.gelu(h, approximate=True)   # TODO(synk): stand-in FFN uses tanh-gelu
    lat_f = lat_f + jnp.dot(h.astype(mxu), p["w2"],
                            preferred_element_type=f32) + vecs[_B2]

    # --- final resampler LayerNorm ---------------------------------------------
    lat_f = _layernorm(lat_f, vecs[_G_FIN], vecs[_B_FIN])                # (BB*N, D)
    lat3 = lat_f.reshape(BB, N, D)

    # --- attention pooling: lane-dense (BB, N) scores, softmax over latents ----
    # (the Linear(D,1) bias shifts every latent equally -> cancels in softmax)
    pn = _layernorm(lat_f, vecs[_G_POOL], vecs[_B_POOL]).reshape(BB, N, D)
    scores = jnp.sum(pn * vecs[_W_POOL], axis=-1)                        # (BB, N)
    scores = scores - scores.max(axis=-1, keepdims=True)
    wgt = jnp.exp(scores)
    wgt = wgt * _recip(wgt.sum(axis=-1, keepdims=True), approx_recip)
    pooled = jnp.sum(lat3 * wgt[:, :, None], axis=1)                     # (BB, D)

    # --- classifier MLP (lane-padded logits) ------------------------------------
    h = jnp.dot(pooled.astype(mxu), p["wc1"], preferred_element_type=f32) + p["bc1"]
    h = jnp.maximum(h, 0.0)
    return jnp.dot(h.astype(mxu), p["wc2"], preferred_element_type=f32) + p["bc2"]


# ------------------------------ Pallas kernel -------------------------------

def classifier_kernel(x_ref, *rest):
    # rest = (*param_refs, out_ref); one grid step == one block of BB batch rows.
    out_ref = rest[-1]
    p = {name: ref[...] for name, ref in zip(PREP_PARAM_NAMES, rest[:-1])}
    out_ref[...] = _forward_block(x_ref[...], p, approx_recip=True).astype(out_ref.dtype)


# -------------------------- parameter preparation ---------------------------

def prepare_params(params, *, mxu_dtype=jnp.bfloat16, lane=128):
    """Hoist the batch-invariant latent path and fuse / cast / pad parameters."""
    f32 = jnp.float32
    D = params["wq"].shape[0]
    scale = 1.0 / (D ** 0.5)
    c = params["wc2"].shape[1]
    c_pad = _round_up(c, lane)

    # ---- hoisted latent-side work (depends only on weights; runs once) -------
    lat0 = params["latents"].astype(f32)                                  # (N, D)
    l_n = _layernorm(lat0, params["g_lat"].astype(f32), params["b_lat"].astype(f32))
    q = l_n @ (params["wq"].astype(f32) * scale)                          # scale folded
    k_l = l_n @ params["wk"].astype(f32)
    v_l = l_n @ params["wv"].astype(f32)
    sim_l = q @ k_l.T                                                     # (N, N)
    m_l = sim_l.max(axis=-1)                                              # (N,)
    e_l = jnp.exp(sim_l - m_l[:, None])
    sum_l = e_l.sum(axis=-1)                                              # (N,)
    pv_l0 = e_l @ v_l                                                     # (N, D)
    # media score projection folded through q: sim_x = x_n @ (w_k @ q^T)
    w_xs = params["wk"].astype(f32) @ q.T                                 # (D, N)

    # ---- packed small vectors: one DMA / one VMEM tile instead of ~10 --------
    vecs = jnp.concatenate([
        params["g_med"], params["b_med"],
        params["g_ff"], params["b_ff"],
        params["b2"],
        params["g_fin"], params["b_fin"],
        params["g_pool"], params["b_pool"],
        params["w_pool"].T,            # (1, D) row layout
    ], axis=0).astype(f32)             # (10, D)
    # NOTE: bias_pool (Linear(D,1).bias) cancels in the pooling softmax.

    return {
        "vecs": vecs,
        "lat_stats": jnp.stack([m_l, sum_l], axis=0).astype(f32),         # (2, N)
        "latents": lat0,
        "pv_l0": pv_l0.astype(f32),
        "w_xv": params["wv"].astype(mxu_dtype),
        "w_xs": w_xs.astype(mxu_dtype),
        "wo": params["wo"].astype(mxu_dtype),
        "w1": params["w1"].astype(mxu_dtype), "b1": params["b1"].astype(f32),
        "w2": params["w2"].astype(mxu_dtype),
        "wc1": params["wc1"].astype(mxu_dtype), "bc1": params["bc1"].astype(f32),
        "wc2": jnp.pad(params["wc2"], ((0, 0), (0, c_pad - c))).astype(mxu_dtype),
        "bc2": jnp.pad(params["bc2"], ((0, 0), (0, c_pad - c))).astype(f32),
    }


# ----------------------------- sizing helpers --------------------------------

def _estimate_vmem_bytes(bb, v, N, D, c_pad, param_list):
    """Rough per-step VMEM footprint (bytes)."""
    weights = sum(int(p.size) * p.dtype.itemsize for p in param_list)  # single-buffered
    x_blk = 2 * bb * v * D * 2                      # bf16 x block, double-buffered
    out_blk = 2 * bb * c_pad * 4                    # f32 out block, double-buffered
    inter = 4 * (4 * bb * v * D                     # x_n / v_x (+ slack)
                 + 2 * bb * v * N                   # sim_x / e_x
                 + bb * N * 4 * D                   # FFN hidden
                 + 6 * bb * N * D)                  # attn / lat / residual copies
    return weights + x_blk + out_blk + inter


def _pick_block_b(B, v, N, D, c_pad, param_list, vmem_budget=48 << 20):
    """Largest batch block s.t. flattened GEMMs reach >=256 rows when possible,
    the grid has >=2 steps when B allows (keeps both v7x TensorCores busy) and
    the footprint stays inside a per-TC VMEM budget (64 MiB/TC on v7x)."""
    bb = max(1, pl.cdiv(256, max(1, min(v, N))))
    if B >= 2:
        bb = min(bb, max(1, B // 2))
    bb = max(1, min(bb, B))
    while bb > 1 and _estimate_vmem_bytes(bb, v, N, D, c_pad, param_list) > vmem_budget:
        bb = pl.cdiv(bb, 2)
    return bb


# ------------------------------ entry point ----------------------------------

def classifier_on_perceiver(x, params, *, block_b=None, mxu_dtype=jnp.bfloat16):
    """x: (B, 1, v, D) float -> logits (B, num_classes) float32."""
    B, T, v, D = x.shape
    assert T == 1, "time/frame axis must be singleton (squeeze(1) in torch fwd)"
    num_classes = params["wc2"].shape[1]

    prep = prepare_params(params, mxu_dtype=mxu_dtype)
    c_pad = prep["wc2"].shape[1]
    N = prep["latents"].shape[0]
    param_list = [prep[n] for n in PREP_PARAM_NAMES]

    bb = block_b if block_b is not None else _pick_block_b(B, v, N, D, c_pad, param_list)
    b_pad = _round_up(B, bb)

    # Stream x in bf16: halves HBM traffic on the only per-step stream and the
    # x double-buffer; upcast to f32 inside the kernel before the media LN.
    x2 = x.reshape(B, v, D).astype(jnp.bfloat16)
    if b_pad != B:
        x2 = jnp.pad(x2, ((0, b_pad - B), (0, 0), (0, 0)))

    # x block streams (default double-buffer); weights/latent constants have a
    # constant block index (DMA'd once, VMEM-resident) and are single-buffered.
    in_specs = [pl.BlockSpec((bb, v, D), lambda b: (b, 0, 0))]
    try:
        resident = [pl.BlockSpec(p.shape, lambda b: (0, 0),
                                 pipeline_mode=pl.Buffered(1)) for p in param_list]
    except TypeError:   # BlockSpec signature without pipeline_mode
        resident = [pl.BlockSpec(p.shape, lambda b: (0, 0)) for p in param_list]
    in_specs += resident
    out_specs = pl.BlockSpec((bb, c_pad), lambda b: (b, 0))

    # Size-derived scoped-VMEM limit; _pick_block_b keeps the real footprint
    # under ~48 MiB so v7x's 64 MiB/TC is respected while v5e/v6e can go higher.
    est = _estimate_vmem_bytes(bb, v, N, D, c_pad, param_list)
    vmem_limit = int(min(max(2 * est + (4 << 20), 32 << 20), 100 << 20))

    out = pl.pallas_call(
        classifier_kernel,
        out_shape=jax.ShapeDtypeStruct((b_pad, c_pad), jnp.float32),
        grid=(b_pad // bb,),
        in_specs=in_specs,
        out_specs=out_specs,
        compiler_params=pltpu.CompilerParams(
            dimension_semantics=("parallel",),   # batch blocks shard across TCs
            vmem_limit_bytes=vmem_limit,
        ),
    )(x2, *param_list)
    return out[:B, :num_classes]


# ------------------------------ params / main --------------------------------

def init_params(key, *, D, N, ff_mult=4, hidden=256, num_classes=10):
    ks = jax.random.split(key, 10)
    f32 = jnp.float32

    def w(k, shape, scale=0.02):
        return (scale * jax.random.normal(k, shape)).astype(f32)

    ones = lambda s: jnp.ones(s, f32)
    zeros = lambda s: jnp.zeros(s, f32)
    return {
        "latents": w(ks[0], (N, D), 1.0),
        "g_med": ones((1, D)), "b_med": zeros((1, D)),
        "g_lat": ones((1, D)), "b_lat": zeros((1, D)),
        "wq": w(ks[1], (D, D)), "wk": w(ks[2], (D, D)),
        "wv": w(ks[3], (D, D)), "wo": w(ks[4], (D, D)),
        "g_ff": ones((1, D)), "b_ff": zeros((1, D)),
        "w1": w(ks[5], (D, ff_mult * D)), "b1": zeros((1, ff_mult * D)),
        "w2": w(ks[6], (ff_mult * D, D)), "b2": zeros((1, D)),
        "g_fin": ones((1, D)), "b_fin": zeros((1, D)),
        "g_pool": ones((1, D)), "b_pool": zeros((1, D)),
        "w_pool": w(ks[7], (D, 1)), "bias_pool": zeros((1, 1)),  # bias cancels in softmax
        "wc1": w(ks[8], (D, hidden)), "bc1": zeros((1, hidden)),
        "wc2": w(ks[9], (hidden, num_classes)), "bc2": zeros((1, num_classes)),
    }


def reference(x, params, *, mxu_dtype=jnp.bfloat16):
    """Pure-JAX reference (identical prepared params / math, exact divides)."""
    B, T, v, D = x.shape
    num_classes = params["wc2"].shape[1]
    prep = prepare_params(params, mxu_dtype=mxu_dtype)
    xb = x.reshape(B, v, D).astype(jnp.bfloat16)   # same bf16 stream as the kernel
    logits = _forward_block(xb, prep, approx_recip=False)
    return logits[:, :num_classes]


if __name__ == "__main__":
    B, v, D, N, C = 16, 16, 32, 8, 10      # auto block_b -> 8 => 2 grid steps
    key = jax.random.PRNGKey(0)
    kx, kp = jax.random.split(key)
    x = jax.random.normal(kx, (B, 1, v, D), dtype=jnp.float32)
    params = init_params(kp, D=D, N=N, num_classes=C)

    out = jax.block_until_ready(classifier_on_perceiver(x, params))
    ref = jax.block_until_ready(reference(x, params))

    assert out.shape == (B, C), out.shape
    assert bool(jnp.all(jnp.isfinite(out)))
    assert jnp.allclose(out, ref, atol=1e-2, rtol=1e-2), (out, ref)
    print("KERNEL_OK")
</pallas_src>

<mosaic_0001>
module attributes {stable_mosaic.version = 11 : i64} {
  func.func @classifier_kernel(%arg0: i32, %arg1: memref<8x16x32xbf16, #tpu.memory_space<vmem>>, %arg2: memref<10x32xf32, #tpu.memory_space<vmem>>, %arg3: memref<2x8xf32, #tpu.memory_space<vmem>>, %arg4: memref<8x32xf32, #tpu.memory_space<vmem>>, %arg5: memref<8x32xf32, #tpu.memory_space<vmem>>, %arg6: memref<32x32xbf16, #tpu.memory_space<vmem>>, %arg7: memref<32x8xbf16, #tpu.memory_space<vmem>>, %arg8: memref<32x32xbf16, #tpu.memory_space<vmem>>, %arg9: memref<32x128xbf16, #tpu.memory_space<vmem>>, %arg10: memref<1x128xf32, #tpu.memory_space<vmem>>, %arg11: memref<128x32xbf16, #tpu.memory_space<vmem>>, %arg12: memref<32x256xbf16, #tpu.memory_space<vmem>>, %arg13: memref<1x256xf32, #tpu.memory_space<vmem>>, %arg14: memref<256x128xbf16, #tpu.memory_space<vmem>>, %arg15: memref<1x128xf32, #tpu.memory_space<vmem>>, %arg16: memref<8x128xf32, #tpu.memory_space<vmem>>) attributes {dimension_semantics = [#tpu.dimension_semantics<parallel>], iteration_bounds = array<i64: 2>, scalar_prefetch = 0 : i64, scratch_operands = 0 : i64, tpu.core_type = #tpu.core_type<tc>, window_params = [{transform_indices = @transform_0, window_bounds = array<i64: 8, 16, 32>}, {pipeline_mode = #tpu.pipeline_mode<synchronous>, transform_indices = @transform_1, window_bounds = array<i64: 10, 32>}, {pipeline_mode = #tpu.pipeline_mode<synchronous>, transform_indices = @transform_2, window_bounds = array<i64: 2, 8>}, {pipeline_mode = #tpu.pipeline_mode<synchronous>, transform_indices = @transform_3, window_bounds = array<i64: 8, 32>}, {pipeline_mode = #tpu.pipeline_mode<synchronous>, transform_indices = @transform_4, window_bounds = array<i64: 8, 32>}, {pipeline_mode = #tpu.pipeline_mode<synchronous>, transform_indices = @transform_5, window_bounds = array<i64: 32, 32>}, {pipeline_mode = #tpu.pipeline_mode<synchronous>, transform_indices = @transform_6, window_bounds = array<i64: 32, 8>}, {pipeline_mode = #tpu.pipeline_mode<synchronous>, transform_indices = @transform_7, window_bounds = array<i64: 32, 32>}, {pipeline_mode = #tpu.pipeline_mode<synchronous>, transform_indices = @transform_8, window_bounds = array<i64: 32, 128>}, {pipeline_mode = #tpu.pipeline_mode<synchronous>, transform_indices = @transform_9, window_bounds = array<i64: 1, 128>}, {pipeline_mode = #tpu.pipeline_mode<synchronous>, transform_indices = @transform_10, window_bounds = array<i64: 128, 32>}, {pipeline_mode = #tpu.pipeline_mode<synchronous>, transform_indices = @transform_11, window_bounds = array<i64: 32, 256>}, {pipeline_mode = #tpu.pipeline_mode<synchronous>, transform_indices = @transform_12, window_bounds = array<i64: 1, 256>}, {pipeline_mode = #tpu.pipeline_mode<synchronous>, transform_indices = @transform_13, window_bounds = array<i64: 256, 128>}, {pipeline_mode = #tpu.pipeline_mode<synchronous>, transform_indices = @transform_14, window_bounds = array<i64: 1, 128>}, {transform_indices = @transform_15, window_bounds = array<i64: 8, 128>}]} {
    %c0 = arith.constant 0 : index
    %c0_0 = arith.constant 0 : index
    %0 = vector.load %arg2[%c0, %c0_0] : memref<10x32xf32, #tpu.memory_space<vmem>>, vector<10x32xf32>
    %c0_1 = arith.constant 0 : index
    %c0_2 = arith.constant 0 : index
    %1 = vector.load %arg3[%c0_1, %c0_2] : memref<2x8xf32, #tpu.memory_space<vmem>>, vector<2x8xf32>
    %c0_3 = arith.constant 0 : index
    %c0_4 = arith.constant 0 : index
    %2 = vector.load %arg4[%c0_3, %c0_4] : memref<8x32xf32, #tpu.memory_space<vmem>>, vector<8x32xf32>
    %c0_5 = arith.constant 0 : index
    %c0_6 = arith.constant 0 : index
    %3 = vector.load %arg5[%c0_5, %c0_6] : memref<8x32xf32, #tpu.memory_space<vmem>>, vector<8x32xf32>
    %c0_7 = arith.constant 0 : index
    %c0_8 = arith.constant 0 : index
    %4 = vector.load %arg6[%c0_7, %c0_8] : memref<32x32xbf16, #tpu.memory_space<vmem>>, vector<32x32xbf16>
    %c0_9 = arith.constant 0 : index
    %c0_10 = arith.constant 0 : index
    %5 = vector.load %arg7[%c0_9, %c0_10] : memref<32x8xbf16, #tpu.memory_space<vmem>>, vector<32x8xbf16>
    %c0_11 = arith.constant 0 : index
    %c0_12 = arith.constant 0 : index
    %6 = vector.load %arg8[%c0_11, %c0_12] : memref<32x32xbf16, #tpu.memory_space<vmem>>, vector<32x32xbf16>
    %c0_13 = arith.constant 0 : index
    %c0_14 = arith.constant 0 : index
    %7 = vector.load %arg9[%c0_13, %c0_14] : memref<32x128xbf16, #tpu.memory_space<vmem>>, vector<32x128xbf16>
    %c0_15 = arith.constant 0 : index
    %c0_16 = arith.constant 0 : index
    %8 = vector.load %arg10[%c0_15, %c0_16] : memref<1x128xf32, #tpu.memory_space<vmem>>, vector<1x128xf32>
    %c0_17 = arith.constant 0 : index
    %c0_18 = arith.constant 0 : index
    %9 = vector.load %arg11[%c0_17, %c0_18] : memref<128x32xbf16, #tpu.memory_space<vmem>>, vector<128x32xbf16>
    %c0_19 = arith.constant 0 : index
    %c0_20 = arith.constant 0 : index
    %10 = vector.load %arg12[%c0_19, %c0_20] : memref<32x256xbf16, #tpu.memory_space<vmem>>, vector<32x256xbf16>
    %c0_21 = arith.constant 0 : index
    %c0_22 = arith.constant 0 : index
    %11 = vector.load %arg13[%c0_21, %c0_22] : memref<1x256xf32, #tpu.memory_space<vmem>>, vector<1x256xf32>
    %c0_23 = arith.constant 0 : index
    %c0_24 = arith.constant 0 : index
    %12 = vector.load %arg14[%c0_23, %c0_24] : memref<256x128xbf16, #tpu.memory_space<vmem>>, vector<256x128xbf16>
    %c0_25 = arith.constant 0 : index
    %c0_26 = arith.constant 0 : index
    %13 = vector.load %arg15[%c0_25, %c0_26] : memref<1x128xf32, #tpu.memory_space<vmem>>, vector<1x128xf32>
    %c0_27 = arith.constant 0 : index
    %c0_28 = arith.constant 0 : index
    %c0_29 = arith.constant 0 : index
    %14 = vector.load %arg1[%c0_27, %c0_28, %c0_29] : memref<8x16x32xbf16, #tpu.memory_space<vmem>>, vector<8x16x32xbf16>
    %15 = vector.extract_strided_slice %1 {offsets = [0, 0], sizes = [1, 8], strides = [1, 1]} : vector<2x8xf32> to vector<1x8xf32>
    %16 = vector.extract_strided_slice %1 {offsets = [1, 0], sizes = [1, 8], strides = [1, 1]} : vector<2x8xf32> to vector<1x8xf32>
    %17 = vector.shape_cast %14 : vector<8x16x32xbf16> to vector<128x32xbf16>
    %18 = arith.extf %17 : vector<128x32xbf16> to vector<128x32xf32>
    %19 = vector.extract_strided_slice %0 {offsets = [0, 0], sizes = [1, 32], strides = [1, 1]} : vector<10x32xf32> to vector<1x32xf32>
    %20 = vector.shape_cast %19 : vector<1x32xf32> to vector<32xf32>
    %21 = vector.extract_strided_slice %0 {offsets = [1, 0], sizes = [1, 32], strides = [1, 1]} : vector<10x32xf32> to vector<1x32xf32>
    %22 = vector.shape_cast %21 : vector<1x32xf32> to vector<32xf32>
    %cst = arith.constant dense<0.000000e+00> : vector<128xf32>
    %23 = vector.multi_reduction <add>, %18, %cst [1] : vector<128x32xf32> to vector<128xf32>
    %24 = vector.shape_cast %23 : vector<128xf32> to vector<128x1xf32>
    %cst_30 = arith.constant 3.200000e+01 : f32
    %25 = vector.broadcast %cst_30 : f32 to vector<128x1xf32>
    %26 = arith.divf %24, %25 : vector<128x1xf32>
    %27 = arith.mulf %18, %18 : vector<128x32xf32>
    %cst_31 = arith.constant dense<0.000000e+00> : vector<128xf32>
    %28 = vector.multi_reduction <add>, %27, %cst_31 [1] : vector<128x32xf32> to vector<128xf32>
    %29 = vector.shape_cast %28 : vector<128xf32> to vector<128x1xf32>
    %cst_32 = arith.constant 3.200000e+01 : f32
    %30 = vector.broadcast %cst_32 : f32 to vector<128x1xf32>
    %31 = arith.divf %29, %30 : vector<128x1xf32>
    %32 = arith.mulf %26, %26 : vector<128x1xf32>
    %33 = arith.subf %31, %32 : vector<128x1xf32>
    %cst_33 = arith.constant 0.000000e+00 : f32
    %34 = vector.broadcast %cst_33 : f32 to vector<128x1xf32>
    %35 = arith.maximumf %33, %34 : vector<128x1xf32>
    %36 = vector.broadcast %26 : vector<128x1xf32> to vector<128x32xf32>
    %37 = arith.subf %18, %36 : vector<128x32xf32>
    %cst_34 = arith.constant 9.99999974E-6 : f32
    %38 = vector.broadcast %cst_34 : f32 to vector<128x1xf32>
    %39 = arith.addf %35, %38 : vector<128x1xf32>
    %40 = math.rsqrt %39 : vector<128x1xf32>
    %41 = vector.broadcast %40 : vector<128x1xf32> to vector<128x32xf32>
    %42 = arith.mulf %37, %41 : vector<128x32xf32>
    %43 = vector.shape_cast %20 : vector<32xf32> to vector<1x32xf32>
    %44 = vector.broadcast %43 : vector<1x32xf32> to vector<128x32xf32>
    %45 = arith.mulf %42, %44 : vector<128x32xf32>
    %46 = vector.shape_cast %22 : vector<32xf32> to vector<1x32xf32>
    %47 = vector.broadcast %46 : vector<1x32xf32> to vector<128x32xf32>
    %48 = arith.addf %45, %47 : vector<128x32xf32>
    %49 = arith.truncf %48 : vector<128x32xf32> to vector<128x32xbf16>
    %cst_35 = arith.constant dense<0.000000e+00> : vector<128x32xf32>
    %50 = tpu.matmul %49, %4, %cst_35 {dimension_numbers = #tpu.dot_dimension_numbers<[1], [0], [0], [1], [0, 0, 1, 1], [], []>} : vector<128x32xbf16>, vector<32x32xbf16>, vector<128x32xf32> -> vector<128x32xf32>
    %cst_36 = arith.constant dense<0.000000e+00> : vector<128x8xf32>
    %51 = tpu.matmul %49, %5, %cst_36 {dimension_numbers = #tpu.dot_dimension_numbers<[1], [0], [0], [1], [0, 0, 1, 1], [], []>} : vector<128x32xbf16>, vector<32x8xbf16>, vector<128x8xf32> -> vector<128x8xf32>
    %52 = vector.shape_cast %51 : vector<128x8xf32> to vector<8x16x8xf32>
    %cst_37 = arith.constant dense<0xFF800000> : vector<8x8xf32>
    %53 = vector.multi_reduction <maximumf>, %52, %cst_37 [1] : vector<8x16x8xf32> to vector<8x8xf32>
    %54 = vector.shape_cast %53 : vector<8x8xf32> to vector<8x1x8xf32>
    %55 = vector.broadcast %54 : vector<8x1x8xf32> to vector<8x16x8xf32>
    %56 = arith.subf %52, %55 : vector<8x16x8xf32>
    %57 = math.exp %56 : vector<8x16x8xf32>
    %cst_38 = arith.constant dense<0.000000e+00> : vector<8x8xf32>
    %58 = vector.multi_reduction <add>, %57, %cst_38 [1] : vector<8x16x8xf32> to vector<8x8xf32>
    %59 = vector.shape_cast %54 : vector<8x1x8xf32> to vector<8x8xf32>
    %60 = arith.truncf %57 : vector<8x16x8xf32> to vector<8x16x8xbf16>
    %61 = vector.shape_cast %50 : vector<128x32xf32> to vector<8x16x32xf32>
    %62 = arith.truncf %61 : vector<8x16x32xf32> to vector<8x16x32xbf16>
    "tpu.trace_start"() <{level = 10 : i32, message = "bvn,bvd->bnd"}> : () -> ()
    %cst_39 = arith.constant dense<0.000000e+00> : vector<8x8x32xf32>
    %63 = tpu.matmul %60, %62, %cst_39 {dimension_numbers = #tpu.dot_dimension_numbers<[1], [1], [2], [2], [0, 0, 0, 2, 1, 2], [0], [0]>} : vector<8x16x8xbf16>, vector<8x16x32xbf16>, vector<8x8x32xf32> -> vector<8x8x32xf32>
    "tpu.trace_stop"() : () -> ()
    %64 = vector.broadcast %15 : vector<1x8xf32> to vector<8x8xf32>
    %65 = arith.maximumf %59, %64 : vector<8x8xf32>
    %66 = arith.subf %59, %65 : vector<8x8xf32>
    %67 = math.exp %66 : vector<8x8xf32>
    %68 = vector.broadcast %15 : vector<1x8xf32> to vector<8x8xf32>
    %69 = arith.subf %68, %65 : vector<8x8xf32>
    %70 = math.exp %69 : vector<8x8xf32>
    %71 = arith.mulf %67, %58 : vector<8x8xf32>
    %72 = vector.broadcast %16 : vector<1x8xf32> to vector<8x8xf32>
    %73 = arith.mulf %70, %72 : vector<8x8xf32>
    %74 = arith.addf %71, %73 : vector<8x8xf32>
    %75 = tpu.reciprocal %74 {approx = true} : vector<8x8xf32> -> vector<8x8xf32>
    %76 = arith.mulf %67, %75 : vector<8x8xf32>
    %77 = vector.shape_cast %76 : vector<8x8xf32> to vector<8x8x1xf32>
    %78 = arith.mulf %70, %75 : vector<8x8xf32>
    %79 = vector.shape_cast %78 : vector<8x8xf32> to vector<8x8x1xf32>
    %80 = vector.broadcast %77 : vector<8x8x1xf32> to vector<8x8x32xf32>
    %81 = arith.mulf %63, %80 : vector<8x8x32xf32>
    %82 = vector.shape_cast %3 : vector<8x32xf32> to vector<1x8x32xf32>
    %83 = vector.broadcast %82 : vector<1x8x32xf32> to vector<8x8x32xf32>
    %84 = vector.broadcast %79 : vector<8x8x1xf32> to vector<8x8x32xf32>
    %85 = arith.mulf %83, %84 : vector<8x8x32xf32>
    %86 = arith.addf %81, %85 : vector<8x8x32xf32>
    %87 = vector.shape_cast %2 : vector<8x32xf32> to vector<1x8x32xf32>
    %88 = vector.shape_cast %86 : vector<8x8x32xf32> to vector<64x32xf32>
    %89 = arith.truncf %88 : vector<64x32xf32> to vector<64x32xbf16>
    %cst_40 = arith.constant dense<0.000000e+00> : vector<64x32xf32>
    %90 = tpu.matmul %89, %6, %cst_40 {dimension_numbers = #tpu.dot_dimension_numbers<[1], [0], [0], [1], [0, 0, 1, 1], [], []>} : vector<64x32xbf16>, vector<32x32xbf16>, vector<64x32xf32> -> vector<64x32xf32>
    %91 = vector.shape_cast %90 : vector<64x32xf32> to vector<8x8x32xf32>
    %92 = vector.broadcast %87 : vector<1x8x32xf32> to vector<8x8x32xf32>
    %93 = arith.addf %92, %91 : vector<8x8x32xf32>
    %94 = vector.shape_cast %93 : vector<8x8x32xf32> to vector<64x32xf32>
    %95 = vector.extract_strided_slice %0 {offsets = [2, 0], sizes = [1, 32], strides = [1, 1]} : vector<10x32xf32> to vector<1x32xf32>
    %96 = vector.shape_cast %95 : vector<1x32xf32> to vector<32xf32>
    %97 = vector.extract_strided_slice %0 {offsets = [3, 0], sizes = [1, 32], strides = [1, 1]} : vector<10x32xf32> to vector<1x32xf32>
    %98 = vector.shape_cast %97 : vector<1x32xf32> to vector<32xf32>
    %cst_41 = arith.constant dense<0.000000e+00> : vector<64xf32>
    %99 = vector.multi_reduction <add>, %94, %cst_41 [1] : vector<64x32xf32> to vector<64xf32>
    %100 = vector.shape_cast %99 : vector<64xf32> to vector<64x1xf32>
    %cst_42 = arith.constant 3.200000e+01 : f32
    %101 = vector.broadcast %cst_42 : f32 to vector<64x1xf32>
    %102 = arith.divf %100, %101 : vector<64x1xf32>
    %103 = arith.mulf %94, %94 : vector<64x32xf32>
    %cst_43 = arith.constant dense<0.000000e+00> : vector<64xf32>
    %104 = vector.multi_reduction <add>, %103, %cst_43 [1] : vector<64x32xf32> to vector<64xf32>
    %105 = vector.shape_cast %104 : vector<64xf32> to vector<64x1xf32>
    %cst_44 = arith.constant 3.200000e+01 : f32
    %106 = vector.broadcast %cst_44 : f32 to vector<64x1xf32>
    %107 = arith.divf %105, %106 : vector<64x1xf32>
    %108 = arith.mulf %102, %102 : vector<64x1xf32>
    %109 = arith.subf %107, %108 : vector<64x1xf32>
    %cst_45 = arith.constant 0.000000e+00 : f32
    %110 = vector.broadcast %cst_45 : f32 to vector<64x1xf32>
    %111 = arith.maximumf %109, %110 : vector<64x1xf32>
    %112 = vector.broadcast %102 : vector<64x1xf32> to vector<64x32xf32>
    %113 = arith.subf %94, %112 : vector<64x32xf32>
    %cst_46 = arith.constant 9.99999974E-6 : f32
    %114 = vector.broadcast %cst_46 : f32 to vector<64x1xf32>
    %115 = arith.addf %111, %114 : vector<64x1xf32>
    %116 = math.rsqrt %115 : vector<64x1xf32>
    %117 = vector.broadcast %116 : vector<64x1xf32> to vector<64x32xf32>
    %118 = arith.mulf %113, %117 : vector<64x32xf32>
    %119 = vector.shape_cast %96 : vector<32xf32> to vector<1x32xf32>
    %120 = vector.broadcast %119 : vector<1x32xf32> to vector<64x32xf32>
    %121 = arith.mulf %118, %120 : vector<64x32xf32>
    %122 = vector.shape_cast %98 : vector<32xf32> to vector<1x32xf32>
    %123 = vector.broadcast %122 : vector<1x32xf32> to vector<64x32xf32>
    %124 = arith.addf %121, %123 : vector<64x32xf32>
    %125 = arith.truncf %124 : vector<64x32xf32> to vector<64x32xbf16>
    %cst_47 = arith.constant dense<0.000000e+00> : vector<64x128xf32>
    %126 = tpu.matmul %125, %7, %cst_47 {dimension_numbers = #tpu.dot_dimension_numbers<[1], [0], [0], [1], [0, 0, 1, 1], [], []>} : vector<64x32xbf16>, vector<32x128xbf16>, vector<64x128xf32> -> vector<64x128xf32>
    %127 = vector.broadcast %8 : vector<1x128xf32> to vector<64x128xf32>
    %128 = arith.addf %126, %127 : vector<64x128xf32>
    %129 = arith.mulf %128, %128 : vector<64x128xf32>
    %130 = arith.mulf %128, %129 : vector<64x128xf32>
    %cst_48 = arith.constant 4.471500e-02 : f32
    %131 = vector.broadcast %cst_48 : f32 to vector<64x128xf32>
    %132 = arith.mulf %131, %130 : vector<64x128xf32>
    %133 = arith.addf %128, %132 : vector<64x128xf32>
    %cst_49 = arith.constant 0.797884583 : f32
    %134 = vector.broadcast %cst_49 : f32 to vector<64x128xf32>
    %135 = arith.mulf %134, %133 : vector<64x128xf32>
    %136 = math.tanh %135 : vector<64x128xf32>
    %cst_50 = arith.constant 1.000000e+00 : f32
    %137 = vector.broadcast %cst_50 : f32 to vector<64x128xf32>
    %138 = arith.addf %137, %136 : vector<64x128xf32>
    %cst_51 = arith.constant 5.000000e-01 : f32
    %139 = vector.broadcast %cst_51 : f32 to vector<64x128xf32>
    %140 = arith.mulf %139, %138 : vector<64x128xf32>
    %141 = arith.mulf %128, %140 : vector<64x128xf32>
    %142 = arith.truncf %141 : vector<64x128xf32> to vector<64x128xbf16>
    %cst_52 = arith.constant dense<0.000000e+00> : vector<64x32xf32>
    %143 = tpu.matmul %142, %9, %cst_52 {dimension_numbers = #tpu.dot_dimension_numbers<[1], [0], [0], [1], [0, 0, 1, 1], [], []>} : vector<64x128xbf16>, vector<128x32xbf16>, vector<64x32xf32> -> vector<64x32xf32>
    %144 = arith.addf %94, %143 : vector<64x32xf32>
    %145 = vector.extract_strided_slice %0 {offsets = [4, 0], sizes = [1, 32], strides = [1, 1]} : vector<10x32xf32> to vector<1x32xf32>
    %146 = vector.shape_cast %145 : vector<1x32xf32> to vector<32xf32>
    %147 = vector.shape_cast %146 : vector<32xf32> to vector<1x32xf32>
    %148 = vector.broadcast %147 : vector<1x32xf32> to vector<64x32xf32>
    %149 = arith.addf %144, %148 : vector<64x32xf32>
    %150 = vector.extract_strided_slice %0 {offsets = [5, 0], sizes = [1, 32], strides = [1, 1]} : vector<10x32xf32> to vector<1x32xf32>
    %151 = vector.shape_cast %150 : vector<1x32xf32> to vector<32xf32>
    %152 = vector.extract_strided_slice %0 {offsets = [6, 0], sizes = [1, 32], strides = [1, 1]} : vector<10x32xf32> to vector<1x32xf32>
    %153 = vector.shape_cast %152 : vector<1x32xf32> to vector<32xf32>
    %cst_53 = arith.constant dense<0.000000e+00> : vector<64xf32>
    %154 = vector.multi_reduction <add>, %149, %cst_53 [1] : vector<64x32xf32> to vector<64xf32>
    %155 = vector.shape_cast %154 : vector<64xf32> to vector<64x1xf32>
    %cst_54 = arith.constant 3.200000e+01 : f32
    %156 = vector.broadcast %cst_54 : f32 to vector<64x1xf32>
    %157 = arith.divf %155, %156 : vector<64x1xf32>
    %158 = arith.mulf %149, %149 : vector<64x32xf32>
    %cst_55 = arith.constant dense<0.000000e+00> : vector<64xf32>
    %159 = vector.multi_reduction <add>, %158, %cst_55 [1] : vector<64x32xf32> to vector<64xf32>
    %160 = vector.shape_cast %159 : vector<64xf32> to vector<64x1xf32>
    %cst_56 = arith.constant 3.200000e+01 : f32
    %161 = vector.broadcast %cst_56 : f32 to vector<64x1xf32>
    %162 = arith.divf %160, %161 : vector<64x1xf32>
    %163 = arith.mulf %157, %157 : vector<64x1xf32>
    %164 = arith.subf %162, %163 : vector<64x1xf32>
    %cst_57 = arith.constant 0.000000e+00 : f32
    %165 = vector.broadcast %cst_57 : f32 to vector<64x1xf32>
    %166 = arith.maximumf %164, %165 : vector<64x1xf32>
    %167 = vector.broadcast %157 : vector<64x1xf32> to vector<64x32xf32>
    %168 = arith.subf %149, %167 : vector<64x32xf32>
    %cst_58 = arith.constant 9.99999974E-6 : f32
    %169 = vector.broadcast %cst_58 : f32 to vector<64x1xf32>
    %170 = arith.addf %166, %169 : vector<64x1xf32>
    %171 = math.rsqrt %170 : vector<64x1xf32>
    %172 = vector.broadcast %171 : vector<64x1xf32> to vector<64x32xf32>
    %173 = arith.mulf %168, %172 : vector<64x32xf32>
    %174 = vector.shape_cast %151 : vector<32xf32> to vector<1x32xf32>
    %175 = vector.broadcast %174 : vector<1x32xf32> to vector<64x32xf32>
    %176 = arith.mulf %173, %175 : vector<64x32xf32>
    %177 = vector.shape_cast %153 : vector<32xf32> to vector<1x32xf32>
    %178 = vector.broadcast %177 : vector<1x32xf32> to vector<64x32xf32>
    %179 = arith.addf %176, %178 : vector<64x32xf32>
    %180 = vector.shape_cast %179 : vector<64x32xf32> to vector<8x8x32xf32>
    %181 = vector.extract_strided_slice %0 {offsets = [7, 0], sizes = [1, 32], strides = [1, 1]} : vector<10x32xf32> to vector<1x32xf32>
    %182 = vector.shape_cast %181 : vector<1x32xf32> to vector<32xf32>
    %183 = vector.extract_strided_slice %0 {offsets = [8, 0], sizes = [1, 32], strides = [1, 1]} : vector<10x32xf32> to vector<1x32xf32>
    %184 = vector.shape_cast %183 : vector<1x32xf32> to vector<32xf32>
    %cst_59 = arith.constant dense<0.000000e+00> : vector<64xf32>
    %185 = vector.multi_reduction <add>, %179, %cst_59 [1] : vector<64x32xf32> to vector<64xf32>
    %186 = vector.shape_cast %185 : vector<64xf32> to vector<64x1xf32>
    %cst_60 = arith.constant 3.200000e+01 : f32
    %187 = vector.broadcast %cst_60 : f32 to vector<64x1xf32>
    %188 = arith.divf %186, %187 : vector<64x1xf32>
    %189 = arith.mulf %179, %179 : vector<64x32xf32>
    %cst_61 = arith.constant dense<0.000000e+00> : vector<64xf32>
    %190 = vector.multi_reduction <add>, %189, %cst_61 [1] : vector<64x32xf32> to vector<64xf32>
    %191 = vector.shape_cast %190 : vector<64xf32> to vector<64x1xf32>
    %cst_62 = arith.constant 3.200000e+01 : f32
    %192 = vector.broadcast %cst_62 : f32 to vector<64x1xf32>
    %193 = arith.divf %191, %192 : vector<64x1xf32>
    %194 = arith.mulf %188, %188 : vector<64x1xf32>
    %195 = arith.subf %193, %194 : vector<64x1xf32>
    %cst_63 = arith.constant 0.000000e+00 : f32
    %196 = vector.broadcast %cst_63 : f32 to vector<64x1xf32>
    %197 = arith.maximumf %195, %196 : vector<64x1xf32>
    %198 = vector.broadcast %188 : vector<64x1xf32> to vector<64x32xf32>
    %199 = arith.subf %179, %198 : vector<64x32xf32>
    %cst_64 = arith.constant 9.99999974E-6 : f32
    %200 = vector.broadcast %cst_64 : f32 to vector<64x1xf32>
    %201 = arith.addf %197, %200 : vector<64x1xf32>
    %202 = math.rsqrt %201 : vector<64x1xf32>
    %203 = vector.broadcast %202 : vector<64x1xf32> to vector<64x32xf32>
    %204 = arith.mulf %199, %203 : vector<64x32xf32>
    %205 = vector.shape_cast %182 : vector<32xf32> to vector<1x32xf32>
    %206 = vector.broadcast %205 : vector<1x32xf32> to vector<64x32xf32>
    %207 = arith.mulf %204, %206 : vector<64x32xf32>
    %208 = vector.shape_cast %184 : vector<32xf32> to vector<1x32xf32>
    %209 = vector.broadcast %208 : vector<1x32xf32> to vector<64x32xf32>
    %210 = arith.addf %207, %209 : vector<64x32xf32>
    %211 = vector.shape_cast %210 : vector<64x32xf32> to vector<8x8x32xf32>
    %212 = vector.extract_strided_slice %0 {offsets = [9, 0], sizes = [1, 32], strides = [1, 1]} : vector<10x32xf32> to vector<1x32xf32>
    %213 = vector.shape_cast %212 : vector<1x32xf32> to vector<32xf32>
    %214 = vector.shape_cast %213 : vector<32xf32> to vector<1x1x32xf32>
    %215 = vector.broadcast %214 : vector<1x1x32xf32> to vector<8x8x32xf32>
    %216 = arith.mulf %211, %215 : vector<8x8x32xf32>
    %cst_65 = arith.constant dense<0.000000e+00> : vector<8x8xf32>
    %217 = vector.multi_reduction <add>, %216, %cst_65 [2] : vector<8x8x32xf32> to vector<8x8xf32>
    %cst_66 = arith.constant dense<0xFF800000> : vector<8xf32>
    %218 = vector.multi_reduction <maximumf>, %217, %cst_66 [1] : vector<8x8xf32> to vector<8xf32>
    %219 = vector.shape_cast %218 : vector<8xf32> to vector<8x1xf32>
    %220 = vector.broadcast %219 : vector<8x1xf32> to vector<8x8xf32>
    %221 = arith.subf %217, %220 : vector<8x8xf32>
    %222 = math.exp %221 : vector<8x8xf32>
    %cst_67 = arith.constant dense<0.000000e+00> : vector<8xf32>
    %223 = vector.multi_reduction <add>, %222, %cst_67 [1] : vector<8x8xf32> to vector<8xf32>
    %224 = vector.shape_cast %223 : vector<8xf32> to vector<8x1xf32>
    %225 = tpu.reciprocal %224 {approx = true} : vector<8x1xf32> -> vector<8x1xf32>
    %226 = vector.broadcast %225 : vector<8x1xf32> to vector<8x8xf32>
    %227 = arith.mulf %222, %226 : vector<8x8xf32>
    %228 = vector.shape_cast %227 : vector<8x8xf32> to vector<8x8x1xf32>
    %229 = vector.broadcast %228 : vector<8x8x1xf32> to vector<8x8x32xf32>
    %230 = arith.mulf %180, %229 : vector<8x8x32xf32>
    %cst_68 = arith.constant dense<0.000000e+00> : vector<8x32xf32>
    %231 = vector.multi_reduction <add>, %230, %cst_68 [1] : vector<8x8x32xf32> to vector<8x32xf32>
    %232 = arith.truncf %231 : vector<8x32xf32> to vector<8x32xbf16>
    %cst_69 = arith.constant dense<0.000000e+00> : vector<8x256xf32>
    %233 = tpu.matmul %232, %10, %cst_69 {dimension_numbers = #tpu.dot_dimension_numbers<[1], [0], [0], [1], [0, 0, 1, 1], [], []>} : vector<8x32xbf16>, vector<32x256xbf16>, vector<8x256xf32> -> vector<8x256xf32>
    %234 = vector.broadcast %11 : vector<1x256xf32> to vector<8x256xf32>
    %235 = arith.addf %233, %234 : vector<8x256xf32>
    %cst_70 = arith.constant 0.000000e+00 : f32
    %236 = vector.broadcast %cst_70 : f32 to vector<8x256xf32>
    %237 = arith.maximumf %235, %236 : vector<8x256xf32>
    %238 = arith.truncf %237 : vector<8x256xf32> to vector<8x256xbf16>
    %cst_71 = arith.constant dense<0.000000e+00> : vector<8x128xf32>
    %239 = tpu.matmul %238, %12, %cst_71 {dimension_numbers = #tpu.dot_dimension_numbers<[1], [0], [0], [1], [0, 0, 1, 1], [], []>} : vector<8x256xbf16>, vector<256x128xbf16>, vector<8x128xf32> -> vector<8x128xf32>
    %240 = vector.broadcast %13 : vector<1x128xf32> to vector<8x128xf32>
    %241 = arith.addf %239, %240 : vector<8x128xf32>
    %c0_72 = arith.constant 0 : index
    %c0_73 = arith.constant 0 : index
    %242 = vector.load %arg16[%c0_72, %c0_73] : memref<8x128xf32, #tpu.memory_space<vmem>>, vector<8x128xf32>
    tpu.vector_store %arg16[%c0_72, %c0_73], %241 {strides = array<i32>} : memref<8x128xf32, #tpu.memory_space<vmem>>, vector<8x128xf32>,
    return
  }
  func.func @transform_0(%arg0: i32) -> (i32, i32, i32) {
    %c0_i32 = arith.constant 0 : i32
    %c0_i32_0 = arith.constant 0 : i32
    %c0_i32_1 = arith.constant 0 : i32
    return %arg0, %c0_i32, %c0_i32_0 : i32, i32, i32
  }
  func.func @transform_1(%arg0: i32) -> (i32, i32) {
    %c0_i32 = arith.constant 0 : i32
    %c0_i32_0 = arith.constant 0 : i32
    %c0_i32_1 = arith.constant 0 : i32
    return %c0_i32, %c0_i32_0 : i32, i32
  }
  func.func @transform_2(%arg0: i32) -> (i32, i32) {
    %c0_i32 = arith.constant 0 : i32
    %c0_i32_0 = arith.constant 0 : i32
    %c0_i32_1 = arith.constant 0 : i32
    return %c0_i32, %c0_i32_0 : i32, i32
  }
  func.func @transform_3(%arg0: i32) -> (i32, i32) {
    %c0_i32 = arith.constant 0 : i32
    %c0_i32_0 = arith.constant 0 : i32
    %c0_i32_1 = arith.constant 0 : i32
    return %c0_i32, %c0_i32_0 : i32, i32
  }
  func.func @transform_4(%arg0: i32) -> (i32, i32) {
    %c0_i32 = arith.constant 0 : i32
    %c0_i32_0 = arith.constant 0 : i32
    %c0_i32_1 = arith.constant 0 : i32
    return %c0_i32, %c0_i32_0 : i32, i32
  }
  func.func @transform_5(%arg0: i32) -> (i32, i32) {
    %c0_i32 = arith.constant 0 : i32
    %c0_i32_0 = arith.constant 0 : i32
    %c0_i32_1 = arith.constant 0 : i32
    return %c0_i32, %c0_i32_0 : i32, i32
  }
  func.func @transform_6(%arg0: i32) -> (i32, i32) {
    %c0_i32 = arith.constant 0 : i32
    %c0_i32_0 = arith.constant 0 : i32
    %c0_i32_1 = arith.constant 0 : i32
    return %c0_i32, %c0_i32_0 : i32, i32
  }
  func.func @transform_7(%arg0: i32) -> (i32, i32) {
    %c0_i32 = arith.constant 0 : i32
    %c0_i32_0 = arith.constant 0 : i32
    %c0_i32_1 = arith.constant 0 : i32
    return %c0_i32, %c0_i32_0 : i32, i32
  }
  func.func @transform_8(%arg0: i32) -> (i32, i32) {
    %c0_i32 = arith.constant 0 : i32
    %c0_i32_0 = arith.constant 0 : i32
    %c0_i32_1 = arith.constant 0 : i32
    return %c0_i32, %c0_i32_0 : i32, i32
  }
  func.func @transform_9(%arg0: i32) -> (i32, i32) {
    %c0_i32 = arith.constant 0 : i32
    %c0_i32_0 = arith.constant 0 : i32
    %c0_i32_1 = arith.constant 0 : i32
    return %c0_i32, %c0_i32_0 : i32, i32
  }
  func.func @transform_10(%arg0: i32) -> (i32, i32) {
    %c0_i32 = arith.constant 0 : i32
    %c0_i32_0 = arith.constant 0 : i32
    %c0_i32_1 = arith.constant 0 : i32
    return %c0_i32, %c0_i32_0 : i32, i32
  }
  func.func @transform_11(%arg0: i32) -> (i32, i32) {
    %c0_i32 = arith.constant 0 : i32
    %c0_i32_0 = arith.constant 0 : i32
    %c0_i32_1 = arith.constant 0 : i32
    return %c0_i32, %c0_i32_0 : i32, i32
  }
  func.func @transform_12(%arg0: i32) -> (i32, i32) {
    %c0_i32 = arith.constant 0 : i32
    %c0_i32_0 = arith.constant 0 : i32
    %c0_i32_1 = arith.constant 0 : i32
    return %c0_i32, %c0_i32_0 : i32, i32
  }
  func.func @transform_13(%arg0: i32) -> (i32, i32) {
    %c0_i32 = arith.constant 0 : i32
    %c0_i32_0 = arith.constant 0 : i32
    %c0_i32_1 = arith.constant 0 : i32
    return %c0_i32, %c0_i32_0 : i32, i32
  }
  func.func @transform_14(%arg0: i32) -> (i32, i32) {
    %c0_i32 = arith.constant 0 : i32
    %c0_i32_0 = arith.constant 0 : i32
    %c0_i32_1 = arith.constant 0 : i32
    return %c0_i32, %c0_i32_0 : i32, i32
  }
  func.func @transform_15(%arg0: i32) -> (i32, i32) {
    %c0_i32 = arith.constant 0 : i32
    %c0_i32_0 = arith.constant 0 : i32
    return %arg0, %c0_i32 : i32, i32
  }
}

</mosaic_0001>

<llo_original>
// kernel: tpu_custom_call.1
$region0: #{tpu_custom_call.1}
  #allocation0 [shape = 'u32[]', space=smem, size = 0x4, offset = 0x4, fixed_abs, tag = 'smem constant byte address 0x4 - core index']
  #allocation1 [shape = 'u32[72,128]{1,0:T(1,128)}', space=vmem, size = 0x9000, scoped, tag = 'internal scratch']
  %s0 = inlined_call_operand.hbm [shape: bf16[16,16,32], index: 0, kind: input, shape index: {}]
  %s1 = inlined_call_operand.vmem [shape: f32[10,32], index: 1, kind: input, shape index: {}]
  %s2 = inlined_call_operand.vmem [shape: f32[2,8], index: 2, kind: input, shape index: {}]
  %s3 = inlined_call_operand.vmem [shape: f32[8,32], index: 3, kind: input, shape index: {}]
  %s4 = inlined_call_operand.hbm [shape: f32[8,32], index: 4, kind: input, shape index: {}]
  %s5 = inlined_call_operand.vmem [shape: bf16[32,32], index: 5, kind: input, shape index: {}]
  %s6 = inlined_call_operand.vmem [shape: bf16[32,8], index: 6, kind: input, shape index: {}]
  %s7 = inlined_call_operand.vmem [shape: bf16[32,32], index: 7, kind: input, shape index: {}]
  %s8 = inlined_call_operand.hbm [shape: bf16[32,128], index: 8, kind: input, shape index: {}]
  %s9 = inlined_call_operand.vmem [shape: f32[1,128], index: 9, kind: input, shape index: {}]
  %s10 = inlined_call_operand.vmem [shape: bf16[128,32], index: 10, kind: input, shape index: {}]
  %s11 = inlined_call_operand.vmem [shape: bf16[32,256], index: 11, kind: input, shape index: {}]
  %s12 = inlined_call_operand.vmem [shape: f32[1,256], index: 12, kind: input, shape index: {}]
  %s13 = inlined_call_operand.hbm [shape: bf16[256,128], index: 13, kind: input, shape index: {}]
  %s14 = inlined_call_operand.vmem [shape: f32[1,128], index: 14, kind: input, shape index: {}]
  %s15 = inlined_call_operand.hbm [shape: f32[16,128], index: 15, kind: output, shape index: {}]
  %s16 = sld [smem:[#allocation0]]
  $region109: #{tpu_custom_call.1} parent=0
    _
  %s18 = ssub.s32 1, %s16
  %s19 = scalar_select 0, %s18, %s16
  $region1: #{tpu_custom_call.1} parent=0
    #allocation2 [shape = 'u8[65536]{0}', space=vmem, size = 0x10000, scoped, tag = 'input window, operand 0']
    #allocation3 [shape = 's32[2]{0}', space=sflag, size = 0x8, scoped, tag = 'scoped memory for tpu_custom_call.1']
    #allocation4 [shape = 's32[2]{0}', space=sflag, size = 0x8, scoped, tag = 'scoped memory for tpu_custom_call.1']
    #allocation5 [shape = 'u8[4096]{0}', space=vmem, size = 0x1000, scoped, tag = 'input window, operand 4, single buffered']
    #allocation6 [shape = 's32[1]{0}', space=sflag, size = 0x4, scoped, tag = 'scoped memory for tpu_custom_call.1']
    #allocation7 [shape = 'u8[8192]{0}', space=vmem, size = 0x2000, scoped, tag = 'input window, operand 8, single buffered']
    #allocation8 [shape = 'u8[65536]{0}', space=vmem, size = 0x10000, scoped, tag = 'input window, operand 13, single buffered']
    #allocation9 [shape = 's32[1]{0}', space=sflag, size = 0x4, scoped, tag = 'scoped memory for tpu_custom_call.1']
    #allocation10 [shape = 'u8[8192]{0}', space=vmem, size = 0x2000, scoped, tag = 'output window, operand 0']
    %20 = vsyncpa [#allocation3], 0
    %s21 = scalar_lea.sflag [#allocation3], 1
    %22 = vsyncpa %s21, 0
    %23 = vsyncpa [#allocation6], 0
    %24 = vsyncpa [#allocation9], 0
    %25 = vsyncpa [#allocation4], 0
    %s26 = scalar_lea.sflag [#allocation4], 1
    %27 = vsyncpa %s26, 0
    loop: start=0, step=1, limit=4
    $region2: #{tpu_custom_call.1} parent=1 // loop_pre_header
      _
    $region3: #{tpu_custom_call.1} parent=1 // loop_header
      %s29 = sphi 0, %s33
      %p30 = scmp.ge.s32.totalorder %s29, 4
      %s39 = sphi 0, %s41
      %s42 = sphi 0, %s39
      %s43 = sphi 0, %s42
      %s59 = sphi 0, %s43
      %s63 = sphi 0, %s63
      %s65 = sphi 0, %s63
      %s66 = sphi 0, %s65
      %s80 = sphi 0, %s66
      %s84 = sphi 0, %s84
      %s86 = sphi 0, %s84
      %s87 = sphi 0, %s86
      %s101 = sphi 0, %s87
      %s105 = sphi 0, %s105
      %s107 = sphi 0, %s105
      %s108 = sphi 0, %s107
      %s122 = sphi 0, %s108
      %s126 = sphi 0, %s126
      %s128 = sphi 0, %s126
      %s129 = sphi 0, %s128
      %s143 = sphi 0, %s129
      %s147 = sphi 0, %s147
      %s149 = sphi 0, %s147
      %s150 = sphi 0, %s149
      %s164 = sphi 0, %s150
      %s168 = sphi 0, %s168
      %s170 = sphi 0, %s168
      %s171 = sphi 0, %s170
      %s185 = sphi 0, %s171
      %s189 = sphi 0, %s189
      %s191 = sphi 0, %s189
      %s192 = sphi 0, %s191
      %s206 = sphi 0, %s192
      %s210 = sphi 0, %s210
      %s212 = sphi 0, %s210
      %s213 = sphi 0, %s212
      %s227 = sphi 0, %s213
      %s231 = sphi 0, %s231
      %s233 = sphi 0, %s231
      %s234 = sphi 0, %s233
      %s248 = sphi 0, %s234
      %s252 = sphi 0, %s252
      %s254 = sphi 0, %s252
      %s255 = sphi 0, %s254
      %s269 = sphi 0, %s255
      %s273 = sphi 0, %s273
      %s275 = sphi 0, %s273
      %s276 = sphi 0, %s275
      %s290 = sphi 0, %s276
      %s294 = sphi 0, %s294
      %s296 = sphi 0, %s294
      %s297 = sphi 0, %s296
      %s311 = sphi 0, %s297
      %s315 = sphi 0, %s315
      %s317 = sphi 0, %s315
      %s318 = sphi 0, %s317
      %s332 = sphi 0, %s318
      %s336 = sphi 0, %s336
      %s338 = sphi 0, %s336
      %s339 = sphi 0, %s338
      %s353 = sphi 0, %s339
      %s359 = sphi 0, %s361
      %s362 = sphi 0, %s359
      %s363 = sphi 0, %s362
      %s379 = sphi 0, %s363
    $region4: #{tpu_custom_call.1} parent=1 // loop_header_branch
      %32 = sbr.rel (%p30) target = $region8
    $region5: #{tpu_custom_call.1} parent=1 // loop_body
      %s34 = ssub.s32 %s29, 1
      %s35 = ssub.s32 %s29, 2
      %s36 = sadd.s32 %s29, 1
      %s37 = ssub.s32 %s29, %s36
      %p38 = scmp.eq.s32.totalorder %s37, 0
      %s40 = sadd.s32 %s39, 1
      %s41 = scalar_select %p38, %s39, %s40
      %p44 = pneg %p38
      %p45 = scmp.eq.s32.totalorder %s29, 1
      %p46 = por %p44, %p45
      %p47 = scmp.ne.s32.totalorder %s39, %s42
      %p48 = scmp.eq.s32.totalorder %s29, 0
      %p49 = por %p47, %p48
      %p50 = scmp.ne.s32.totalorder %s39, %s42
      %p51 = scmp.eq.s32.totalorder %s34, 1
      %p52 = por %p50, %p51
      %p53 = scmp.ne.s32.totalorder %s42, %s43
      %p54 = scmp.eq.s32.totalorder %s34, 0
      %p55 = por %p53, %p54
      %p56 = scmp.ne.s32.totalorder %s42, %s43
      %p57 = scmp.eq.s32.totalorder %s35, 1
      %p58 = por %p56, %p57
      %p60 = scmp.ne.s32.totalorder %s43, %s59
      %p61 = scmp.eq.s32.totalorder %s35, 0
      %p62 = por %p60, %p61
      %s64 = sadd.s32 %s63, 1
      %p67 = scmp.eq.s32.totalorder %s29, 1
      %p68 = scmp.ne.s32.totalorder %s63, %s65
      %p69 = scmp.eq.s32.totalorder %s29, 0
      %p70 = por %p68, %p69
      %p71 = scmp.ne.s32.totalorder %s63, %s65
      %p72 = scmp.eq.s32.totalorder %s34, 1
      %p73 = por %p71, %p72
      %p74 = scmp.ne.s32.totalorder %s65, %s66
      %p75 = scmp.eq.s32.totalorder %s34, 0
      %p76 = por %p74, %p75
      %p77 = scmp.ne.s32.totalorder %s65, %s66
      %p78 = scmp.eq.s32.totalorder %s35, 1
      %p79 = por %p77, %p78
      %p81 = scmp.ne.s32.totalorder %s66, %s80
      %p82 = scmp.eq.s32.totalorder %s35, 0
      %p83 = por %p81, %p82
      %s85 = sadd.s32 %s84, 1
      %p88 = scmp.eq.s32.totalorder %s29, 1
      %p89 = scmp.ne.s32.totalorder %s84, %s86
      %p90 = scmp.eq.s32.totalorder %s29, 0
      %p91 = por %p89, %p90
      %p92 = scmp.ne.s32.totalorder %s84, %s86
      %p93 = scmp.eq.s32.totalorder %s34, 1
      %p94 = por %p92, %p93
      %p95 = scmp.ne.s32.totalorder %s86, %s87
      %p96 = scmp.eq.s32.totalorder %s34, 0
      %p97 = por %p95, %p96
      %p98 = scmp.ne.s32.totalorder %s86, %s87
      %p99 = scmp.eq.s32.totalorder %s35, 1
      %p100 = por %p98, %p99
      %p102 = scmp.ne.s32.totalorder %s87, %s101
      %p103 = scmp.eq.s32.totalorder %s35, 0
      %p104 = por %p102, %p103
      %s106 = sadd.s32 %s105, 1
      %p109 = scmp.eq.s32.totalorder %s29, 1
      %p110 = scmp.ne.s32.totalorder %s105, %s107
      %p111 = scmp.eq.s32.totalorder %s29, 0
      %p112 = por %p110, %p111
      %p113 = scmp.ne.s32.totalorder %s105, %s107
      %p114 = scmp.eq.s32.totalorder %s34, 1
      %p115 = por %p113, %p114
      %p116 = scmp.ne.s32.totalorder %s107, %s108
      %p117 = scmp.eq.s32.totalorder %s34, 0
      %p118 = por %p116, %p117
      %p119 = scmp.ne.s32.totalorder %s107, %s108
      %p120 = scmp.eq.s32.totalorder %s35, 1
      %p121 = por %p119, %p120
      %p123 = scmp.ne.s32.totalorder %s108, %s122
      %p124 = scmp.eq.s32.totalorder %s35, 0
      %p125 = por %p123, %p124
      %s127 = sadd.s32 %s126, 1
      %p130 = scmp.eq.s32.totalorder %s29, 1
      %p131 = scmp.ne.s32.totalorder %s126, %s128
      %p132 = scmp.eq.s32.totalorder %s29, 0
      %p133 = por %p131, %p132
      %p134 = scmp.ne.s32.totalorder %s126, %s128
      %p135 = scmp.eq.s32.totalorder %s34, 1
      %p136 = por %p134, %p135
      %p137 = scmp.ne.s32.totalorder %s128, %s129
      %p138 = scmp.eq.s32.totalorder %s34, 0
      %p139 = por %p137, %p138
      %p140 = scmp.ne.s32.totalorder %s128, %s129
      %p141 = scmp.eq.s32.totalorder %s35, 1
      %p142 = por %p140, %p141
      %p144 = scmp.ne.s32.totalorder %s129, %s143
      %p145 = scmp.eq.s32.totalorder %s35, 0
      %p146 = por %p144, %p145
      %s148 = sadd.s32 %s147, 1
      %p151 = scmp.eq.s32.totalorder %s29, 1
      %p152 = scmp.ne.s32.totalorder %s147, %s149
      %p153 = scmp.eq.s32.totalorder %s29, 0
      %p154 = por %p152, %p153
      %p155 = scmp.ne.s32.totalorder %s147, %s149
      %p156 = scmp.eq.s32.totalorder %s34, 1
      %p157 = por %p155, %p156
      %p158 = scmp.ne.s32.totalorder %s149, %s150
      %p159 = scmp.eq.s32.totalorder %s34, 0
      %p160 = por %p158, %p159
      %p161 = scmp.ne.s32.totalorder %s149, %s150
      %p162 = scmp.eq.s32.totalorder %s35, 1
      %p163 = por %p161, %p162
      %p165 = scmp.ne.s32.totalorder %s150, %s164
      %p166 = scmp.eq.s32.totalorder %s35, 0
      %p167 = por %p165, %p166
      %s169 = sadd.s32 %s168, 1
      %p172 = scmp.eq.s32.totalorder %s29, 1
      %p173 = scmp.ne.s32.totalorder %s168, %s170
      %p174 = scmp.eq.s32.totalorder %s29, 0
      %p175 = por %p173, %p174
      %p176 = scmp.ne.s32.totalorder %s168, %s170
      %p177 = scmp.eq.s32.totalorder %s34, 1
      %p178 = por %p176, %p177
      %p179 = scmp.ne.s32.totalorder %s170, %s171
      %p180 = scmp.eq.s32.totalorder %s34, 0
      %p181 = por %p179, %p180
      %p182 = scmp.ne.s32.totalorder %s170, %s171
      %p183 = scmp.eq.s32.totalorder %s35, 1
      %p184 = por %p182, %p183
      %p186 = scmp.ne.s32.totalorder %s171, %s185
      %p187 = scmp.eq.s32.totalorder %s35, 0
      %p188 = por %p186, %p187
      %s190 = sadd.s32 %s189, 1
      %p193 = scmp.eq.s32.totalorder %s29, 1
      %p194 = scmp.ne.s32.totalorder %s189, %s191
      %p195 = scmp.eq.s32.totalorder %s29, 0
      %p196 = por %p194, %p195
      %p197 = scmp.ne.s32.totalorder %s189, %s191
      %p198 = scmp.eq.s32.totalorder %s34, 1
      %p199 = por %p197, %p198
      %p200 = scmp.ne.s32.totalorder %s191, %s192
      %p201 = scmp.eq.s32.totalorder %s34, 0
      %p202 = por %p200, %p201
      %p203 = scmp.ne.s32.totalorder %s191, %s192
      %p204 = scmp.eq.s32.totalorder %s35, 1
      %p205 = por %p203, %p204
      %p207 = scmp.ne.s32.totalorder %s192, %s206
      %p208 = scmp.eq.s32.totalorder %s35, 0
      %p209 = por %p207, %p208
      %s211 = sadd.s32 %s210, 1
      %p214 = scmp.eq.s32.totalorder %s29, 1
      %p215 = scmp.ne.s32.totalorder %s210, %s212
      %p216 = scmp.eq.s32.totalorder %s29, 0
      %p217 = por %p215, %p216
      %p218 = scmp.ne.s32.totalorder %s210, %s212
      %p219 = scmp.eq.s32.totalorder %s34, 1
      %p220 = por %p218, %p219
      %p221 = scmp.ne.s32.totalorder %s212, %s213
      %p222 = scmp.eq.s32.totalorder %s34, 0
      %p223 = por %p221, %p222
      %p224 = scmp.ne.s32.totalorder %s212, %s213
      %p225 = scmp.eq.s32.totalorder %s35, 1
      %p226 = por %p224, %p225
      %p228 = scmp.ne.s32.totalorder %s213, %s227
      %p229 = scmp.eq.s32.totalorder %s35, 0
      %p230 = por %p228, %p229
      %s232 = sadd.s32 %s231, 1
      %p235 = scmp.eq.s32.totalorder %s29, 1
      %p236 = scmp.ne.s32.totalorder %s231, %s233
      %p237 = scmp.eq.s32.totalorder %s29, 0
      %p238 = por %p236, %p237
      %p239 = scmp.ne.s32.totalorder %s231, %s233
      %p240 = scmp.eq.s32.totalorder %s34, 1
      %p241 = por %p239, %p240
      %p242 = scmp.ne.s32.totalorder %s233, %s234
      %p243 = scmp.eq.s32.totalorder %s34, 0
      %p244 = por %p242, %p243
      %p245 = scmp.ne.s32.totalorder %s233, %s234
      %p246 = scmp.eq.s32.totalorder %s35, 1
      %p247 = por %p245, %p246
      %p249 = scmp.ne.s32.totalorder %s234, %s248
      %p250 = scmp.eq.s32.totalorder %s35, 0
      %p251 = por %p249, %p250
      %s253 = sadd.s32 %s252, 1
      %p256 = scmp.eq.s32.totalorder %s29, 1
      %p257 = scmp.ne.s32.totalorder %s252, %s254
      %p258 = scmp.eq.s32.totalorder %s29, 0
      %p259 = por %p257, %p258
      %p260 = scmp.ne.s32.totalorder %s252, %s254
      %p261 = scmp.eq.s32.totalorder %s34, 1
      %p262 = por %p260, %p261
      %p263 = scmp.ne.s32.totalorder %s254, %s255
      %p264 = scmp.eq.s32.totalorder %s34, 0
      %p265 = por %p263, %p264
      %p266 = scmp.ne.s32.totalorder %s254, %s255
      %p267 = scmp.eq.s32.totalorder %s35, 1
      %p268 = por %p266, %p267
      %p270 = scmp.ne.s32.totalorder %s255, %s269
      %p271 = scmp.eq.s32.totalorder %s35, 0
      %p272 = por %p270, %p271
      %s274 = sadd.s32 %s273, 1
      %p277 = scmp.eq.s32.totalorder %s29, 1
      %p278 = scmp.ne.s32.totalorder %s273, %s275
      %p279 = scmp.eq.s32.totalorder %s29, 0
      %p280 = por %p278, %p279
      %p281 = scmp.ne.s32.totalorder %s273, %s275
      %p282 = scmp.eq.s32.totalorder %s34, 1
      %p283 = por %p281, %p282
      %p284 = scmp.ne.s32.totalorder %s275, %s276
      %p285 = scmp.eq.s32.totalorder %s34, 0
      %p286 = por %p284, %p285
      %p287 = scmp.ne.s32.totalorder %s275, %s276
      %p288 = scmp.eq.s32.totalorder %s35, 1
      %p289 = por %p287, %p288
      %p291 = scmp.ne.s32.totalorder %s276, %s290
      %p292 = scmp.eq.s32.totalorder %s35, 0
      %p293 = por %p291, %p292
      %s295 = sadd.s32 %s294, 1
      %p298 = scmp.eq.s32.totalorder %s29, 1
      %p299 = scmp.ne.s32.totalorder %s294, %s296
      %p300 = scmp.eq.s32.totalorder %s29, 0
      %p301 = por %p299, %p300
      %p302 = scmp.ne.s32.totalorder %s294, %s296
      %p303 = scmp.eq.s32.totalorder %s34, 1
      %p304 = por %p302, %p303
      %p305 = scmp.ne.s32.totalorder %s296, %s297
      %p306 = scmp.eq.s32.totalorder %s34, 0
      %p307 = por %p305, %p306
      %p308 = scmp.ne.s32.totalorder %s296, %s297
      %p309 = scmp.eq.s32.totalorder %s35, 1
      %p310 = por %p308, %p309
      %p312 = scmp.ne.s32.totalorder %s297, %s311
      %p313 = scmp.eq.s32.totalorder %s35, 0
      %p314 = por %p312, %p313
      %s316 = sadd.s32 %s315, 1
      %p319 = scmp.eq.s32.totalorder %s29, 1
      %p320 = scmp.ne.s32.totalorder %s315, %s317
      %p321 = scmp.eq.s32.totalorder %s29, 0
      %p322 = por %p320, %p321
      %p323 = scmp.ne.s32.totalorder %s315, %s317
      %p324 = scmp.eq.s32.totalorder %s34, 1
      %p325 = por %p323, %p324
      %p326 = scmp.ne.s32.totalorder %s317, %s318
      %p327 = scmp.eq.s32.totalorder %s34, 0
      %p328 = por %p326, %p327
      %p329 = scmp.ne.s32.totalorder %s317, %s318
      %p330 = scmp.eq.s32.totalorder %s35, 1
      %p331 = por %p329, %p330
      %p333 = scmp.ne.s32.totalorder %s318, %s332
      %p334 = scmp.eq.s32.totalorder %s35, 0
      %p335 = por %p333, %p334
      %s337 = sadd.s32 %s336, 1
      %p340 = scmp.eq.s32.totalorder %s29, 1
      %p341 = scmp.ne.s32.totalorder %s336, %s338
      %p342 = scmp.eq.s32.totalorder %s29, 0
      %p343 = por %p341, %p342
      %p344 = scmp.ne.s32.totalorder %s336, %s338
      %p345 = scmp.eq.s32.totalorder %s34, 1
      %p346 = por %p344, %p345
      %p347 = scmp.ne.s32.totalorder %s338, %s339
      %p348 = scmp.eq.s32.totalorder %s34, 0
      %p349 = por %p347, %p348
      %p350 = scmp.ne.s32.totalorder %s338, %s339
      %p351 = scmp.eq.s32.totalorder %s35, 1
      %p352 = por %p350, %p351
      %p354 = scmp.ne.s32.totalorder %s339, %s353
      %p355 = scmp.eq.s32.totalorder %s35, 0
      %p356 = por %p354, %p355
      %s357 = ssub.s32 %s29, %s36
      %p358 = scmp.eq.s32.totalorder %s357, 0
      %s360 = sadd.s32 %s359, 1
      %s361 = scalar_select %p358, %s359, %s360
      %p364 = pneg %p358
      %p365 = scmp.eq.s32.totalorder %s29, 1
      %p366 = por %p364, %p365
      %p367 = scmp.ne.s32.totalorder %s359, %s362
      %p368 = scmp.eq.s32.totalorder %s29, 0
      %p369 = por %p367, %p368
      %p370 = scmp.ne.s32.totalorder %s359, %s362
      %p371 = scmp.eq.s32.totalorder %s34, 1
      %p372 = por %p370, %p371
      %p373 = scmp.ne.s32.totalorder %s362, %s363
      %p374 = scmp.eq.s32.totalorder %s34, 0
      %p375 = por %p373, %p374
      %p376 = scmp.ne.s32.totalorder %s362, %s363
      %p377 = scmp.eq.s32.totalorder %s35, 1
      %p378 = por %p376, %p377
      %p380 = scmp.ne.s32.totalorder %s363, %s379
      %p381 = scmp.eq.s32.totalorder %s35, 0
      %p382 = por %p380, %p381
      %p383 = scmp.le.s32.totalorder 1, %s29
      %p384 = scmp.lt.s32.totalorder %s29, 3
      %p385 = pnand %p383, %p384
      %p386 = pneg %p385
      // Predicated region
      $region9: #{tpu_custom_call.1} parent=5 // pred_check
        _
      $region10: #{tpu_custom_call.1} parent=5 // pred_check_branch
        %388 = sbr.rel (%p385) target = $region12
      $region11: #{tpu_custom_call.1} parent=5 // pred_region
        %s389 = ssub.s32 %s29, 1
        // Predicated region
        $region13: #{tpu_custom_call.1} parent=11 // pred_check
          %p390 = pneg %p76
        $region14: #{tpu_custom_call.1} parent=11 // pred_check_branch
          %392 = sbr.rel (%p390) target = $region16
        $region15: #{tpu_custom_call.1} parent=11 // pred_region
          _
        $region16: #{tpu_custom_call.1} parent=11 // pred_fallthru
          _
        // Predicated region
        $region17: #{tpu_custom_call.1} parent=11 // pred_check
          %p393 = pneg %p97
        $region18: #{tpu_custom_call.1} parent=11 // pred_check_branch
          %395 = sbr.rel (%p393) target = $region20
        $region19: #{tpu_custom_call.1} parent=11 // pred_region
          _
        $region20: #{tpu_custom_call.1} parent=11 // pred_fallthru
          _
        // Predicated region
        $region21: #{tpu_custom_call.1} parent=11 // pred_check
          %p396 = pneg %p118
        $region22: #{tpu_custom_call.1} parent=11 // pred_check_branch
          %398 = sbr.rel (%p396) target = $region24
        $region23: #{tpu_custom_call.1} parent=11 // pred_region
          _
        $region24: #{tpu_custom_call.1} parent=11 // pred_fallthru
          _
        // Predicated region
        $region25: #{tpu_custom_call.1} parent=11 // pred_check
          %p399 = pneg %p139
        $region26: #{tpu_custom_call.1} parent=11 // pred_check_branch
          %401 = sbr.rel (%p399) target = $region28
        $region27: #{tpu_custom_call.1} parent=11 // pred_region
          %403 = vsyncadd [#allocation6], 0
          %s405 = sshll.u32 %s4, 4
          %s406 = int_to_ptr.hbm [resolvable:$true] %s405
          %s407 = sshll.u32 [#allocation5], 4
          %s408 = int_to_ptr.vmem [resolvable:$true] %s407
          %410 = dma.hbm_to_vmem [thread:$0]  %s406, 128, %s408, [#allocation6]
        $region28: #{tpu_custom_call.1} parent=11 // pred_fallthru
          _
        // Predicated region
        $region29: #{tpu_custom_call.1} parent=11 // pred_check
          %p411 = pneg %p160
        $region30: #{tpu_custom_call.1} parent=11 // pred_check_branch
          %413 = sbr.rel (%p411) target = $region32
        $region31: #{tpu_custom_call.1} parent=11 // pred_region
          _
        $region32: #{tpu_custom_call.1} parent=11 // pred_fallthru
          _
        // Predicated region
        $region33: #{tpu_custom_call.1} parent=11 // pred_check
          %p414 = pneg %p181
        $region34: #{tpu_custom_call.1} parent=11 // pred_check_branch
          %416 = sbr.rel (%p414) target = $region36
        $region35: #{tpu_custom_call.1} parent=11 // pred_region
          _
        $region36: #{tpu_custom_call.1} parent=11 // pred_fallthru
          _
        // Predicated region
        $region37: #{tpu_custom_call.1} parent=11 // pred_check
          %p417 = pneg %p202
        $region38: #{tpu_custom_call.1} parent=11 // pred_check_branch
          %419 = sbr.rel (%p417) target = $region40
        $region39: #{tpu_custom_call.1} parent=11 // pred_region
          _
        $region40: #{tpu_custom_call.1} parent=11 // pred_fallthru
          _
        // Predicated region
        $region41: #{tpu_custom_call.1} parent=11 // pred_check
          %p420 = pneg %p223
        $region42: #{tpu_custom_call.1} parent=11 // pred_check_branch
          %422 = sbr.rel (%p420) target = $region44
        $region43: #{tpu_custom_call.1} parent=11 // pred_region
          %424 = vsyncadd [#allocation6], 0
          %s425 = sshll.u32 %s8, 4
          %s426 = int_to_ptr.hbm [resolvable:$true] %s425
          %s427 = sshll.u32 [#allocation7], 4
          %s428 = int_to_ptr.vmem [resolvable:$true] %s427
          %433 = dma.hbm_to_vmem [thread:$0]  %s426, 256, %s428, [#allocation6], 64, 64, 4
        $region44: #{tpu_custom_call.1} parent=11 // pred_fallthru
          _
        // Predicated region
        $region45: #{tpu_custom_call.1} parent=11 // pred_check
          %p434 = pneg %p244
        $region46: #{tpu_custom_call.1} parent=11 // pred_check_branch
          %436 = sbr.rel (%p434) target = $region48
        $region47: #{tpu_custom_call.1} parent=11 // pred_region
          _
        $region48: #{tpu_custom_call.1} parent=11 // pred_fallthru
          _
        // Predicated region
        $region49: #{tpu_custom_call.1} parent=11 // pred_check
          %p437 = pneg %p265
        $region50: #{tpu_custom_call.1} parent=11 // pred_check_branch
          %439 = sbr.rel (%p437) target = $region52
        $region51: #{tpu_custom_call.1} parent=11 // pred_region
          _
        $region52: #{tpu_custom_call.1} parent=11 // pred_fallthru
          _
        // Predicated region
        $region53: #{tpu_custom_call.1} parent=11 // pred_check
          %p440 = pneg %p286
        $region54: #{tpu_custom_call.1} parent=11 // pred_check_branch
          %442 = sbr.rel (%p440) target = $region56
        $region55: #{tpu_custom_call.1} parent=11 // pred_region
          _
        $region56: #{tpu_custom_call.1} parent=11 // pred_fallthru
          _
        // Predicated region
        $region57: #{tpu_custom_call.1} parent=11 // pred_check
          %p443 = pneg %p307
        $region58: #{tpu_custom_call.1} parent=11 // pred_check_branch
          %445 = sbr.rel (%p443) target = $region60
        $region59: #{tpu_custom_call.1} parent=11 // pred_region
          _
        $region60: #{tpu_custom_call.1} parent=11 // pred_fallthru
          _
        // Predicated region
        $region61: #{tpu_custom_call.1} parent=11 // pred_check
          %p446 = pneg %p328
        $region62: #{tpu_custom_call.1} parent=11 // pred_check_branch
          %448 = sbr.rel (%p446) target = $region64
        $region63: #{tpu_custom_call.1} parent=11 // pred_region
          %450 = vsyncadd [#allocation9], 0
          %s451 = sshll.u32 %s13, 4
          %s452 = int_to_ptr.hbm [resolvable:$true] %s451
          %s453 = sshll.u32 [#allocation8], 4
          %s454 = int_to_ptr.vmem [resolvable:$true] %s453
          %459 = dma.hbm_to_vmem [thread:$0]  %s452, 2048, %s454, [#allocation9], 64, 64, 4
        $region64: #{tpu_custom_call.1} parent=11 // pred_fallthru
          _
        // Predicated region
        $region65: #{tpu_custom_call.1} parent=11 // pred_check
          %p460 = pneg %p349
        $region66: #{tpu_custom_call.1} parent=11 // pred_check_branch
          %462 = sbr.rel (%p460) target = $region68
        $region67: #{tpu_custom_call.1} parent=11 // pred_region
          _
        $region68: #{tpu_custom_call.1} parent=11 // pred_fallthru
          _
      $region12: #{tpu_custom_call.1} parent=5 // pred_fallthru
        _
      %p463 = scmp.lt.s32.totalorder %s29, 2
      // Predicated region
      $region69: #{tpu_custom_call.1} parent=5 // pred_check
        %p464 = pneg %p463
      $region70: #{tpu_custom_call.1} parent=5 // pred_check_branch
        %466 = sbr.rel (%p464) target = $region72
      $region71: #{tpu_custom_call.1} parent=5 // pred_region
        // Predicated region
        $region73: #{tpu_custom_call.1} parent=71 // pred_check
          %p467 = pneg %p49
        $region74: #{tpu_custom_call.1} parent=71 // pred_check_branch
          %469 = sbr.rel (%p467) target = $region76
        $region75: #{tpu_custom_call.1} parent=71 // pred_region
          %s470 = sand.u32 %s39, 1
          %s471 = scalar_lea.sflag [#allocation3], %s470
          %s472 = sand.u32 %s39, 1
          %s473 = smul.addr %s472, 64
          %s474 = scalar_lea.vmem [#allocation2], %s473
          %s475 = smul.u32 8, %s29
          %477 = vsyncadd %s471, 0
          %s478 = smul.addr %s475, 2
          %s479 = smul.addr %s478, 4
          %s480 = scalar_lea.hbm %s0, %s479
          %s481 = sshll.u32 %s480, 4
          %s482 = int_to_ptr.hbm [resolvable:$true] %s481
          %s483 = sshll.u32 %s474, 4
          %s484 = int_to_ptr.vmem [resolvable:$true] %s483
          %489 = dma.hbm_to_vmem [thread:$0]  %s482, 1024, %s484, %s471, 64, 64, 4
        $region76: #{tpu_custom_call.1} parent=71 // pred_fallthru
          _
      $region72: #{tpu_custom_call.1} parent=5 // pred_fallthru
        _
      %p490 = scmp.le.s32.totalorder 1, %s29
      %p491 = scmp.lt.s32.totalorder %s29, 3
      %p492 = pnand %p490, %p491
      %p493 = pneg %p492
      // Predicated region
      $region77: #{tpu_custom_call.1} parent=5 // pred_check
        _
      $region78: #{tpu_custom_call.1} parent=5 // pred_check_branch
        %495 = sbr.rel (%p492) target = $region80
      $region79: #{tpu_custom_call.1} parent=5 // pred_region
        %s496 = ssub.s32 %s29, 1
        %s497 = sand.u32 %s42, 1
        %s498 = scalar_lea.sflag [#allocation3], %s497
        %s499 = sand.u32 %s42, 1
        %s500 = smul.addr %s499, 64
        %s501 = scalar_lea.vmem [#allocation2], %s500
        // Predicated region
        $region81: #{tpu_custom_call.1} parent=79 // pred_check
          %p502 = pneg %p55
        $region82: #{tpu_custom_call.1} parent=79 // pred_check_branch
          %504 = sbr.rel (%p502) target = $region84
        $region83: #{tpu_custom_call.1} parent=79 // pred_region
          %506 = dma.done %s498, 1024
        $region84: #{tpu_custom_call.1} parent=79 // pred_fallthru
          _
        // Predicated region
        $region85: #{tpu_custom_call.1} parent=79 // pred_check
          %p507 = pneg %p139
        $region86: #{tpu_custom_call.1} parent=79 // pred_check_branch
          %509 = sbr.rel (%p507) target = $region88
        $region87: #{tpu_custom_call.1} parent=79 // pred_region
          %511 = dma.done [#allocation6], 128
        $region88: #{tpu_custom_call.1} parent=79 // pred_fallthru
          _
        // Predicated region
        $region89: #{tpu_custom_call.1} parent=79 // pred_check
          %p512 = pneg %p223
        $region90: #{tpu_custom_call.1} parent=79 // pred_check_branch
          %514 = sbr.rel (%p512) target = $region92
        $region91: #{tpu_custom_call.1} parent=79 // pred_region
          %516 = dma.done [#allocation6], 256
        $region92: #{tpu_custom_call.1} parent=79 // pred_fallthru
          _
        // Predicated region
        $region93: #{tpu_custom_call.1} parent=79 // pred_check
          %p517 = pneg %p328
        $region94: #{tpu_custom_call.1} parent=79 // pred_check_branch
          %519 = sbr.rel (%p517) target = $region96
        $region95: #{tpu_custom_call.1} parent=79 // pred_region
          %521 = dma.done [#allocation9], 2048
        $region96: #{tpu_custom_call.1} parent=79 // pred_fallthru
          _
        %s522 = sand.u32 %s42, 1
        %s523 = scalar_lea.sflag [#allocation3], %s522
        %s524 = sand.u32 %s42, 1
        %s525 = smul.addr %s524, 64
        %s526 = scalar_lea.vmem [#allocation2], %s525
        %p527 = pneg %p55
        %p528 = pneg %p52
        %p529 = pneg %p76
        %p530 = pneg %p73
        %p531 = pneg %p97
        %p532 = pneg %p94
        %p533 = pneg %p118
        %p534 = pneg %p115
        %p535 = pneg %p139
        %p536 = pneg %p136
        %p537 = pneg %p160
        %p538 = pneg %p157
        %p539 = pneg %p181
        %p540 = pneg %p178
        %p541 = pneg %p202
        %p542 = pneg %p199
        %p543 = pneg %p223
        %p544 = pneg %p220
        %p545 = pneg %p244
        %p546 = pneg %p241
        %p547 = pneg %p265
        %p548 = pneg %p262
        %p549 = pneg %p286
        %p550 = pneg %p283
        %p551 = pneg %p307
        %p552 = pneg %p304
        %p553 = pneg %p328
        %p554 = pneg %p325
        %p555 = pneg %p349
        %p556 = pneg %p346
        %p557 = pneg %p375
        %p558 = pneg %p372
        %s559 = sand.u32 %s362, 1
        %s560 = scalar_lea.sflag [#allocation4], %s559
        %s561 = sand.u32 %s362, 1
        %s562 = smul.addr %s561, 8
        %s563 = scalar_lea.vmem [#allocation10], %s562
        %s564 = smul.u32 8, %s34
        %v566 = vld [vmem:[%s1] sm:$0xff]
        %v567 = vld [vmem:[%s1 + $0x8] sm:$0x3]
        %v568 = vld [vmem:[%s2] sm:$0x3]
        %v569 = vld [vmem:[%s3] sm:$0xff]
        %v570 = vld [vmem:[#allocation5] sm:$0xff]
        %v571 = vld [vmem:[%s5] sm:$0xf]
        %v572 = vld [vmem:[%s5 + $0x4] sm:$0xf]
        %v573 = vld [vmem:[%s5 + $0x8] sm:$0xf]
        %v574 = vld [vmem:[%s5 + $0xc] sm:$0xf]
        %v575 = vld [vmem:[%s6] sm:$0xf]
        %v576 = vld [vmem:[%s6 + $0x4] sm:$0xf]
        %v577 = vld [vmem:[%s6 + $0x8] sm:$0xf]
        %v578 = vld [vmem:[%s6 + $0xc] sm:$0xf]
        %v579 = vld [vmem:[%s7] sm:$0xf]
        %v580 = vld [vmem:[%s7 + $0x4] sm:$0xf]
        %v581 = vld [vmem:[%s7 + $0x8] sm:$0xf]
        %v582 = vld [vmem:[%s7 + $0xc] sm:$0xf]
        %v583 = vld [vmem:[#allocation7] sm:$0xf]
        %v584 = vld [vmem:[#allocation7 + $0x4] sm:$0xf]
        %v585 = vld [vmem:[#allocation7 + $0x8] sm:$0xf]
        %v586 = vld [vmem:[#allocation7 + $0xc] sm:$0xf]
        %v587 = vld [vmem:[%s9] sm:$0x1]
        %v588 = vld [vmem:[%s10] sm:$0xf]
        %v589 = vld [vmem:[%s10 + $0x4] sm:$0xf]
        %v590 = vld [vmem:[%s10 + $0x8] sm:$0xf]
        %v591 = vld [vmem:[%s10 + $0xc] sm:$0xf]
        %v592 = vld [vmem:[%s10 + $0x10] sm:$0xf]
        %v593 = vld [vmem:[%s10 + $0x14] sm:$0xf]
        %v594 = vld [vmem:[%s10 + $0x18] sm:$0xf]
        %v595 = vld [vmem:[%s10 + $0x1c] sm:$0xf]
        %v596 = vld [vmem:[%s10 + $0x20] sm:$0xf]
        %v597 = vld [vmem:[%s10 + $0x24] sm:$0xf]
        %v598 = vld [vmem:[%s10 + $0x28] sm:$0xf]
        %v599 = vld [vmem:[%s10 + $0x2c] sm:$0xf]
        %v600 = vld [vmem:[%s10 + $0x30] sm:$0xf]
        %v601 = vld [vmem:[%s10 + $0x34] sm:$0xf]
        %v602 = vld [vmem:[%s10 + $0x38] sm:$0xf]
        %v603 = vld [vmem:[%s10 + $0x3c] sm:$0xf]
        %v604 = vld [vmem:[%s11] sm:$0xff]
        %v605 = vld [vmem:[%s11 + $0x8] sm:$0xff]
        %v606 = vld [vmem:[%s11 + $0x10] sm:$0xff]
        %v607 = vld [vmem:[%s11 + $0x18] sm:$0xff]
        %v608 = vld [vmem:[%s12] sm:$0x3]
        %v609 = vld [vmem:[#allocation8] sm:$0xf]
        %v610 = vld [vmem:[#allocation8 + $0x4] sm:$0xf]
        %v611 = vld [vmem:[#allocation8 + $0x8] sm:$0xf]
        %v612 = vld [vmem:[#allocation8 + $0xc] sm:$0xf]
        %v613 = vld [vmem:[#allocation8 + $0x10] sm:$0xf]
        %v614 = vld [vmem:[#allocation8 + $0x14] sm:$0xf]
        %v615 = vld [vmem:[#allocation8 + $0x18] sm:$0xf]
        %v616 = vld [vmem:[#allocation8 + $0x1c] sm:$0xf]
        %v617 = vld [vmem:[#allocation8 + $0x20] sm:$0xf]
        %v618 = vld [vmem:[#allocation8 + $0x24] sm:$0xf]
        %v619 = vld [vmem:[#allocation8 + $0x28] sm:$0xf]
        %v620 = vld [vmem:[#allocation8 + $0x2c] sm:$0xf]
        %v621 = vld [vmem:[#allocation8 + $0x30] sm:$0xf]
        %v622 = vld [vmem:[#allocation8 + $0x34] sm:$0xf]
        %v623 = vld [vmem:[#allocation8 + $0x38] sm:$0xf]
        %v624 = vld [vmem:[#allocation8 + $0x3c] sm:$0xf]
        %v625 = vld [vmem:[#allocation8 + $0x40] sm:$0xf]
        %v626 = vld [vmem:[#allocation8 + $0x44] sm:$0xf]
        %v627 = vld [vmem:[#allocation8 + $0x48] sm:$0xf]
        %v628 = vld [vmem:[#allocation8 + $0x4c] sm:$0xf]
        %v629 = vld [vmem:[#allocation8 + $0x50] sm:$0xf]
        %v630 = vld [vmem:[#allocation8 + $0x54] sm:$0xf]
        %v631 = vld [vmem:[#allocation8 + $0x58] sm:$0xf]
        %v632 = vld [vmem:[#allocation8 + $0x5c] sm:$0xf]
        %v633 = vld [vmem:[#allocation8 + $0x60] sm:$0xf]
        %v634 = vld [vmem:[#allocation8 + $0x64] sm:$0xf]
        %v635 = vld [vmem:[#allocation8 + $0x68] sm:$0xf]
        %v636 = vld [vmem:[#allocation8 + $0x6c] sm:$0xf]
        %v637 = vld [vmem:[#allocation8 + $0x70] sm:$0xf]
        %v638 = vld [vmem:[#allocation8 + $0x74] sm:$0xf]
        %v639 = vld [vmem:[#allocation8 + $0x78] sm:$0xf]
        %v640 = vld [vmem:[#allocation8 + $0x7c] sm:$0xf]
        %v641 = vld [vmem:[%s14] sm:$0x1]
        %v642 = vld [vmem:[%s501] sm:$0xf]
        %v643 = vld [vmem:[%s501 + $0x4] sm:$0xf]
        %v644 = vld [vmem:[%s501 + $0x8] sm:$0xf]
        %v645 = vld [vmem:[%s501 + $0xc] sm:$0xf]
        %v646 = vld [vmem:[%s501 + $0x10] sm:$0xf]
        %v647 = vld [vmem:[%s501 + $0x14] sm:$0xf]
        %v648 = vld [vmem:[%s501 + $0x18] sm:$0xf]
        %v649 = vld [vmem:[%s501 + $0x1c] sm:$0xf]
        %v650 = vld [vmem:[%s501 + $0x20] sm:$0xf]
        %v651 = vld [vmem:[%s501 + $0x24] sm:$0xf]
        %v652 = vld [vmem:[%s501 + $0x28] sm:$0xf]
        %v653 = vld [vmem:[%s501 + $0x2c] sm:$0xf]
        %v654 = vld [vmem:[%s501 + $0x30] sm:$0xf]
        %v655 = vld [vmem:[%s501 + $0x34] sm:$0xf]
        %v656 = vld [vmem:[%s501 + $0x38] sm:$0xf]
        %v657 = vld [vmem:[%s501 + $0x3c] sm:$0xf]
        %v658 = vunpack.c.l.bf16 %v642
        %v659 = vunpack.c.l.bf16 %v643
        %v660 = vunpack.c.l.bf16 %v644
        %v661 = vunpack.c.l.bf16 %v645
        %v662 = vunpack.c.l.bf16 %v646
        %v663 = vunpack.c.l.bf16 %v647
        %v664 = vunpack.c.l.bf16 %v648
        %v665 = vunpack.c.l.bf16 %v649
        %v666 = vunpack.c.l.bf16 %v650
        %v667 = vunpack.c.l.bf16 %v651
        %v668 = vunpack.c.l.bf16 %v652
        %v669 = vunpack.c.l.bf16 %v653
        %v670 = vunpack.c.l.bf16 %v654
        %v671 = vunpack.c.l.bf16 %v655
        %v672 = vunpack.c.l.bf16 %v656
        %v673 = vunpack.c.l.bf16 %v657
        %vm674 = vcmask 261120
        %v675 = vsel %vm674, %v658, 0.0
        %676 = vadd.xlane.f32.xlu0 %v675
        %v677 = vpop.xlane.xlu0 %676
        %v678 = vsel %vm674, %v659, 0.0
        %679 = vadd.xlane.f32.xlu0 %v678
        %v680 = vpop.xlane.xlu0 %679
        %v681 = vsel %vm674, %v660, 0.0
        %682 = vadd.xlane.f32.xlu0 %v681
        %v683 = vpop.xlane.xlu0 %682
        %v684 = vsel %vm674, %v661, 0.0
        %685 = vadd.xlane.f32.xlu0 %v684
        %v686 = vpop.xlane.xlu0 %685
        %v687 = vsel %vm674, %v662, 0.0
        %688 = vadd.xlane.f32.xlu0 %v687
        %v689 = vpop.xlane.xlu0 %688
        %v690 = vsel %vm674, %v663, 0.0
        %691 = vadd.xlane.f32.xlu0 %v690
        %v692 = vpop.xlane.xlu0 %691
        %v693 = vsel %vm674, %v664, 0.0
        %694 = vadd.xlane.f32.xlu0 %v693
        %v695 = vpop.xlane.xlu0 %694
        %v696 = vsel %vm674, %v665, 0.0
        %697 = vadd.xlane.f32.xlu0 %v696
        %v698 = vpop.xlane.xlu0 %697
        %v699 = vsel %vm674, %v666, 0.0
        %700 = vadd.xlane.f32.xlu0 %v699
        %v701 = vpop.xlane.xlu0 %700
        %v702 = vsel %vm674, %v667, 0.0
        %703 = vadd.xlane.f32.xlu0 %v702
        %v704 = vpop.xlane.xlu0 %703
        %v705 = vsel %vm674, %v668, 0.0
        %706 = vadd.xlane.f32.xlu0 %v705
        %v707 = vpop.xlane.xlu0 %706
        %v708 = vsel %vm674, %v669, 0.0
        %709 = vadd.xlane.f32.xlu0 %v708
        %v710 = vpop.xlane.xlu0 %709
        %v711 = vsel %vm674, %v670, 0.0
        %712 = vadd.xlane.f32.xlu0 %v711
        %v713 = vpop.xlane.xlu0 %712
        %v714 = vsel %vm674, %v671, 0.0
        %715 = vadd.xlane.f32.xlu0 %v714
        %v716 = vpop.xlane.xlu0 %715
        %v717 = vsel %vm674, %v672, 0.0
        %718 = vadd.xlane.f32.xlu0 %v717
        %v719 = vpop.xlane.xlu0 %718
        %v720 = vsel %vm674, %v673, 0.0
        %721 = vadd.xlane.f32.xlu0 %v720
        %v722 = vpop.xlane.xlu0 %721
        %v723 = vrcp.pop 32.0
        %v724 = vmul.f32 32.0, %v723
        %v725 = vsub.f32 1.0, %v724
        %v726 = vmul.f32 %v723, %v725
        %v727 = vadd.f32 %v723, %v726
        %vm728 = vweird.f32 %v723
        %v729 = vsel %vm728, %v723, %v727
        %v730 = vmul.f32 %v677, %v729
        %v731 = vmul.f32 %v680, %v729
        %v732 = vmul.f32 %v683, %v729
        %v733 = vmul.f32 %v686, %v729
        %v734 = vmul.f32 %v689, %v729
        %v735 = vmul.f32 %v692, %v729
        %v736 = vmul.f32 %v695, %v729
        %v737 = vmul.f32 %v698, %v729
        %v738 = vmul.f32 %v701, %v729
        %v739 = vmul.f32 %v704, %v729
        %v740 = vmul.f32 %v707, %v729
        %v741 = vmul.f32 %v710, %v729
        %v742 = vmul.f32 %v713, %v729
        %v743 = vmul.f32 %v716, %v729
        %v744 = vmul.f32 %v719, %v729
        %v745 = vmul.f32 %v722, %v729
        %v746 = vmul.f32 %v658, %v658
        %v747 = vmul.f32 %v659, %v659
        %v748 = vmul.f32 %v660, %v660
        %v749 = vmul.f32 %v661, %v661
        %v750 = vmul.f32 %v662, %v662
        %v751 = vmul.f32 %v663, %v663
        %v752 = vmul.f32 %v664, %v664
        %v753 = vmul.f32 %v665, %v665
        %v754 = vmul.f32 %v666, %v666
        %v755 = vmul.f32 %v667, %v667
        %v756 = vmul.f32 %v668, %v668
        %v757 = vmul.f32 %v669, %v669
        %v758 = vmul.f32 %v670, %v670
        %v759 = vmul.f32 %v671, %v671
        %v760 = vmul.f32 %v672, %v672
        %v761 = vmul.f32 %v673, %v673
        %v762 = vsel %vm674, %v746, 0.0
        %763 = vadd.xlane.f32.xlu0 %v762
        %v764 = vpop.xlane.xlu0 %763
        %v765 = vsel %vm674, %v747, 0.0
        %766 = vadd.xlane.f32.xlu0 %v765
        %v767 = vpop.xlane.xlu0 %766
        %v768 = vsel %vm674, %v748, 0.0
        %769 = vadd.xlane.f32.xlu0 %v768
        %v770 = vpop.xlane.xlu0 %769
        %v771 = vsel %vm674, %v749, 0.0
        %772 = vadd.xlane.f32.xlu0 %v771
        %v773 = vpop.xlane.xlu0 %772
        %v774 = vsel %vm674, %v750, 0.0
        %775 = vadd.xlane.f32.xlu0 %v774
        %v776 = vpop.xlane.xlu0 %775
        %v777 = vsel %vm674, %v751, 0.0
        %778 = vadd.xlane.f32.xlu0 %v777
        %v779 = vpop.xlane.xlu0 %778
        %v780 = vsel %vm674, %v752, 0.0
        %781 = vadd.xlane.f32.xlu0 %v780
        %v782 = vpop.xlane.xlu0 %781
        %v783 = vsel %vm674, %v753, 0.0
        %784 = vadd.xlane.f32.xlu0 %v783
        %v785 = vpop.xlane.xlu0 %784
        %v786 = vsel %vm674, %v754, 0.0
        %787 = vadd.xlane.f32.xlu0 %v786
        %v788 = vpop.xlane.xlu0 %787
        %v789 = vsel %vm674, %v755, 0.0
        %790 = vadd.xlane.f32.xlu0 %v789
        %v791 = vpop.xlane.xlu0 %790
        %v792 = vsel %vm674, %v756, 0.0
        %793 = vadd.xlane.f32.xlu0 %v792
        %v794 = vpop.xlane.xlu0 %793
        %v795 = vsel %vm674, %v757, 0.0
        %796 = vadd.xlane.f32.xlu0 %v795
        %v797 = vpop.xlane.xlu0 %796
        %v798 = vsel %vm674, %v758, 0.0
        %799 = vadd.xlane.f32.xlu0 %v798
        %v800 = vpop.xlane.xlu0 %799
        %v801 = vsel %vm674, %v759, 0.0
        %802 = vadd.xlane.f32.xlu0 %v801
        %v803 = vpop.xlane.xlu0 %802
        %v804 = vsel %vm674, %v760, 0.0
        %805 = vadd.xlane.f32.xlu0 %v804
        %v806 = vpop.xlane.xlu0 %805
        %v807 = vsel %vm674, %v761, 0.0
        %808 = vadd.xlane.f32.xlu0 %v807
        %v809 = vpop.xlane.xlu0 %808
        %v810 = vmul.f32 %v764, %v729
        %v811 = vmul.f32 %v767, %v729
        %v812 = vmul.f32 %v770, %v729
        %v813 = vmul.f32 %v773, %v729
        %v814 = vmul.f32 %v776, %v729
        %v815 = vmul.f32 %v779, %v729
        %v816 = vmul.f32 %v782, %v729
        %v817 = vmul.f32 %v785, %v729
        %v818 = vmul.f32 %v788, %v729
        %v819 = vmul.f32 %v791, %v729
        %v820 = vmul.f32 %v794, %v729
        %v821 = vmul.f32 %v797, %v729
        %v822 = vmul.f32 %v800, %v729
        %v823 = vmul.f32 %v803, %v729
        %v824 = vmul.f32 %v806, %v729
        %v825 = vmul.f32 %v809, %v729
        %v826 = vmul.f32 %v730, %v730
        %v827 = vmul.f32 %v731, %v731
        %v828 = vmul.f32 %v732, %v732
        %v829 = vmul.f32 %v733, %v733
        %v830 = vmul.f32 %v734, %v734
        %v831 = vmul.f32 %v735, %v735
        %v832 = vmul.f32 %v736, %v736
        %v833 = vmul.f32 %v737, %v737
        %v834 = vmul.f32 %v738, %v738
        %v835 = vmul.f32 %v739, %v739
        %v836 = vmul.f32 %v740, %v740
        %v837 = vmul.f32 %v741, %v741
        %v838 = vmul.f32 %v742, %v742
        %v839 = vmul.f32 %v743, %v743
        %v840 = vmul.f32 %v744, %v744
        %v841 = vmul.f32 %v745, %v745
        %v842 = vsub.f32 %v810, %v826
        %v843 = vsub.f32 %v811, %v827
        %v844 = vsub.f32 %v812, %v828
        %v845 = vsub.f32 %v813, %v829
        %v846 = vsub.f32 %v814, %v830
        %v847 = vsub.f32 %v815, %v831
        %v848 = vsub.f32 %v816, %v832
        %v849 = vsub.f32 %v817, %v833
        %v850 = vsub.f32 %v818, %v834
        %v851 = vsub.f32 %v819, %v835
        %v852 = vsub.f32 %v820, %v836
        %v853 = vsub.f32 %v821, %v837
        %v854 = vsub.f32 %v822, %v838
        %v855 = vsub.f32 %v823, %v839
        %v856 = vsub.f32 %v824, %v840
        %v857 = vsub.f32 %v825, %v841
        %v858 = vmax.f32 %v842, 0.0
        %v859 = vmax.f32 %v843, 0.0
        %v860 = vmax.f32 %v844, 0.0
        %v861 = vmax.f32 %v845, 0.0
        %v862 = vmax.f32 %v846, 0.0
        %v863 = vmax.f32 %v847, 0.0
        %v864 = vmax.f32 %v848, 0.0
        %v865 = vmax.f32 %v849, 0.0
        %v866 = vmax.f32 %v850, 0.0
        %v867 = vmax.f32 %v851, 0.0
        %v868 = vmax.f32 %v852, 0.0
        %v869 = vmax.f32 %v853, 0.0
        %v870 = vmax.f32 %v854, 0.0
        %v871 = vmax.f32 %v855, 0.0
        %v872 = vmax.f32 %v856, 0.0
        %v873 = vmax.f32 %v857, 0.0
        %v874 = vsub.f32 %v658, %v730
        %v875 = vsub.f32 %v659, %v731
        %v876 = vsub.f32 %v660, %v732
        %v877 = vsub.f32 %v661, %v733
        %v878 = vsub.f32 %v662, %v734
        %v879 = vsub.f32 %v663, %v735
        %v880 = vsub.f32 %v664, %v736
        %v881 = vsub.f32 %v665, %v737
        %v882 = vsub.f32 %v666, %v738
        %v883 = vsub.f32 %v667, %v739
        %v884 = vsub.f32 %v668, %v740
        %v885 = vsub.f32 %v669, %v741
        %v886 = vsub.f32 %v670, %v742
        %v887 = vsub.f32 %v671, %v743
        %v888 = vsub.f32 %v672, %v744
        %v889 = vsub.f32 %v673, %v745
        %v890 = vadd.f32 %v858, 1e-05
        %v891 = vadd.f32 %v859, 1e-05
        %v892 = vadd.f32 %v860, 1e-05
        %v893 = vadd.f32 %v861, 1e-05
        %v894 = vadd.f32 %v862, 1e-05
        %v895 = vadd.f32 %v863, 1e-05
        %v896 = vadd.f32 %v864, 1e-05
        %v897 = vadd.f32 %v865, 1e-05
        %v898 = vadd.f32 %v866, 1e-05
        %v899 = vadd.f32 %v867, 1e-05
        %v900 = vadd.f32 %v868, 1e-05
        %v901 = vadd.f32 %v869, 1e-05
        %v902 = vadd.f32 %v870, 1e-05
        %v903 = vadd.f32 %v871, 1e-05
        %v904 = vadd.f32 %v872, 1e-05
        %v905 = vadd.f32 %v873, 1e-05
        %v906 = vrsqrt.pop %v890
        %v907 = vmul.f32 %v906, %v890
        %v908 = vmul.f32 %v907, %v906
        %v909 = vmul.f32 0.5, %v908
        %v910 = vsub.f32 1.5, %v909
        %v911 = vmul.f32 %v906, %v910
        %vm912 = vweird.f32 %v890
        %vm913 = vweird.f32 %v906
        %vm914 = vmor %vm912, %vm913
        %v915 = vsel %vm914, %v906, %v911
        %v916 = vrsqrt.pop %v891
        %v917 = vmul.f32 %v916, %v891
        %v918 = vmul.f32 %v917, %v916
        %v919 = vmul.f32 0.5, %v918
        %v920 = vsub.f32 1.5, %v919
        %v921 = vmul.f32 %v916, %v920
        %vm922 = vweird.f32 %v891
        %vm923 = vweird.f32 %v916
        %vm924 = vmor %vm922, %vm923
        %v925 = vsel %vm924, %v916, %v921
        %v926 = vrsqrt.pop %v892
        %v927 = vmul.f32 %v926, %v892
        %v928 = vmul.f32 %v927, %v926
        %v929 = vmul.f32 0.5, %v928
        %v930 = vsub.f32 1.5, %v929
        %v931 = vmul.f32 %v926, %v930
        %vm932 = vweird.f32 %v892
        %vm933 = vweird.f32 %v926
        %vm934 = vmor %vm932, %vm933
        %v935 = vsel %vm934, %v926, %v931
        %v936 = vrsqrt.pop %v893
        %v937 = vmul.f32 %v936, %v893
        %v938 = vmul.f32 %v937, %v936
        %v939 = vmul.f32 0.5, %v938
        %v940 = vsub.f32 1.5, %v939
        %v941 = vmul.f32 %v936, %v940
        %vm942 = vweird.f32 %v893
        %vm943 = vweird.f32 %v936
        %vm944 = vmor %vm942, %vm943
        %v945 = vsel %vm944, %v936, %v941
        %v946 = vrsqrt.pop %v894
        %v947 = vmul.f32 %v946, %v894
        %v948 = vmul.f32 %v947, %v946
        %v949 = vmul.f32 0.5, %v948
        %v950 = vsub.f32 1.5, %v949
        %v951 = vmul.f32 %v946, %v950
        %vm952 = vweird.f32 %v894
        %vm953 = vweird.f32 %v946
        %vm954 = vmor %vm952, %vm953
        %v955 = vsel %vm954, %v946, %v951
        %v956 = vrsqrt.pop %v895
        %v957 = vmul.f32 %v956, %v895
        %v958 = vmul.f32 %v957, %v956
        %v959 = vmul.f32 0.5, %v958
        %v960 = vsub.f32 1.5, %v959
        %v961 = vmul.f32 %v956, %v960
        %vm962 = vweird.f32 %v895
        %vm963 = vweird.f32 %v956
        %vm964 = vmor %vm962, %vm963
        %v965 = vsel %vm964, %v956, %v961
        %v966 = vrsqrt.pop %v896
        %v967 = vmul.f32 %v966, %v896
        %v968 = vmul.f32 %v967, %v966
        %v969 = vmul.f32 0.5, %v968
        %v970 = vsub.f32 1.5, %v969
        %v971 = vmul.f32 %v966, %v970
        %vm972 = vweird.f32 %v896
        %vm973 = vweird.f32 %v966
        %vm974 = vmor %vm972, %vm973
        %v975 = vsel %vm974, %v966, %v971
        %v976 = vrsqrt.pop %v897
        %v977 = vmul.f32 %v976, %v897
        %v978 = vmul.f32 %v977, %v976
        %v979 = vmul.f32 0.5, %v978
        %v980 = vsub.f32 1.5, %v979
        %v981 = vmul.f32 %v976, %v980
        %vm982 = vweird.f32 %v897
        %vm983 = vweird.f32 %v976
        %vm984 = vmor %vm982, %vm983
        %v985 = vsel %vm984, %v976, %v981
        %v986 = vrsqrt.pop %v898
        %v987 = vmul.f32 %v986, %v898
        %v988 = vmul.f32 %v987, %v986
        %v989 = vmul.f32 0.5, %v988
        %v990 = vsub.f32 1.5, %v989
        %v991 = vmul.f32 %v986, %v990
        %vm992 = vweird.f32 %v898
        %vm993 = vweird.f32 %v986
        %vm994 = vmor %vm992, %vm993
        %v995 = vsel %vm994, %v986, %v991
        %v996 = vrsqrt.pop %v899
        %v997 = vmul.f32 %v996, %v899
        %v998 = vmul.f32 %v997, %v996
        %v999 = vmul.f32 0.5, %v998
        %v1000 = vsub.f32 1.5, %v999
        %v1001 = vmul.f32 %v996, %v1000
        %vm1002 = vweird.f32 %v899
        %vm1003 = vweird.f32 %v996
        %vm1004 = vmor %vm1002, %vm1003
        %v1005 = vsel %vm1004, %v996, %v1001
        %v1006 = vrsqrt.pop %v900
        %v1007 = vmul.f32 %v1006, %v900
        %v1008 = vmul.f32 %v1007, %v1006
        %v1009 = vmul.f32 0.5, %v1008
        %v1010 = vsub.f32 1.5, %v1009
        %v1011 = vmul.f32 %v1006, %v1010
        %vm1012 = vweird.f32 %v900
        %vm1013 = vweird.f32 %v1006
        %vm1014 = vmor %vm1012, %vm1013
        %v1015 = vsel %vm1014, %v1006, %v1011
        %v1016 = vrsqrt.pop %v901
        %v1017 = vmul.f32 %v1016, %v901
        %v1018 = vmul.f32 %v1017, %v1016
        %v1019 = vmul.f32 0.5, %v1018
        %v1020 = vsub.f32 1.5, %v1019
        %v1021 = vmul.f32 %v1016, %v1020
        %vm1022 = vweird.f32 %v901
        %vm1023 = vweird.f32 %v1016
        %vm1024 = vmor %vm1022, %vm1023
        %v1025 = vsel %vm1024, %v1016, %v1021
        %v1026 = vrsqrt.pop %v902
        %v1027 = vmul.f32 %v1026, %v902
        %v1028 = vmul.f32 %v1027, %v1026
        %v1029 = vmul.f32 0.5, %v1028
        %v1030 = vsub.f32 1.5, %v1029
        %v1031 = vmul.f32 %v1026, %v1030
        %vm1032 = vweird.f32 %v902
        %vm1033 = vweird.f32 %v1026
        %vm1034 = vmor %vm1032, %vm1033
        %v1035 = vsel %vm1034, %v1026, %v1031
        %v1036 = vrsqrt.pop %v903
        %v1037 = vmul.f32 %v1036, %v903
        %v1038 = vmul.f32 %v1037, %v1036
        %v1039 = vmul.f32 0.5, %v1038
        %v1040 = vsub.f32 1.5, %v1039
        %v1041 = vmul.f32 %v1036, %v1040
        %vm1042 = vweird.f32 %v903
        %vm1043 = vweird.f32 %v1036
        %vm1044 = vmor %vm1042, %vm1043
        %v1045 = vsel %vm1044, %v1036, %v1041
        %v1046 = vrsqrt.pop %v904
        %v1047 = vmul.f32 %v1046, %v904
        %v1048 = vmul.f32 %v1047, %v1046
        %v1049 = vmul.f32 0.5, %v1048
        %v1050 = vsub.f32 1.5, %v1049
        %v1051 = vmul.f32 %v1046, %v1050
        %vm1052 = vweird.f32 %v904
        %vm1053 = vweird.f32 %v1046
        %vm1054 = vmor %vm1052, %vm1053
        %v1055 = vsel %vm1054, %v1046, %v1051
        %v1056 = vrsqrt.pop %v905
        %v1057 = vmul.f32 %v1056, %v905
        %v1058 = vmul.f32 %v1057, %v1056
        %v1059 = vmul.f32 0.5, %v1058
        %v1060 = vsub.f32 1.5, %v1059
        %v1061 = vmul.f32 %v1056, %v1060
        %vm1062 = vweird.f32 %v905
        %vm1063 = vweird.f32 %v1056
        %vm1064 = vmor %vm1062, %vm1063
        %v1065 = vsel %vm1064, %v1056, %v1061
        %v1066 = vmul.f32 %v874, %v915
        %v1067 = vmul.f32 %v875, %v925
        %v1068 = vmul.f32 %v876, %v935
        %v1069 = vmul.f32 %v877, %v945
        %v1070 = vmul.f32 %v878, %v955
        %v1071 = vmul.f32 %v879, %v965
        %v1072 = vmul.f32 %v880, %v975
        %v1073 = vmul.f32 %v881, %v985
        %v1074 = vmul.f32 %v882, %v995
        %v1075 = vmul.f32 %v883, %v1005
        %v1076 = vmul.f32 %v884, %v1015
        %v1077 = vmul.f32 %v885, %v1025
        %v1078 = vmul.f32 %v886, %v1035
        %v1079 = vmul.f32 %v887, %v1045
        %v1080 = vmul.f32 %v888, %v1055
        %v1081 = vmul.f32 %v889, %v1065
        %v1082 = vperm.slane %v566, 0
        %v1083 = vmul.f32 %v1066, %v1082
        %v1084 = vmul.f32 %v1067, %v1082
        %v1085 = vmul.f32 %v1068, %v1082
        %v1086 = vmul.f32 %v1069, %v1082
        %v1087 = vmul.f32 %v1070, %v1082
        %v1088 = vmul.f32 %v1071, %v1082
        %v1089 = vmul.f32 %v1072, %v1082
        %v1090 = vmul.f32 %v1073, %v1082
        %v1091 = vmul.f32 %v1074, %v1082
        %v1092 = vmul.f32 %v1075, %v1082
        %v1093 = vmul.f32 %v1076, %v1082
        %v1094 = vmul.f32 %v1077, %v1082
        %v1095 = vmul.f32 %v1078, %v1082
        %v1096 = vmul.f32 %v1079, %v1082
        %v1097 = vmul.f32 %v1080, %v1082
        %v1098 = vmul.f32 %v1081, %v1082
        %v1099 = vperm.slane %v566, 1
        %v1100 = vadd.f32 %v1083, %v1099
        %v1101 = vadd.f32 %v1084, %v1099
        %v1102 = vadd.f32 %v1085, %v1099
        %v1103 = vadd.f32 %v1086, %v1099
        %v1104 = vadd.f32 %v1087, %v1099
        %v1105 = vadd.f32 %v1088, %v1099
        %v1106 = vadd.f32 %v1089, %v1099
        %v1107 = vadd.f32 %v1090, %v1099
        %v1108 = vadd.f32 %v1091, %v1099
        %v1109 = vadd.f32 %v1092, %v1099
        %v1110 = vadd.f32 %v1093, %v1099
        %v1111 = vadd.f32 %v1094, %v1099
        %v1112 = vadd.f32 %v1095, %v1099
        %v1113 = vadd.f32 %v1096, %v1099
        %v1114 = vadd.f32 %v1097, %v1099
        %v1115 = vadd.f32 %v1098, %v1099
        %v1116 = vpack.c.bf16 %v1101, %v1100
        %v1117 = vpack.c.bf16 %v1103, %v1102
        %v1118 = vpack.c.bf16 %v1105, %v1104
        %v1119 = vpack.c.bf16 %v1107, %v1106
        %v1120 = vpack.c.bf16 %v1109, %v1108
        %v1121 = vpack.c.bf16 %v1111, %v1110
        %v1122 = vpack.c.bf16 %v1113, %v1112
        %v1123 = vpack.c.bf16 %v1115, %v1114
        %v1128 = vunpack.c.l.b16 %v571
        %v1129 = vunpack.c.l.b16 %v572
        %v1130 = vunpack.c.l.b16 %v573
        %v1131 = vunpack.c.l.b16 %v574
        %v1132 = vpack.c.b16 %v1129, %v1128
        %v1133 = vpack.c.b16 %v1131, %v1130
        %v1137 = vsel %vm674, %v1116, 0
        %v1140 = vsel %vm674, %v1117, 0
        %v1143 = vsel %vm674, %v1118, 0
        %v1146 = vsel %vm674, %v1119, 0
        %v1149 = vsel %vm674, %v1120, 0
        %v1152 = vsel %vm674, %v1121, 0
        %v1155 = vsel %vm674, %v1122, 0
        %v1158 = vsel %vm674, %v1123, 0
        %1160 = vmatpush.bf16.msra.mxu0 0
        %1161 = vmatpush.bf16.msra.mxu0 0
        %1162 = vmatpush.bf16.msra.mxu0 0
        %1163 = vmatpush.bf16.msra.mxu0 0
        %1164 = vmatpush.bf16.msra.mxu0 0
        %1165 = vmatpush.bf16.msra.mxu0 0
        %1166 = vmatpush.bf16.msra.mxu0 %v1133
        %1167 = vmatpush.bf16.msra.mxu0 %v1132
        %1168 = vmatmul.bf16.gmra.mxu0 %v1137
        %v1169 = vpop.f32.mrf.mxu0
        %v1170 = vadd.f32 0.0, %v1169
        %v1171 = vpop.f32.mrf.mxu0
        %v1172 = vadd.f32 0.0, %v1171
        %1173 = vmatmul.bf16.gmra.mxu0 %v1140
        %v1174 = vpop.f32.mrf.mxu0
        %v1175 = vadd.f32 0.0, %v1174
        %v1176 = vpop.f32.mrf.mxu0
        %v1177 = vadd.f32 0.0, %v1176
        %1178 = vmatmul.bf16.gmra.mxu0 %v1143
        %v1179 = vpop.f32.mrf.mxu0
        %v1180 = vadd.f32 0.0, %v1179
        %v1181 = vpop.f32.mrf.mxu0
        %v1182 = vadd.f32 0.0, %v1181
        %1183 = vmatmul.bf16.gmra.mxu0 %v1146
        %v1184 = vpop.f32.mrf.mxu0
        %v1185 = vadd.f32 0.0, %v1184
        %v1186 = vpop.f32.mrf.mxu0
        %v1187 = vadd.f32 0.0, %v1186
        %1188 = vmatmul.bf16.gmra.mxu0 %v1149
        %v1189 = vpop.f32.mrf.mxu0
        %v1190 = vadd.f32 0.0, %v1189
        %v1191 = vpop.f32.mrf.mxu0
        %v1192 = vadd.f32 0.0, %v1191
        %1193 = vmatmul.bf16.gmra.mxu0 %v1152
        %v1194 = vpop.f32.mrf.mxu0
        %v1195 = vadd.f32 0.0, %v1194
        %v1196 = vpop.f32.mrf.mxu0
        %v1197 = vadd.f32 0.0, %v1196
        %1198 = vmatmul.bf16.gmra.mxu0 %v1155
        %v1199 = vpop.f32.mrf.mxu0
        %v1200 = vadd.f32 0.0, %v1199
        %v1201 = vpop.f32.mrf.mxu0
        %v1202 = vadd.f32 0.0, %v1201
        %1203 = vmatmul.bf16.gmra.mxu0 %v1158
        %v1204 = vpop.f32.mrf.mxu0
        %v1205 = vadd.f32 0.0, %v1204
        %v1206 = vpop.f32.mrf.mxu0
        %v1207 = vadd.f32 0.0, %v1206
        %1208 = vdwg.mxu0
        %v1213 = vunpack.c.l.b16 %v575
        %v1214 = vunpack.c.l.b16 %v576
        %v1215 = vunpack.c.l.b16 %v577
        %v1216 = vunpack.c.l.b16 %v578
        %v1217 = vpack.c.b16 %v1214, %v1213
        %v1218 = vpack.c.b16 %v1216, %v1215
        %1221 = vmatpush.bf16.msra.mxu0 0
        %1222 = vmatpush.bf16.msra.mxu0 0
        %1223 = vmatpush.bf16.msra.mxu0 0
        %1224 = vmatpush.bf16.msra.mxu0 0
        %1225 = vmatpush.bf16.msra.mxu0 0
        %1226 = vmatpush.bf16.msra.mxu0 0
        %1227 = vmatpush.bf16.msra.mxu0 %v1218
        %1228 = vmatpush.bf16.msra.mxu0 %v1217
        %1229 = vmatmul.bf16.gmra.mxu0 %v1137
        %v1230 = vpop.f32.mrf.mxu0
        %v1231 = vadd.f32 0.0, %v1230
        %v1232 = vpop.f32.mrf.mxu0
        %v1233 = vadd.f32 0.0, %v1232
        %1234 = vmatmul.bf16.gmra.mxu0 %v1140
        %v1235 = vpop.f32.mrf.mxu0
        %v1236 = vadd.f32 0.0, %v1235
        %v1237 = vpop.f32.mrf.mxu0
        %v1238 = vadd.f32 0.0, %v1237
        %1239 = vmatmul.bf16.gmra.mxu0 %v1143
        %v1240 = vpop.f32.mrf.mxu0
        %v1241 = vadd.f32 0.0, %v1240
        %v1242 = vpop.f32.mrf.mxu0
        %v1243 = vadd.f32 0.0, %v1242
        %1244 = vmatmul.bf16.gmra.mxu0 %v1146
        %v1245 = vpop.f32.mrf.mxu0
        %v1246 = vadd.f32 0.0, %v1245
        %v1247 = vpop.f32.mrf.mxu0
        %v1248 = vadd.f32 0.0, %v1247
        %1249 = vmatmul.bf16.gmra.mxu0 %v1149
        %v1250 = vpop.f32.mrf.mxu0
        %v1251 = vadd.f32 0.0, %v1250
        %v1252 = vpop.f32.mrf.mxu0
        %v1253 = vadd.f32 0.0, %v1252
        %1254 = vmatmul.bf16.gmra.mxu0 %v1152
        %v1255 = vpop.f32.mrf.mxu0
        %v1256 = vadd.f32 0.0, %v1255
        %v1257 = vpop.f32.mrf.mxu0
        %v1258 = vadd.f32 0.0, %v1257
        %1259 = vmatmul.bf16.gmra.mxu0 %v1155
        %v1260 = vpop.f32.mrf.mxu0
        %v1261 = vadd.f32 0.0, %v1260
        %v1262 = vpop.f32.mrf.mxu0
        %v1263 = vadd.f32 0.0, %v1262
        %1264 = vmatmul.bf16.gmra.mxu0 %v1158
        %v1265 = vpop.f32.mrf.mxu0
        %v1266 = vadd.f32 0.0, %v1265
        %v1267 = vpop.f32.mrf.mxu0
        %v1268 = vadd.f32 0.0, %v1267
        %1269 = vdwg.mxu0
        %vm1270 = vcmask 64512
        %v1271 = vsel %vm1270, %v1231, -inf
        %v1272 = vsel %vm1270, %v1233, -inf
        %v1273 = vmax.f32 %v1271, %v1272
        %v1274 = vrot.slane %v1273, 4
        %v1275 = vmax.f32 %v1273, %v1274
        %v1276 = vrot.slane %v1275, 2
        %v1277 = vmax.f32 %v1275, %v1276
        %v1278 = vrot.slane %v1277, 1
        %v1279 = vmax.f32 %v1277, %v1278
        %v1280 = vsel %vm1270, %v1236, -inf
        %v1281 = vsel %vm1270, %v1238, -inf
        %v1282 = vmax.f32 %v1280, %v1281
        %v1283 = vrot.slane %v1282, 4
        %v1284 = vmax.f32 %v1282, %v1283
        %v1285 = vrot.slane %v1284, 2
        %v1286 = vmax.f32 %v1284, %v1285
        %v1287 = vrot.slane %v1286, 1
        %v1288 = vmax.f32 %v1286, %v1287
        %v1289 = vsel %vm1270, %v1241, -inf
        %v1290 = vsel %vm1270, %v1243, -inf
        %v1291 = vmax.f32 %v1289, %v1290
        %v1292 = vrot.slane %v1291, 4
        %v1293 = vmax.f32 %v1291, %v1292
        %v1294 = vrot.slane %v1293, 2
        %v1295 = vmax.f32 %v1293, %v1294
        %v1296 = vrot.slane %v1295, 1
        %v1297 = vmax.f32 %v1295, %v1296
        %v1298 = vsel %vm1270, %v1246, -inf
        %v1299 = vsel %vm1270, %v1248, -inf
        %v1300 = vmax.f32 %v1298, %v1299
        %v1301 = vrot.slane %v1300, 4
        %v1302 = vmax.f32 %v1300, %v1301
        %v1303 = vrot.slane %v1302, 2
        %v1304 = vmax.f32 %v1302, %v1303
        %v1305 = vrot.slane %v1304, 1
        %v1306 = vmax.f32 %v1304, %v1305
        %v1307 = vsel %vm1270, %v1251, -inf
        %v1308 = vsel %vm1270, %v1253, -inf
        %v1309 = vmax.f32 %v1307, %v1308
        %v1310 = vrot.slane %v1309, 4
        %v1311 = vmax.f32 %v1309, %v1310
        %v1312 = vrot.slane %v1311, 2
        %v1313 = vmax.f32 %v1311, %v1312
        %v1314 = vrot.slane %v1313, 1
        %v1315 = vmax.f32 %v1313, %v1314
        %v1316 = vsel %vm1270, %v1256, -inf
        %v1317 = vsel %vm1270, %v1258, -inf
        %v1318 = vmax.f32 %v1316, %v1317
        %v1319 = vrot.slane %v1318, 4
        %v1320 = vmax.f32 %v1318, %v1319
        %v1321 = vrot.slane %v1320, 2
        %v1322 = vmax.f32 %v1320, %v1321
        %v1323 = vrot.slane %v1322, 1
        %v1324 = vmax.f32 %v1322, %v1323
        %v1325 = vsel %vm1270, %v1261, -inf
        %v1326 = vsel %vm1270, %v1263, -inf
        %v1327 = vmax.f32 %v1325, %v1326
        %v1328 = vrot.slane %v1327, 4
        %v1329 = vmax.f32 %v1327, %v1328
        %v1330 = vrot.slane %v1329, 2
        %v1331 = vmax.f32 %v1329, %v1330
        %v1332 = vrot.slane %v1331, 1
        %v1333 = vmax.f32 %v1331, %v1332
        %v1334 = vsel %vm1270, %v1266, -inf
        %v1335 = vsel %vm1270, %v1268, -inf
        %v1336 = vmax.f32 %v1334, %v1335
        %v1337 = vrot.slane %v1336, 4
        %v1338 = vmax.f32 %v1336, %v1337
        %v1339 = vrot.slane %v1338, 2
        %v1340 = vmax.f32 %v1338, %v1339
        %v1341 = vrot.slane %v1340, 1
        %v1342 = vmax.f32 %v1340, %v1341
        %v1343 = vsub.f32 %v1231, %v1279
        %v1344 = vsub.f32 %v1233, %v1279
        %v1345 = vsub.f32 %v1236, %v1288
        %v1346 = vsub.f32 %v1238, %v1288
        %v1347 = vsub.f32 %v1241, %v1297
        %v1348 = vsub.f32 %v1243, %v1297
        %v1349 = vsub.f32 %v1246, %v1306
        %v1350 = vsub.f32 %v1248, %v1306
        %v1351 = vsub.f32 %v1251, %v1315
        %v1352 = vsub.f32 %v1253, %v1315
        %v1353 = vsub.f32 %v1256, %v1324
        %v1354 = vsub.f32 %v1258, %v1324
        %v1355 = vsub.f32 %v1261, %v1333
        %v1356 = vsub.f32 %v1263, %v1333
        %v1357 = vsub.f32 %v1266, %v1342
        %v1358 = vsub.f32 %v1268, %v1342
        %v1359 = vmul.f32 %v1343, 1.442695
        %v1360 = vpow.pop %v1359
        %v1361 = vmul.f32 %v1344, 1.442695
        %v1362 = vpow.pop %v1361
        %v1363 = vmul.f32 %v1345, 1.442695
        %v1364 = vpow.pop %v1363
        %v1365 = vmul.f32 %v1346, 1.442695
        %v1366 = vpow.pop %v1365
        %v1367 = vmul.f32 %v1347, 1.442695
        %v1368 = vpow.pop %v1367
        %v1369 = vmul.f32 %v1348, 1.442695
        %v1370 = vpow.pop %v1369
        %v1371 = vmul.f32 %v1349, 1.442695
        %v1372 = vpow.pop %v1371
        %v1373 = vmul.f32 %v1350, 1.442695
        %v1374 = vpow.pop %v1373
        %v1375 = vmul.f32 %v1351, 1.442695
        %v1376 = vpow.pop %v1375
        %v1377 = vmul.f32 %v1352, 1.442695
        %v1378 = vpow.pop %v1377
        %v1379 = vmul.f32 %v1353, 1.442695
        %v1380 = vpow.pop %v1379
        %v1381 = vmul.f32 %v1354, 1.442695
        %v1382 = vpow.pop %v1381
        %v1383 = vmul.f32 %v1355, 1.442695
        %v1384 = vpow.pop %v1383
        %v1385 = vmul.f32 %v1356, 1.442695
        %v1386 = vpow.pop %v1385
        %v1387 = vmul.f32 %v1357, 1.442695
        %v1388 = vpow.pop %v1387
        %v1389 = vmul.f32 %v1358, 1.442695
        %v1390 = vpow.pop %v1389
        %v1391 = vsel %vm1270, %v1360, 0.0
        %v1392 = vsel %vm1270, %v1362, 0.0
        %v1393 = vadd.f32 %v1391, %v1392
        %v1394 = vrot.slane %v1393, 4
        %v1395 = vadd.f32 %v1393, %v1394
        %v1396 = vrot.slane %v1395, 2
        %v1397 = vadd.f32 %v1395, %v1396
        %v1398 = vrot.slane %v1397, 1
        %v1399 = vadd.f32 %v1397, %v1398
        %v1400 = vsel %vm1270, %v1364, 0.0
        %v1401 = vsel %vm1270, %v1366, 0.0
        %v1402 = vadd.f32 %v1400, %v1401
        %v1403 = vrot.slane %v1402, 4
        %v1404 = vadd.f32 %v1402, %v1403
        %v1405 = vrot.slane %v1404, 2
        %v1406 = vadd.f32 %v1404, %v1405
        %v1407 = vrot.slane %v1406, 1
        %v1408 = vadd.f32 %v1406, %v1407
        %v1409 = vsel %vm1270, %v1368, 0.0
        %v1410 = vsel %vm1270, %v1370, 0.0
        %v1411 = vadd.f32 %v1409, %v1410
        %v1412 = vrot.slane %v1411, 4
        %v1413 = vadd.f32 %v1411, %v1412
        %v1414 = vrot.slane %v1413, 2
        %v1415 = vadd.f32 %v1413, %v1414
        %v1416 = vrot.slane %v1415, 1
        %v1417 = vadd.f32 %v1415, %v1416
        %v1418 = vsel %vm1270, %v1372, 0.0
        %v1419 = vsel %vm1270, %v1374, 0.0
        %v1420 = vadd.f32 %v1418, %v1419
        %v1421 = vrot.slane %v1420, 4
        %v1422 = vadd.f32 %v1420, %v1421
        %v1423 = vrot.slane %v1422, 2
        %v1424 = vadd.f32 %v1422, %v1423
        %v1425 = vrot.slane %v1424, 1
        %v1426 = vadd.f32 %v1424, %v1425
        %v1427 = vsel %vm1270, %v1376, 0.0
        %v1428 = vsel %vm1270, %v1378, 0.0
        %v1429 = vadd.f32 %v1427, %v1428
        %v1430 = vrot.slane %v1429, 4
        %v1431 = vadd.f32 %v1429, %v1430
        %v1432 = vrot.slane %v1431, 2
        %v1433 = vadd.f32 %v1431, %v1432
        %v1434 = vrot.slane %v1433, 1
        %v1435 = vadd.f32 %v1433, %v1434
        %v1436 = vsel %vm1270, %v1380, 0.0
        %v1437 = vsel %vm1270, %v1382, 0.0
        %v1438 = vadd.f32 %v1436, %v1437
        %v1439 = vrot.slane %v1438, 4
        %v1440 = vadd.f32 %v1438, %v1439
        %v1441 = vrot.slane %v1440, 2
        %v1442 = vadd.f32 %v1440, %v1441
        %v1443 = vrot.slane %v1442, 1
        %v1444 = vadd.f32 %v1442, %v1443
        %v1445 = vsel %vm1270, %v1384, 0.0
        %v1446 = vsel %vm1270, %v1386, 0.0
        %v1447 = vadd.f32 %v1445, %v1446
        %v1448 = vrot.slane %v1447, 4
        %v1449 = vadd.f32 %v1447, %v1448
        %v1450 = vrot.slane %v1449, 2
        %v1451 = vadd.f32 %v1449, %v1450
        %v1452 = vrot.slane %v1451, 1
        %v1453 = vadd.f32 %v1451, %v1452
        %v1454 = vsel %vm1270, %v1388, 0.0
        %v1455 = vsel %vm1270, %v1390, 0.0
        %v1456 = vadd.f32 %v1454, %v1455
        %v1457 = vrot.slane %v1456, 4
        %v1458 = vadd.f32 %v1456, %v1457
        %v1459 = vrot.slane %v1458, 2
        %v1460 = vadd.f32 %v1458, %v1459
        %v1461 = vrot.slane %v1460, 1
        %v1462 = vadd.f32 %v1460, %v1461
        %v1463 = vpack.c.bf16 %v1360, %v1360
        %v1464 = vpack.c.bf16 %v1362, %v1362
        %v1465 = vpack.c.bf16 %v1364, %v1364
        %v1466 = vpack.c.bf16 %v1366, %v1366
        %v1467 = vpack.c.bf16 %v1368, %v1368
        %v1468 = vpack.c.bf16 %v1370, %v1370
        %v1469 = vpack.c.bf16 %v1372, %v1372
        %v1470 = vpack.c.bf16 %v1374, %v1374
        %v1471 = vpack.c.bf16 %v1376, %v1376
        %v1472 = vpack.c.bf16 %v1378, %v1378
        %v1473 = vpack.c.bf16 %v1380, %v1380
        %v1474 = vpack.c.bf16 %v1382, %v1382
        %v1475 = vpack.c.bf16 %v1384, %v1384
        %v1476 = vpack.c.bf16 %v1386, %v1386
        %v1477 = vpack.c.bf16 %v1388, %v1388
        %v1478 = vpack.c.bf16 %v1390, %v1390
        %v1479 = vpack.c.bf16 %v1170, %v1170
        %v1480 = vpack.c.bf16 %v1172, %v1172
        %v1481 = vpack.c.bf16 %v1175, %v1175
        %v1482 = vpack.c.bf16 %v1177, %v1177
        %v1483 = vpack.c.bf16 %v1180, %v1180
        %v1484 = vpack.c.bf16 %v1182, %v1182
        %v1485 = vpack.c.bf16 %v1185, %v1185
        %v1486 = vpack.c.bf16 %v1187, %v1187
        %v1487 = vpack.c.bf16 %v1190, %v1190
        %v1488 = vpack.c.bf16 %v1192, %v1192
        %v1489 = vpack.c.bf16 %v1195, %v1195
        %v1490 = vpack.c.bf16 %v1197, %v1197
        %v1491 = vpack.c.bf16 %v1200, %v1200
        %v1492 = vpack.c.bf16 %v1202, %v1202
        %v1493 = vpack.c.bf16 %v1205, %v1205
        %v1494 = vpack.c.bf16 %v1207, %v1207
        %v1497 = vunpack.c.l.b16 %v1463
        %v1498 = vunpack.c.l.b16 %v1464
        %v1499 = vpack.c.b16 %v1498, %v1497
        %1501 = vxpose.xlu0.c.b16.start [1/8] %v1499, 128
        %1502 = vxpose.xlu0.c.b16.cont [2/8] 0, 128
        %1503 = vxpose.xlu0.c.b16.cont [3/8] 0, 128
        %1504 = vxpose.xlu0.c.b16.cont [4/8] 0, 128
        %1505 = vxpose.xlu0.c.b16.cont [5/8] 0, 128
        %1506 = vxpose.xlu0.c.b16.cont [6/8] 0, 128
        %1507 = vxpose.xlu0.c.b16.cont [7/8] 0, 128
        %1508 = vxpose.xlu0.c.b16.end [8/8] 0, 128
        %v1509 = vpop.trf.xlu0
        %v1510 = vpop.trf.xlu0
        %v1511 = vpop.trf.xlu0
        %v1512 = vpop.trf.xlu0
        %v1513 = vpop.trf.xlu0
        %v1514 = vpop.trf.xlu0
        %v1515 = vpop.trf.xlu0
        %v1516 = vpop.trf.xlu0
        %v1519 = vunpack.c.l.b16 %v1479
        %v1520 = vunpack.c.l.b16 %v1480
        %v1521 = vpack.c.b16 %v1520, %v1519
        %vm1523 = vcmask 130048
        %v1525 = vsel %vm1523, %v1509, 0
        %1527 = vmatpush.bf16.msra.mxu0 0
        %1528 = vmatpush.bf16.msra.mxu0 0
        %1529 = vmatpush.bf16.msra.mxu0 0
        %1530 = vmatpush.bf16.msra.mxu0 0
        %1531 = vmatpush.bf16.msra.mxu0 0
        %1532 = vmatpush.bf16.msra.mxu0 0
        %1533 = vmatpush.bf16.msra.mxu0 0
        %1534 = vmatpush.bf16.msra.mxu0 %v1521
        %1535 = vmatmul.bf16.gmra.mxu0 %v1525
        %v1536 = vpop.f32.mrf.mxu0
        %v1537 = vadd.f32 0.0, %v1536
        %v1538 = vpop.f32.mrf.mxu0
        %1539 = vdwg.mxu0
        %v1542 = vunpack.c.l.b16 %v1465
        %v1543 = vunpack.c.l.b16 %v1466
        %v1544 = vpack.c.b16 %v1543, %v1542
        %1546 = vxpose.xlu0.c.b16.start [1/8] %v1544, 128
        %1547 = vxpose.xlu0.c.b16.cont [2/8] 0, 128
        %1548 = vxpose.xlu0.c.b16.cont [3/8] 0, 128
        %1549 = vxpose.xlu0.c.b16.cont [4/8] 0, 128
        %1550 = vxpose.xlu0.c.b16.cont [5/8] 0, 128
        %1551 = vxpose.xlu0.c.b16.cont [6/8] 0, 128
        %1552 = vxpose.xlu0.c.b16.cont [7/8] 0, 128
        %1553 = vxpose.xlu0.c.b16.end [8/8] 0, 128
        %v1554 = vpop.trf.xlu0
        %v1555 = vpop.trf.xlu0
        %v1556 = vpop.trf.xlu0
        %v1557 = vpop.trf.xlu0
        %v1558 = vpop.trf.xlu0
        %v1559 = vpop.trf.xlu0
        %v1560 = vpop.trf.xlu0
        %v1561 = vpop.trf.xlu0
        %v1564 = vunpack.c.l.b16 %v1481
        %v1565 = vunpack.c.l.b16 %v1482
        %v1566 = vpack.c.b16 %v1565, %v1564
        %v1569 = vsel %vm1523, %v1554, 0
        %1571 = vmatpush.bf16.msra.mxu0 0
        %1572 = vmatpush.bf16.msra.mxu0 0
        %1573 = vmatpush.bf16.msra.mxu0 0
        %1574 = vmatpush.bf16.msra.mxu0 0
        %1575 = vmatpush.bf16.msra.mxu0 0
        %1576 = vmatpush.bf16.msra.mxu0 0
        %1577 = vmatpush.bf16.msra.mxu0 0
        %1578 = vmatpush.bf16.msra.mxu0 %v1566
        %1579 = vmatmul.bf16.gmra.mxu0 %v1569
        %v1580 = vpop.f32.mrf.mxu0
        %v1581 = vadd.f32 0.0, %v1580
        %v1582 = vpop.f32.mrf.mxu0
        %1583 = vdwg.mxu0
        %v1586 = vunpack.c.l.b16 %v1467
        %v1587 = vunpack.c.l.b16 %v1468
        %v1588 = vpack.c.b16 %v1587, %v1586
        %1590 = vxpose.xlu0.c.b16.start [1/8] %v1588, 128
        %1591 = vxpose.xlu0.c.b16.cont [2/8] 0, 128
        %1592 = vxpose.xlu0.c.b16.cont [3/8] 0, 128
        %1593 = vxpose.xlu0.c.b16.cont [4/8] 0, 128
        %1594 = vxpose.xlu0.c.b16.cont [5/8] 0, 128
        %1595 = vxpose.xlu0.c.b16.cont [6/8] 0, 128
        %1596 = vxpose.xlu0.c.b16.cont [7/8] 0, 128
        %1597 = vxpose.xlu0.c.b16.end [8/8] 0, 128
        %v1598 = vpop.trf.xlu0
        %v1599 = vpop.trf.xlu0
        %v1600 = vpop.trf.xlu0
        %v1601 = vpop.trf.xlu0
        %v1602 = vpop.trf.xlu0
        %v1603 = vpop.trf.xlu0
        %v1604 = vpop.trf.xlu0
        %v1605 = vpop.trf.xlu0
        %v1608 = vunpack.c.l.b16 %v1483
        %v1609 = vunpack.c.l.b16 %v1484
        %v1610 = vpack.c.b16 %v1609, %v1608
        %v1613 = vsel %vm1523, %v1598, 0
        %1615 = vmatpush.bf16.msra.mxu0 0
        %1616 = vmatpush.bf16.msra.mxu0 0
        %1617 = vmatpush.bf16.msra.mxu0 0
        %1618 = vmatpush.bf16.msra.mxu0 0
        %1619 = vmatpush.bf16.msra.mxu0 0
        %1620 = vmatpush.bf16.msra.mxu0 0
        %1621 = vmatpush.bf16.msra.mxu0 0
        %1622 = vmatpush.bf16.msra.mxu0 %v1610
        %1623 = vmatmul.bf16.gmra.mxu0 %v1613
        %v1624 = vpop.f32.mrf.mxu0
        %v1625 = vadd.f32 0.0, %v1624
        %v1626 = vpop.f32.mrf.mxu0
        %1627 = vdwg.mxu0
        %v1630 = vunpack.c.l.b16 %v1469
        %v1631 = vunpack.c.l.b16 %v1470
        %v1632 = vpack.c.b16 %v1631, %v1630
        %1634 = vxpose.xlu0.c.b16.start [1/8] %v1632, 128
        %1635 = vxpose.xlu0.c.b16.cont [2/8] 0, 128
        %1636 = vxpose.xlu0.c.b16.cont [3/8] 0, 128
        %1637 = vxpose.xlu0.c.b16.cont [4/8] 0, 128
        %1638 = vxpose.xlu0.c.b16.cont [5/8] 0, 128
        %1639 = vxpose.xlu0.c.b16.cont [6/8] 0, 128
        %1640 = vxpose.xlu0.c.b16.cont [7/8] 0, 128
        %1641 = vxpose.xlu0.c.b16.end [8/8] 0, 128
        %v1642 = vpop.trf.xlu0
        %v1643 = vpop.trf.xlu0
        %v1644 = vpop.trf.xlu0
        %v1645 = vpop.trf.xlu0
        %v1646 = vpop.trf.xlu0
        %v1647 = vpop.trf.xlu0
        %v1648 = vpop.trf.xlu0
        %v1649 = vpop.trf.xlu0
        %v1652 = vunpack.c.l.b16 %v1485
        %v1653 = vunpack.c.l.b16 %v1486
        %v1654 = vpack.c.b16 %v1653, %v1652
        %v1657 = vsel %vm1523, %v1642, 0
        %1659 = vmatpush.bf16.msra.mxu0 0
        %1660 = vmatpush.bf16.msra.mxu0 0
        %1661 = vmatpush.bf16.msra.mxu0 0
        %1662 = vmatpush.bf16.msra.mxu0 0
        %1663 = vmatpush.bf16.msra.mxu0 0
        %1664 = vmatpush.bf16.msra.mxu0 0
        %1665 = vmatpush.bf16.msra.mxu0 0
        %1666 = vmatpush.bf16.msra.mxu0 %v1654
        %1667 = vmatmul.bf16.gmra.mxu0 %v1657
        %v1668 = vpop.f32.mrf.mxu0
        %v1669 = vadd.f32 0.0, %v1668
        %v1670 = vpop.f32.mrf.mxu0
        %1671 = vdwg.mxu0
        %v1674 = vunpack.c.l.b16 %v1471
        %v1675 = vunpack.c.l.b16 %v1472
        %v1676 = vpack.c.b16 %v1675, %v1674
        %1678 = vxpose.xlu0.c.b16.start [1/8] %v1676, 128
        %1679 = vxpose.xlu0.c.b16.cont [2/8] 0, 128
        %1680 = vxpose.xlu0.c.b16.cont [3/8] 0, 128
        %1681 = vxpose.xlu0.c.b16.cont [4/8] 0, 128
        %1682 = vxpose.xlu0.c.b16.cont [5/8] 0, 128
        %1683 = vxpose.xlu0.c.b16.cont [6/8] 0, 128
        %1684 = vxpose.xlu0.c.b16.cont [7/8] 0, 128
        %1685 = vxpose.xlu0.c.b16.end [8/8] 0, 128
        %v1686 = vpop.trf.xlu0
        %v1687 = vpop.trf.xlu0
        %v1688 = vpop.trf.xlu0
        %v1689 = vpop.trf.xlu0
        %v1690 = vpop.trf.xlu0
        %v1691 = vpop.trf.xlu0
        %v1692 = vpop.trf.xlu0
        %v1693 = vpop.trf.xlu0
        %v1696 = vunpack.c.l.b16 %v1487
        %v1697 = vunpack.c.l.b16 %v1488
        %v1698 = vpack.c.b16 %v1697, %v1696
        %v1701 = vsel %vm1523, %v1686, 0
        %1703 = vmatpush.bf16.msra.mxu0 0
        %1704 = vmatpush.bf16.msra.mxu0 0
        %1705 = vmatpush.bf16.msra.mxu0 0
        %1706 = vmatpush.bf16.msra.mxu0 0
        %1707 = vmatpush.bf16.msra.mxu0 0
        %1708 = vmatpush.bf16.msra.mxu0 0
        %1709 = vmatpush.bf16.msra.mxu0 0
        %1710 = vmatpush.bf16.msra.mxu0 %v1698
        %1711 = vmatmul.bf16.gmra.mxu0 %v1701
        %v1712 = vpop.f32.mrf.mxu0
        %v1713 = vadd.f32 0.0, %v1712
        %v1714 = vpop.f32.mrf.mxu0
        %1715 = vdwg.mxu0
        %v1718 = vunpack.c.l.b16 %v1473
        %v1719 = vunpack.c.l.b16 %v1474
        %v1720 = vpack.c.b16 %v1719, %v1718
        %1722 = vxpose.xlu0.c.b16.start [1/8] %v1720, 128
        %1723 = vxpose.xlu0.c.b16.cont [2/8] 0, 128
        %1724 = vxpose.xlu0.c.b16.cont [3/8] 0, 128
        %1725 = vxpose.xlu0.c.b16.cont [4/8] 0, 128
        %1726 = vxpose.xlu0.c.b16.cont [5/8] 0, 128
        %1727 = vxpose.xlu0.c.b16.cont [6/8] 0, 128
        %1728 = vxpose.xlu0.c.b16.cont [7/8] 0, 128
        %1729 = vxpose.xlu0.c.b16.end [8/8] 0, 128
        %v1730 = vpop.trf.xlu0
        %v1731 = vpop.trf.xlu0
        %v1732 = vpop.trf.xlu0
        %v1733 = vpop.trf.xlu0
        %v1734 = vpop.trf.xlu0
        %v1735 = vpop.trf.xlu0
        %v1736 = vpop.trf.xlu0
        %v1737 = vpop.trf.xlu0
        %v1740 = vunpack.c.l.b16 %v1489
        %v1741 = vunpack.c.l.b16 %v1490
        %v1742 = vpack.c.b16 %v1741, %v1740
        %v1745 = vsel %vm1523, %v1730, 0
        %1747 = vmatpush.bf16.msra.mxu0 0
        %1748 = vmatpush.bf16.msra.mxu0 0
        %1749 = vmatpush.bf16.msra.mxu0 0
        %1750 = vmatpush.bf16.msra.mxu0 0
        %1751 = vmatpush.bf16.msra.mxu0 0
        %1752 = vmatpush.bf16.msra.mxu0 0
        %1753 = vmatpush.bf16.msra.mxu0 0
        %1754 = vmatpush.bf16.msra.mxu0 %v1742
        %1755 = vmatmul.bf16.gmra.mxu0 %v1745
        %v1756 = vpop.f32.mrf.mxu0
        %v1757 = vadd.f32 0.0, %v1756
        %v1758 = vpop.f32.mrf.mxu0
        %1759 = vdwg.mxu0
        %v1762 = vunpack.c.l.b16 %v1475
        %v1763 = vunpack.c.l.b16 %v1476
        %v1764 = vpack.c.b16 %v1763, %v1762
        %1766 = vxpose.xlu0.c.b16.start [1/8] %v1764, 128
        %1767 = vxpose.xlu0.c.b16.cont [2/8] 0, 128
        %1768 = vxpose.xlu0.c.b16.cont [3/8] 0, 128
        %1769 = vxpose.xlu0.c.b16.cont [4/8] 0, 128
        %1770 = vxpose.xlu0.c.b16.cont [5/8] 0, 128
        %1771 = vxpose.xlu0.c.b16.cont [6/8] 0, 128
        %1772 = vxpose.xlu0.c.b16.cont [7/8] 0, 128
        %1773 = vxpose.xlu0.c.b16.end [8/8] 0, 128
        %v1774 = vpop.trf.xlu0
        %v1775 = vpop.trf.xlu0
        %v1776 = vpop.trf.xlu0
        %v1777 = vpop.trf.xlu0
        %v1778 = vpop.trf.xlu0
        %v1779 = vpop.trf.xlu0
        %v1780 = vpop.trf.xlu0
        %v1781 = vpop.trf.xlu0
        %v1784 = vunpack.c.l.b16 %v1491
        %v1785 = vunpack.c.l.b16 %v1492
        %v1786 = vpack.c.b16 %v1785, %v1784
        %v1789 = vsel %vm1523, %v1774, 0
        %1791 = vmatpush.bf16.msra.mxu0 0
        %1792 = vmatpush.bf16.msra.mxu0 0
        %1793 = vmatpush.bf16.msra.mxu0 0
        %1794 = vmatpush.bf16.msra.mxu0 0
        %1795 = vmatpush.bf16.msra.mxu0 0
        %1796 = vmatpush.bf16.msra.mxu0 0
        %1797 = vmatpush.bf16.msra.mxu0 0
        %1798 = vmatpush.bf16.msra.mxu0 %v1786
        %1799 = vmatmul.bf16.gmra.mxu0 %v1789
        %v1800 = vpop.f32.mrf.mxu0
        %v1801 = vadd.f32 0.0, %v1800
        %v1802 = vpop.f32.mrf.mxu0
        %1803 = vdwg.mxu0
        %v1806 = vunpack.c.l.b16 %v1477
        %v1807 = vunpack.c.l.b16 %v1478
        %v1808 = vpack.c.b16 %v1807, %v1806
        %1810 = vxpose.xlu0.c.b16.start [1/8] %v1808, 128
        %1811 = vxpose.xlu0.c.b16.cont [2/8] 0, 128
        %1812 = vxpose.xlu0.c.b16.cont [3/8] 0, 128
        %1813 = vxpose.xlu0.c.b16.cont [4/8] 0, 128
        %1814 = vxpose.xlu0.c.b16.cont [5/8] 0, 128
        %1815 = vxpose.xlu0.c.b16.cont [6/8] 0, 128
        %1816 = vxpose.xlu0.c.b16.cont [7/8] 0, 128
        %1817 = vxpose.xlu0.c.b16.end [8/8] 0, 128
        %v1818 = vpop.trf.xlu0
        %v1819 = vpop.trf.xlu0
        %v1820 = vpop.trf.xlu0
        %v1821 = vpop.trf.xlu0
        %v1822 = vpop.trf.xlu0
        %v1823 = vpop.trf.xlu0
        %v1824 = vpop.trf.xlu0
        %v1825 = vpop.trf.xlu0
        %v1828 = vunpack.c.l.b16 %v1493
        %v1829 = vunpack.c.l.b16 %v1494
        %v1830 = vpack.c.b16 %v1829, %v1828
        %v1833 = vsel %vm1523, %v1818, 0
        %1835 = vmatpush.bf16.msra.mxu0 0
        %1836 = vmatpush.bf16.msra.mxu0 0
        %1837 = vmatpush.bf16.msra.mxu0 0
        %1838 = vmatpush.bf16.msra.mxu0 0
        %1839 = vmatpush.bf16.msra.mxu0 0
        %1840 = vmatpush.bf16.msra.mxu0 0
        %1841 = vmatpush.bf16.msra.mxu0 0
        %1842 = vmatpush.bf16.msra.mxu0 %v1830
        %1843 = vmatmul.bf16.gmra.mxu0 %v1833
        %v1844 = vpop.f32.mrf.mxu0
        %v1845 = vadd.f32 0.0, %v1844
        %v1846 = vpop.f32.mrf.mxu0
        %1847 = vdwg.mxu0
        %v1848 = vperm.slane %v568, 0
        %v1849 = vmax.f32 %v1279, %v1848
        %v1850 = vmax.f32 %v1288, %v1848
        %v1851 = vmax.f32 %v1297, %v1848
        %v1852 = vmax.f32 %v1306, %v1848
        %v1853 = vmax.f32 %v1315, %v1848
        %v1854 = vmax.f32 %v1324, %v1848
        %v1855 = vmax.f32 %v1333, %v1848
        %v1856 = vmax.f32 %v1342, %v1848
        %v1857 = vsub.f32 %v1279, %v1849
        %v1858 = vsub.f32 %v1288, %v1850
        %v1859 = vsub.f32 %v1297, %v1851
        %v1860 = vsub.f32 %v1306, %v1852
        %v1861 = vsub.f32 %v1315, %v1853
        %v1862 = vsub.f32 %v1324, %v1854
        %v1863 = vsub.f32 %v1333, %v1855
        %v1864 = vsub.f32 %v1342, %v1856
        %v1865 = vmul.f32 %v1857, 1.442695
        %v1866 = vpow.pop %v1865
        %v1867 = vmul.f32 %v1858, 1.442695
        %v1868 = vpow.pop %v1867
        %v1869 = vmul.f32 %v1859, 1.442695
        %v1870 = vpow.pop %v1869
        %v1871 = vmul.f32 %v1860, 1.442695
        %v1872 = vpow.pop %v1871
        %v1873 = vmul.f32 %v1861, 1.442695
        %v1874 = vpow.pop %v1873
        %v1875 = vmul.f32 %v1862, 1.442695
        %v1876 = vpow.pop %v1875
        %v1877 = vmul.f32 %v1863, 1.442695
        %v1878 = vpow.pop %v1877
        %v1879 = vmul.f32 %v1864, 1.442695
        %v1880 = vpow.pop %v1879
        %v1889 = vrot.slane %v1850, 7
        %vm1890 = vcmask 1041409
        %v1891 = vsel %vm1890, %v1889, %v1849
        %v1892 = vrot.slane %v1851, 6
        %vm1893 = vcmask 1042434
        %v1894 = vsel %vm1893, %v1892, %v1891
        %v1895 = vrot.slane %v1852, 5
        %vm1896 = vcmask 1043459
        %v1897 = vsel %vm1896, %v1895, %v1894
        %v1898 = vrot.slane %v1853, 4
        %vm1899 = vcmask 1044484
        %v1900 = vsel %vm1899, %v1898, %v1897
        %v1901 = vrot.slane %v1854, 3
        %vm1902 = vcmask 1045509
        %v1903 = vsel %vm1902, %v1901, %v1900
        %v1904 = vrot.slane %v1855, 2
        %vm1905 = vcmask 1046534
        %v1906 = vsel %vm1905, %v1904, %v1903
        %v1907 = vrot.slane %v1856, 1
        %vm1908 = vcmask 1047559
        %v1909 = vsel %vm1908, %v1907, %v1906
        %v1911 = vsub.f32 %v1848, %v1909
        %v1912 = vmul.f32 %v1911, 1.442695
        %v1913 = vpow.pop %v1912
        %v1914 = vmul.f32 %v1866, %v1399
        %v1915 = vmul.f32 %v1868, %v1408
        %v1916 = vmul.f32 %v1870, %v1417
        %v1917 = vmul.f32 %v1872, %v1426
        %v1918 = vmul.f32 %v1874, %v1435
        %v1919 = vmul.f32 %v1876, %v1444
        %v1920 = vmul.f32 %v1878, %v1453
        %v1921 = vmul.f32 %v1880, %v1462
        %v1922 = vperm.slane %v568, 1
        %v1923 = vmul.f32 %v1913, %v1922
        %v1925 = vrot.slane %v1923, 1
        %v1926 = vrot.slane %v1923, 2
        %v1927 = vrot.slane %v1923, 3
        %v1928 = vrot.slane %v1923, 4
        %v1929 = vrot.slane %v1923, 5
        %v1930 = vrot.slane %v1923, 6
        %v1931 = vrot.slane %v1923, 7
        %v1940 = vadd.f32 %v1914, %v1923
        %v1941 = vadd.f32 %v1915, %v1925
        %v1942 = vadd.f32 %v1916, %v1926
        %v1943 = vadd.f32 %v1917, %v1927
        %v1944 = vadd.f32 %v1918, %v1928
        %v1945 = vadd.f32 %v1919, %v1929
        %v1946 = vadd.f32 %v1920, %v1930
        %v1947 = vadd.f32 %v1921, %v1931
        %v1948 = vrcp.pop %v1940
        %v1949 = vrcp.pop %v1941
        %v1950 = vrcp.pop %v1942
        %v1951 = vrcp.pop %v1943
        %v1952 = vrcp.pop %v1944
        %v1953 = vrcp.pop %v1945
        %v1954 = vrcp.pop %v1946
        %v1955 = vrcp.pop %v1947
        %v1956 = vmul.f32 %v1866, %v1948
        %v1957 = vmul.f32 %v1868, %v1949
        %v1958 = vmul.f32 %v1870, %v1950
        %v1959 = vmul.f32 %v1872, %v1951
        %v1960 = vmul.f32 %v1874, %v1952
        %v1961 = vmul.f32 %v1876, %v1953
        %v1962 = vmul.f32 %v1878, %v1954
        %v1963 = vmul.f32 %v1880, %v1955
        %v1964 = vperm.slane %v1956, 0
        %v1965 = vlaneseq
        %v1966 = vshrl.u32 %v1965, 7
        %1968 = vset.pattern.permute.xlu0 %v1966
        %1969 = vperm.xlu0 %1968, %v1964
        %v1970 = vpop.permute.xlu0 %1969
        %v1971 = vperm.slane %v1957, 0
        %v1972 = vlaneseq
        %v1973 = vshrl.u32 %v1972, 7
        %1975 = vset.pattern.permute.xlu0 %v1973
        %1976 = vperm.xlu0 %1975, %v1971
        %v1977 = vpop.permute.xlu0 %1976
        %v1978 = vperm.slane %v1958, 0
        %v1979 = vlaneseq
        %v1980 = vshrl.u32 %v1979, 7
        %1982 = vset.pattern.permute.xlu0 %v1980
        %1983 = vperm.xlu0 %1982, %v1978
        %v1984 = vpop.permute.xlu0 %1983
        %v1985 = vperm.slane %v1959, 0
        %v1986 = vlaneseq
        %v1987 = vshrl.u32 %v1986, 7
        %1989 = vset.pattern.permute.xlu0 %v1987
        %1990 = vperm.xlu0 %1989, %v1985
        %v1991 = vpop.permute.xlu0 %1990
        %v1992 = vperm.slane %v1960, 0
        %v1993 = vlaneseq
        %v1994 = vshrl.u32 %v1993, 7
        %1996 = vset.pattern.permute.xlu0 %v1994
        %1997 = vperm.xlu0 %1996, %v1992
        %v1998 = vpop.permute.xlu0 %1997
        %v1999 = vperm.slane %v1961, 0
        %v2000 = vlaneseq
        %v2001 = vshrl.u32 %v2000, 7
        %2003 = vset.pattern.permute.xlu0 %v2001
        %2004 = vperm.xlu0 %2003, %v1999
        %v2005 = vpop.permute.xlu0 %2004
        %v2006 = vperm.slane %v1962, 0
        %v2007 = vlaneseq
        %v2008 = vshrl.u32 %v2007, 7
        %2010 = vset.pattern.permute.xlu0 %v2008
        %2011 = vperm.xlu0 %2010, %v2006
        %v2012 = vpop.permute.xlu0 %2011
        %v2013 = vperm.slane %v1963, 0
        %v2014 = vlaneseq
        %v2015 = vshrl.u32 %v2014, 7
        %2017 = vset.pattern.permute.xlu0 %v2015
        %2018 = vperm.xlu0 %2017, %v2013
        %v2019 = vpop.permute.xlu0 %2018
        %v2028 = vrot.slane %v1949, 7
        %v2029 = vsel %vm1890, %v2028, %v1948
        %v2030 = vrot.slane %v1950, 6
        %v2031 = vsel %vm1893, %v2030, %v2029
        %v2032 = vrot.slane %v1951, 5
        %v2033 = vsel %vm1896, %v2032, %v2031
        %v2034 = vrot.slane %v1952, 4
        %v2035 = vsel %vm1899, %v2034, %v2033
        %v2036 = vrot.slane %v1953, 3
        %v2037 = vsel %vm1902, %v2036, %v2035
        %v2038 = vrot.slane %v1954, 2
        %v2039 = vsel %vm1905, %v2038, %v2037
        %v2040 = vrot.slane %v1955, 1
        %v2041 = vsel %vm1908, %v2040, %v2039
        %v2043 = vmul.f32 %v1913, %v2041
        %v2044 = vperm.slane %v2043, 0
        %v2045 = vlaneseq
        %v2046 = vshrl.u32 %v2045, 7
        %2048 = vset.pattern.permute.xlu0 %v2046
        %2049 = vperm.xlu0 %2048, %v2044
        %v2050 = vpop.permute.xlu0 %2049
        %v2051 = vperm.slane %v2043, 1
        %v2052 = vlaneseq
        %v2053 = vshrl.u32 %v2052, 7
        %2055 = vset.pattern.permute.xlu0 %v2053
        %2056 = vperm.xlu0 %2055, %v2051
        %v2057 = vpop.permute.xlu0 %2056
        %v2058 = vperm.slane %v2043, 2
        %v2059 = vlaneseq
        %v2060 = vshrl.u32 %v2059, 7
        %2062 = vset.pattern.permute.xlu0 %v2060
        %2063 = vperm.xlu0 %2062, %v2058
        %v2064 = vpop.permute.xlu0 %2063
        %v2065 = vperm.slane %v2043, 3
        %v2066 = vlaneseq
        %v2067 = vshrl.u32 %v2066, 7
        %2069 = vset.pattern.permute.xlu0 %v2067
        %2070 = vperm.xlu0 %2069, %v2065
        %v2071 = vpop.permute.xlu0 %2070
        %v2072 = vperm.slane %v2043, 4
        %v2073 = vlaneseq
        %v2074 = vshrl.u32 %v2073, 7
        %2076 = vset.pattern.permute.xlu0 %v2074
        %2077 = vperm.xlu0 %2076, %v2072
        %v2078 = vpop.permute.xlu0 %2077
        %v2079 = vperm.slane %v2043, 5
        %v2080 = vlaneseq
        %v2081 = vshrl.u32 %v2080, 7
        %2083 = vset.pattern.permute.xlu0 %v2081
        %2084 = vperm.xlu0 %2083, %v2079
        %v2085 = vpop.permute.xlu0 %2084
        %v2086 = vperm.slane %v2043, 6
        %v2087 = vlaneseq
        %v2088 = vshrl.u32 %v2087, 7
        %2090 = vset.pattern.permute.xlu0 %v2088
        %2091 = vperm.xlu0 %2090, %v2086
        %v2092 = vpop.permute.xlu0 %2091
        %v2093 = vperm.slane %v2043, 7
        %v2094 = vlaneseq
        %v2095 = vshrl.u32 %v2094, 7
        %2097 = vset.pattern.permute.xlu0 %v2095
        %2098 = vperm.xlu0 %2097, %v2093
        %v2099 = vpop.permute.xlu0 %2098
        %v2100 = vmul.f32 %v1537, %v1970
        %v2101 = vmul.f32 %v1581, %v1977
        %v2102 = vmul.f32 %v1625, %v1984
        %v2103 = vmul.f32 %v1669, %v1991
        %v2104 = vmul.f32 %v1713, %v1998
        %v2105 = vmul.f32 %v1757, %v2005
        %v2106 = vmul.f32 %v1801, %v2012
        %v2107 = vmul.f32 %v1845, %v2019
        %v2108 = vmul.f32 %v570, %v2050
        %v2109 = vmul.f32 %v570, %v2057
        %v2110 = vmul.f32 %v570, %v2064
        %v2111 = vmul.f32 %v570, %v2071
        %v2112 = vmul.f32 %v570, %v2078
        %v2113 = vmul.f32 %v570, %v2085
        %v2114 = vmul.f32 %v570, %v2092
        %v2115 = vmul.f32 %v570, %v2099
        %v2116 = vadd.f32 %v2100, %v2108
        %v2117 = vadd.f32 %v2101, %v2109
        %v2118 = vadd.f32 %v2102, %v2110
        %v2119 = vadd.f32 %v2103, %v2111
        %v2120 = vadd.f32 %v2104, %v2112
        %v2121 = vadd.f32 %v2105, %v2113
        %v2122 = vadd.f32 %v2106, %v2114
        %v2123 = vadd.f32 %v2107, %v2115
        %v2124 = vpack.c.bf16 %v2117, %v2116
        %v2125 = vpack.c.bf16 %v2119, %v2118
        %v2126 = vpack.c.bf16 %v2121, %v2120
        %v2127 = vpack.c.bf16 %v2123, %v2122
        %v2132 = vunpack.c.l.b16 %v579
        %v2133 = vunpack.c.l.b16 %v580
        %v2134 = vunpack.c.l.b16 %v581
        %v2135 = vunpack.c.l.b16 %v582
        %v2136 = vpack.c.b16 %v2133, %v2132
        %v2137 = vpack.c.b16 %v2135, %v2134
        %v2141 = vsel %vm674, %v2124, 0
        %v2144 = vsel %vm674, %v2125, 0
        %v2147 = vsel %vm674, %v2126, 0
        %v2150 = vsel %vm674, %v2127, 0
        %2152 = vmatpush.bf16.msra.mxu0 0
        %2153 = vmatpush.bf16.msra.mxu0 0
        %2154 = vmatpush.bf16.msra.mxu0 0
        %2155 = vmatpush.bf16.msra.mxu0 0
        %2156 = vmatpush.bf16.msra.mxu0 0
        %2157 = vmatpush.bf16.msra.mxu0 0
        %2158 = vmatpush.bf16.msra.mxu0 %v2137
        %2159 = vmatpush.bf16.msra.mxu0 %v2136
        %2160 = vmatmul.bf16.gmra.mxu0 %v2141
        %v2161 = vpop.f32.mrf.mxu0
        %v2162 = vadd.f32 0.0, %v2161
        %v2163 = vpop.f32.mrf.mxu0
        %v2164 = vadd.f32 0.0, %v2163
        %2165 = vmatmul.bf16.gmra.mxu0 %v2144
        %v2166 = vpop.f32.mrf.mxu0
        %v2167 = vadd.f32 0.0, %v2166
        %v2168 = vpop.f32.mrf.mxu0
        %v2169 = vadd.f32 0.0, %v2168
        %2170 = vmatmul.bf16.gmra.mxu0 %v2147
        %v2171 = vpop.f32.mrf.mxu0
        %v2172 = vadd.f32 0.0, %v2171
        %v2173 = vpop.f32.mrf.mxu0
        %v2174 = vadd.f32 0.0, %v2173
        %2175 = vmatmul.bf16.gmra.mxu0 %v2150
        %v2176 = vpop.f32.mrf.mxu0
        %v2177 = vadd.f32 0.0, %v2176
        %v2178 = vpop.f32.mrf.mxu0
        %v2179 = vadd.f32 0.0, %v2178
        %2180 = vdwg.mxu0
        %v2181 = vadd.f32 %v569, %v2162
        %v2182 = vadd.f32 %v569, %v2164
        %v2183 = vadd.f32 %v569, %v2167
        %v2184 = vadd.f32 %v569, %v2169
        %v2185 = vadd.f32 %v569, %v2172
        %v2186 = vadd.f32 %v569, %v2174
        %v2187 = vadd.f32 %v569, %v2177
        %v2188 = vadd.f32 %v569, %v2179
        %v2189 = vsel %vm674, %v2181, 0.0
        %2190 = vadd.xlane.f32.xlu0 %v2189
        %v2191 = vpop.xlane.xlu0 %2190
        %v2192 = vsel %vm674, %v2182, 0.0
        %2193 = vadd.xlane.f32.xlu0 %v2192
        %v2194 = vpop.xlane.xlu0 %2193
        %v2195 = vsel %vm674, %v2183, 0.0
        %2196 = vadd.xlane.f32.xlu0 %v2195
        %v2197 = vpop.xlane.xlu0 %2196
        %v2198 = vsel %vm674, %v2184, 0.0
        %2199 = vadd.xlane.f32.xlu0 %v2198
        %v2200 = vpop.xlane.xlu0 %2199
        %v2201 = vsel %vm674, %v2185, 0.0
        %2202 = vadd.xlane.f32.xlu0 %v2201
        %v2203 = vpop.xlane.xlu0 %2202
        %v2204 = vsel %vm674, %v2186, 0.0
        %2205 = vadd.xlane.f32.xlu0 %v2204
        %v2206 = vpop.xlane.xlu0 %2205
        %v2207 = vsel %vm674, %v2187, 0.0
        %2208 = vadd.xlane.f32.xlu0 %v2207
        %v2209 = vpop.xlane.xlu0 %2208
        %v2210 = vsel %vm674, %v2188, 0.0
        %2211 = vadd.xlane.f32.xlu0 %v2210
        %v2212 = vpop.xlane.xlu0 %2211
        %v2213 = vmul.f32 %v2191, %v729
        %v2214 = vmul.f32 %v2194, %v729
        %v2215 = vmul.f32 %v2197, %v729
        %v2216 = vmul.f32 %v2200, %v729
        %v2217 = vmul.f32 %v2203, %v729
        %v2218 = vmul.f32 %v2206, %v729
        %v2219 = vmul.f32 %v2209, %v729
        %v2220 = vmul.f32 %v2212, %v729
        %v2221 = vmul.f32 %v2181, %v2181
        %v2222 = vmul.f32 %v2182, %v2182
        %v2223 = vmul.f32 %v2183, %v2183
        %v2224 = vmul.f32 %v2184, %v2184
        %v2225 = vmul.f32 %v2185, %v2185
        %v2226 = vmul.f32 %v2186, %v2186
        %v2227 = vmul.f32 %v2187, %v2187
        %v2228 = vmul.f32 %v2188, %v2188
        %v2229 = vsel %vm674, %v2221, 0.0
        %2230 = vadd.xlane.f32.xlu0 %v2229
        %v2231 = vpop.xlane.xlu0 %2230
        %v2232 = vsel %vm674, %v2222, 0.0
        %2233 = vadd.xlane.f32.xlu0 %v2232
        %v2234 = vpop.xlane.xlu0 %2233
        %v2235 = vsel %vm674, %v2223, 0.0
        %2236 = vadd.xlane.f32.xlu0 %v2235
        %v2237 = vpop.xlane.xlu0 %2236
        %v2238 = vsel %vm674, %v2224, 0.0
        %2239 = vadd.xlane.f32.xlu0 %v2238
        %v2240 = vpop.xlane.xlu0 %2239
        %v2241 = vsel %vm674, %v2225, 0.0
        %2242 = vadd.xlane.f32.xlu0 %v2241
        %v2243 = vpop.xlane.xlu0 %2242
        %v2244 = vsel %vm674, %v2226, 0.0
        %2245 = vadd.xlane.f32.xlu0 %v2244
        %v2246 = vpop.xlane.xlu0 %2245
        %v2247 = vsel %vm674, %v2227, 0.0
        %2248 = vadd.xlane.f32.xlu0 %v2247
        %v2249 = vpop.xlane.xlu0 %2248
        %v2250 = vsel %vm674, %v2228, 0.0
        %2251 = vadd.xlane.f32.xlu0 %v2250
        %v2252 = vpop.xlane.xlu0 %2251
        %v2253 = vmul.f32 %v2231, %v729
        %v2254 = vmul.f32 %v2234, %v729
        %v2255 = vmul.f32 %v2237, %v729
        %v2256 = vmul.f32 %v2240, %v729
        %v2257 = vmul.f32 %v2243, %v729
        %v2258 = vmul.f32 %v2246, %v729
        %v2259 = vmul.f32 %v2249, %v729
        %v2260 = vmul.f32 %v2252, %v729
        %v2261 = vmul.f32 %v2213, %v2213
        %v2262 = vmul.f32 %v2214, %v2214
        %v2263 = vmul.f32 %v2215, %v2215
        %v2264 = vmul.f32 %v2216, %v2216
        %v2265 = vmul.f32 %v2217, %v2217
        %v2266 = vmul.f32 %v2218, %v2218
        %v2267 = vmul.f32 %v2219, %v2219
        %v2268 = vmul.f32 %v2220, %v2220
        %v2269 = vsub.f32 %v2253, %v2261
        %v2270 = vsub.f32 %v2254, %v2262
        %v2271 = vsub.f32 %v2255, %v2263
        %v2272 = vsub.f32 %v2256, %v2264
        %v2273 = vsub.f32 %v2257, %v2265
        %v2274 = vsub.f32 %v2258, %v2266
        %v2275 = vsub.f32 %v2259, %v2267
        %v2276 = vsub.f32 %v2260, %v2268
        %v2277 = vmax.f32 %v2269, 0.0
        %v2278 = vmax.f32 %v2270, 0.0
        %v2279 = vmax.f32 %v2271, 0.0
        %v2280 = vmax.f32 %v2272, 0.0
        %v2281 = vmax.f32 %v2273, 0.0
        %v2282 = vmax.f32 %v2274, 0.0
        %v2283 = vmax.f32 %v2275, 0.0
        %v2284 = vmax.f32 %v2276, 0.0
        %v2285 = vsub.f32 %v2181, %v2213
        %v2286 = vsub.f32 %v2182, %v2214
        %v2287 = vsub.f32 %v2183, %v2215
        %v2288 = vsub.f32 %v2184, %v2216
        %v2289 = vsub.f32 %v2185, %v2217
        %v2290 = vsub.f32 %v2186, %v2218
        %v2291 = vsub.f32 %v2187, %v2219
        %v2292 = vsub.f32 %v2188, %v2220
        %v2293 = vadd.f32 %v2277, 1e-05
        %v2294 = vadd.f32 %v2278, 1e-05
        %v2295 = vadd.f32 %v2279, 1e-05
        %v2296 = vadd.f32 %v2280, 1e-05
        %v2297 = vadd.f32 %v2281, 1e-05
        %v2298 = vadd.f32 %v2282, 1e-05
        %v2299 = vadd.f32 %v2283, 1e-05
        %v2300 = vadd.f32 %v2284, 1e-05
        %v2301 = vrsqrt.pop %v2293
        %v2302 = vmul.f32 %v2301, %v2293
        %v2303 = vmul.f32 %v2302, %v2301
        %v2304 = vmul.f32 0.5, %v2303
        %v2305 = vsub.f32 1.5, %v2304
        %v2306 = vmul.f32 %v2301, %v2305
        %vm2307 = vweird.f32 %v2293
        %vm2308 = vweird.f32 %v2301
        %vm2309 = vmor %vm2307, %vm2308
        %v2310 = vsel %vm2309, %v2301, %v2306
        %v2311 = vrsqrt.pop %v2294
        %v2312 = vmul.f32 %v2311, %v2294
        %v2313 = vmul.f32 %v2312, %v2311
        %v2314 = vmul.f32 0.5, %v2313
        %v2315 = vsub.f32 1.5, %v2314
        %v2316 = vmul.f32 %v2311, %v2315
        %vm2317 = vweird.f32 %v2294
        %vm2318 = vweird.f32 %v2311
        %vm2319 = vmor %vm2317, %vm2318
        %v2320 = vsel %vm2319, %v2311, %v2316
        %v2321 = vrsqrt.pop %v2295
        %v2322 = vmul.f32 %v2321, %v2295
        %v2323 = vmul.f32 %v2322, %v2321
        %v2324 = vmul.f32 0.5, %v2323
        %v2325 = vsub.f32 1.5, %v2324
        %v2326 = vmul.f32 %v2321, %v2325
        %vm2327 = vweird.f32 %v2295
        %vm2328 = vweird.f32 %v2321
        %vm2329 = vmor %vm2327, %vm2328
        %v2330 = vsel %vm2329, %v2321, %v2326
        %v2331 = vrsqrt.pop %v2296
        %v2332 = vmul.f32 %v2331, %v2296
        %v2333 = vmul.f32 %v2332, %v2331
        %v2334 = vmul.f32 0.5, %v2333
        %v2335 = vsub.f32 1.5, %v2334
        %v2336 = vmul.f32 %v2331, %v2335
        %vm2337 = vweird.f32 %v2296
        %vm2338 = vweird.f32 %v2331
        %vm2339 = vmor %vm2337, %vm2338
        %v2340 = vsel %vm2339, %v2331, %v2336
        %v2341 = vrsqrt.pop %v2297
        %v2342 = vmul.f32 %v2341, %v2297
        %v2343 = vmul.f32 %v2342, %v2341
        %v2344 = vmul.f32 0.5, %v2343
        %v2345 = vsub.f32 1.5, %v2344
        %v2346 = vmul.f32 %v2341, %v2345
        %vm2347 = vweird.f32 %v2297
        %vm2348 = vweird.f32 %v2341
        %vm2349 = vmor %vm2347, %vm2348
        %v2350 = vsel %vm2349, %v2341, %v2346
        %v2351 = vrsqrt.pop %v2298
        %v2352 = vmul.f32 %v2351, %v2298
        %v2353 = vmul.f32 %v2352, %v2351
        %v2354 = vmul.f32 0.5, %v2353
        %v2355 = vsub.f32 1.5, %v2354
        %v2356 = vmul.f32 %v2351, %v2355
        %vm2357 = vweird.f32 %v2298
        %vm2358 = vweird.f32 %v2351
        %vm2359 = vmor %vm2357, %vm2358
        %v2360 = vsel %vm2359, %v2351, %v2356
        %v2361 = vrsqrt.pop %v2299
        %v2362 = vmul.f32 %v2361, %v2299
        %v2363 = vmul.f32 %v2362, %v2361
        %v2364 = vmul.f32 0.5, %v2363
        %v2365 = vsub.f32 1.5, %v2364
        %v2366 = vmul.f32 %v2361, %v2365
        %vm2367 = vweird.f32 %v2299
        %vm2368 = vweird.f32 %v2361
        %vm2369 = vmor %vm2367, %vm2368
        %v2370 = vsel %vm2369, %v2361, %v2366
        %v2371 = vrsqrt.pop %v2300
        %v2372 = vmul.f32 %v2371, %v2300
        %v2373 = vmul.f32 %v2372, %v2371
        %v2374 = vmul.f32 0.5, %v2373
        %v2375 = vsub.f32 1.5, %v2374
        %v2376 = vmul.f32 %v2371, %v2375
        %vm2377 = vweird.f32 %v2300
        %vm2378 = vweird.f32 %v2371
        %vm2379 = vmor %vm2377, %vm2378
        %v2380 = vsel %vm2379, %v2371, %v2376
        %v2381 = vmul.f32 %v2285, %v2310
        %v2382 = vmul.f32 %v2286, %v2320
        %v2383 = vmul.f32 %v2287, %v2330
        %v2384 = vmul.f32 %v2288, %v2340
        %v2385 = vmul.f32 %v2289, %v2350
        %v2386 = vmul.f32 %v2290, %v2360
        %v2387 = vmul.f32 %v2291, %v2370
        %v2388 = vmul.f32 %v2292, %v2380
        %v2389 = vperm.slane %v566, 2
        %v2390 = vmul.f32 %v2381, %v2389
        %v2391 = vmul.f32 %v2382, %v2389
        %v2392 = vmul.f32 %v2383, %v2389
        %v2393 = vmul.f32 %v2384, %v2389
        %v2394 = vmul.f32 %v2385, %v2389
        %v2395 = vmul.f32 %v2386, %v2389
        %v2396 = vmul.f32 %v2387, %v2389
        %v2397 = vmul.f32 %v2388, %v2389
        %v2398 = vperm.slane %v566, 3
        %v2399 = vadd.f32 %v2390, %v2398
        %v2400 = vadd.f32 %v2391, %v2398
        %v2401 = vadd.f32 %v2392, %v2398
        %v2402 = vadd.f32 %v2393, %v2398
        %v2403 = vadd.f32 %v2394, %v2398
        %v2404 = vadd.f32 %v2395, %v2398
        %v2405 = vadd.f32 %v2396, %v2398
        %v2406 = vadd.f32 %v2397, %v2398
        %v2407 = vpack.c.bf16 %v2400, %v2399
        %v2408 = vpack.c.bf16 %v2402, %v2401
        %v2409 = vpack.c.bf16 %v2404, %v2403
        %v2410 = vpack.c.bf16 %v2406, %v2405
        %v2412 = vperm.slane %v587, 0
        %v2418 = vunpack.c.l.b16 %v583
        %v2419 = vunpack.c.l.b16 %v584
        %v2420 = vunpack.c.l.b16 %v585
        %v2421 = vunpack.c.l.b16 %v586
        %v2422 = vpack.c.b16 %v2419, %v2418
        %v2423 = vpack.c.b16 %v2421, %v2420
        %v2427 = vsel %vm674, %v2407, 0
        %v2430 = vsel %vm674, %v2408, 0
        %v2433 = vsel %vm674, %v2409, 0
        %v2436 = vsel %vm674, %v2410, 0
        %2438 = vmatpush.bf16.msra.mxu0 0
        %2439 = vmatpush.bf16.msra.mxu0 0
        %2440 = vmatpush.bf16.msra.mxu0 0
        %2441 = vmatpush.bf16.msra.mxu0 0
        %2442 = vmatpush.bf16.msra.mxu0 0
        %2443 = vmatpush.bf16.msra.mxu0 0
        %2444 = vmatpush.bf16.msra.mxu0 %v2423
        %2445 = vmatpush.bf16.msra.mxu0 %v2422
        %2446 = vmatmul.bf16.gmra.mxu0 %v2427
        %v2447 = vpop.f32.mrf.mxu0
        %v2448 = vadd.f32 %v2412, %v2447
        %v2449 = vpop.f32.mrf.mxu0
        %v2450 = vadd.f32 %v2412, %v2449
        %2451 = vmatmul.bf16.gmra.mxu0 %v2430
        %v2452 = vpop.f32.mrf.mxu0
        %v2453 = vadd.f32 %v2412, %v2452
        %v2454 = vpop.f32.mrf.mxu0
        %v2455 = vadd.f32 %v2412, %v2454
        %2456 = vmatmul.bf16.gmra.mxu0 %v2433
        %v2457 = vpop.f32.mrf.mxu0
        %v2458 = vadd.f32 %v2412, %v2457
        %v2459 = vpop.f32.mrf.mxu0
        %v2460 = vadd.f32 %v2412, %v2459
        %2461 = vmatmul.bf16.gmra.mxu0 %v2436
        %v2462 = vpop.f32.mrf.mxu0
        %v2463 = vadd.f32 %v2412, %v2462
        %v2464 = vpop.f32.mrf.mxu0
        %v2465 = vadd.f32 %v2412, %v2464
        %2466 = vdwg.mxu0
        %v2467 = vmul.f32 %v2448, %v2448
        %v2468 = vmul.f32 %v2450, %v2450
        %v2469 = vmul.f32 %v2453, %v2453
        %v2470 = vmul.f32 %v2455, %v2455
        %v2471 = vmul.f32 %v2458, %v2458
        %v2472 = vmul.f32 %v2460, %v2460
        %v2473 = vmul.f32 %v2463, %v2463
        %v2474 = vmul.f32 %v2465, %v2465
        %v2475 = vmul.f32 %v2448, %v2467
        %v2476 = vmul.f32 %v2450, %v2468
        %v2477 = vmul.f32 %v2453, %v2469
        %v2478 = vmul.f32 %v2455, %v2470
        %v2479 = vmul.f32 %v2458, %v2471
        %v2480 = vmul.f32 %v2460, %v2472
        %v2481 = vmul.f32 %v2463, %v2473
        %v2482 = vmul.f32 %v2465, %v2474
        %v2483 = vmul.f32 %v2475, 0.044715
        %v2484 = vmul.f32 %v2476, 0.044715
        %v2485 = vmul.f32 %v2477, 0.044715
        %v2486 = vmul.f32 %v2478, 0.044715
        %v2487 = vmul.f32 %v2479, 0.044715
        %v2488 = vmul.f32 %v2480, 0.044715
        %v2489 = vmul.f32 %v2481, 0.044715
        %v2490 = vmul.f32 %v2482, 0.044715
        %v2491 = vadd.f32 %v2448, %v2483
        %v2492 = vadd.f32 %v2450, %v2484
        %v2493 = vadd.f32 %v2453, %v2485
        %v2494 = vadd.f32 %v2455, %v2486
        %v2495 = vadd.f32 %v2458, %v2487
        %v2496 = vadd.f32 %v2460, %v2488
        %v2497 = vadd.f32 %v2463, %v2489
        %v2498 = vadd.f32 %v2465, %v2490
        %v2499 = vmul.f32 %v2491, 0.7978846
        %v2500 = vmul.f32 %v2492, 0.7978846
        %v2501 = vmul.f32 %v2493, 0.7978846
        %v2502 = vmul.f32 %v2494, 0.7978846
        %v2503 = vmul.f32 %v2495, 0.7978846
        %v2504 = vmul.f32 %v2496, 0.7978846
        %v2505 = vmul.f32 %v2497, 0.7978846
        %v2506 = vmul.f32 %v2498, 0.7978846
        %v2507 = vtanh.pop %v2499
        %v2508 = vtanh.pop %v2500
        %v2509 = vtanh.pop %v2501
        %v2510 = vtanh.pop %v2502
        %v2511 = vtanh.pop %v2503
        %v2512 = vtanh.pop %v2504
        %v2513 = vtanh.pop %v2505
        %v2514 = vtanh.pop %v2506
        %v2515 = vadd.f32 %v2507, 1.0
        %v2516 = vadd.f32 %v2508, 1.0
        %v2517 = vadd.f32 %v2509, 1.0
        %v2518 = vadd.f32 %v2510, 1.0
        %v2519 = vadd.f32 %v2511, 1.0
        %v2520 = vadd.f32 %v2512, 1.0
        %v2521 = vadd.f32 %v2513, 1.0
        %v2522 = vadd.f32 %v2514, 1.0
        %v2523 = vmul.f32 %v2515, 0.5
        %v2524 = vmul.f32 %v2516, 0.5
        %v2525 = vmul.f32 %v2517, 0.5
        %v2526 = vmul.f32 %v2518, 0.5
        %v2527 = vmul.f32 %v2519, 0.5
        %v2528 = vmul.f32 %v2520, 0.5
        %v2529 = vmul.f32 %v2521, 0.5
        %v2530 = vmul.f32 %v2522, 0.5
        %v2531 = vmul.f32 %v2448, %v2523
        %v2532 = vmul.f32 %v2450, %v2524
        %v2533 = vmul.f32 %v2453, %v2525
        %v2534 = vmul.f32 %v2455, %v2526
        %v2535 = vmul.f32 %v2458, %v2527
        %v2536 = vmul.f32 %v2460, %v2528
        %v2537 = vmul.f32 %v2463, %v2529
        %v2538 = vmul.f32 %v2465, %v2530
        %v2539 = vpack.c.bf16 %v2532, %v2531
        %v2540 = vpack.c.bf16 %v2534, %v2533
        %v2541 = vpack.c.bf16 %v2536, %v2535
        %v2542 = vpack.c.bf16 %v2538, %v2537
        %v2559 = vunpack.c.l.b16 %v588
        %v2560 = vunpack.c.l.b16 %v589
        %v2561 = vunpack.c.l.b16 %v590
        %v2562 = vunpack.c.l.b16 %v591
        %v2563 = vunpack.c.l.b16 %v592
        %v2564 = vunpack.c.l.b16 %v593
        %v2565 = vunpack.c.l.b16 %v594
        %v2566 = vunpack.c.l.b16 %v595
        %v2567 = vunpack.c.l.b16 %v596
        %v2568 = vunpack.c.l.b16 %v597
        %v2569 = vunpack.c.l.b16 %v598
        %v2570 = vunpack.c.l.b16 %v599
        %v2571 = vunpack.c.l.b16 %v600
        %v2572 = vunpack.c.l.b16 %v601
        %v2573 = vunpack.c.l.b16 %v602
        %v2574 = vunpack.c.l.b16 %v603
        %v2575 = vpack.c.b16 %v2560, %v2559
        %v2576 = vpack.c.b16 %v2562, %v2561
        %v2577 = vpack.c.b16 %v2564, %v2563
        %v2578 = vpack.c.b16 %v2566, %v2565
        %v2579 = vpack.c.b16 %v2568, %v2567
        %v2580 = vpack.c.b16 %v2570, %v2569
        %v2581 = vpack.c.b16 %v2572, %v2571
        %v2582 = vpack.c.b16 %v2574, %v2573
        %2591 = vmatpush.bf16.msra.mxu0 %v2582
        %2592 = vmatpush.bf16.msra.mxu0 %v2581
        %2593 = vmatpush.bf16.msra.mxu0 %v2580
        %2594 = vmatpush.bf16.msra.mxu0 %v2579
        %2595 = vmatpush.bf16.msra.mxu0 %v2578
        %2596 = vmatpush.bf16.msra.mxu0 %v2577
        %2597 = vmatpush.bf16.msra.mxu0 %v2576
        %2598 = vmatpush.bf16.msra.mxu0 %v2575
        %2599 = vmatmul.bf16.gmra.mxu0 %v2539
        %v2600 = vpop.f32.mrf.mxu0
        %v2601 = vadd.f32 0.0, %v2600
        %v2602 = vpop.f32.mrf.mxu0
        %v2603 = vadd.f32 0.0, %v2602
        %2604 = vmatmul.bf16.gmra.mxu0 %v2540
        %v2605 = vpop.f32.mrf.mxu0
        %v2606 = vadd.f32 0.0, %v2605
        %v2607 = vpop.f32.mrf.mxu0
        %v2608 = vadd.f32 0.0, %v2607
        %2609 = vmatmul.bf16.gmra.mxu0 %v2541
        %v2610 = vpop.f32.mrf.mxu0
        %v2611 = vadd.f32 0.0, %v2610
        %v2612 = vpop.f32.mrf.mxu0
        %v2613 = vadd.f32 0.0, %v2612
        %2614 = vmatmul.bf16.gmra.mxu0 %v2542
        %v2615 = vpop.f32.mrf.mxu0
        %v2616 = vadd.f32 0.0, %v2615
        %v2617 = vpop.f32.mrf.mxu0
        %v2618 = vadd.f32 0.0, %v2617
        %2619 = vdwg.mxu0
        %v2620 = vadd.f32 %v2181, %v2601
        %v2621 = vadd.f32 %v2182, %v2603
        %v2622 = vadd.f32 %v2183, %v2606
        %v2623 = vadd.f32 %v2184, %v2608
        %v2624 = vadd.f32 %v2185, %v2611
        %v2625 = vadd.f32 %v2186, %v2613
        %v2626 = vadd.f32 %v2187, %v2616
        %v2627 = vadd.f32 %v2188, %v2618
        %v2628 = vperm.slane %v566, 4
        %v2629 = vadd.f32 %v2620, %v2628
        %v2630 = vadd.f32 %v2621, %v2628
        %v2631 = vadd.f32 %v2622, %v2628
        %v2632 = vadd.f32 %v2623, %v2628
        %v2633 = vadd.f32 %v2624, %v2628
        %v2634 = vadd.f32 %v2625, %v2628
        %v2635 = vadd.f32 %v2626, %v2628
        %v2636 = vadd.f32 %v2627, %v2628
        %v2637 = vsel %vm674, %v2629, 0.0
        %2638 = vadd.xlane.f32.xlu0 %v2637
        %v2639 = vpop.xlane.xlu0 %2638
        %v2640 = vsel %vm674, %v2630, 0.0
        %2641 = vadd.xlane.f32.xlu0 %v2640
        %v2642 = vpop.xlane.xlu0 %2641
        %v2643 = vsel %vm674, %v2631, 0.0
        %2644 = vadd.xlane.f32.xlu0 %v2643
        %v2645 = vpop.xlane.xlu0 %2644
        %v2646 = vsel %vm674, %v2632, 0.0
        %2647 = vadd.xlane.f32.xlu0 %v2646
        %v2648 = vpop.xlane.xlu0 %2647
        %v2649 = vsel %vm674, %v2633, 0.0
        %2650 = vadd.xlane.f32.xlu0 %v2649
        %v2651 = vpop.xlane.xlu0 %2650
        %v2652 = vsel %vm674, %v2634, 0.0
        %2653 = vadd.xlane.f32.xlu0 %v2652
        %v2654 = vpop.xlane.xlu0 %2653
        %v2655 = vsel %vm674, %v2635, 0.0
        %2656 = vadd.xlane.f32.xlu0 %v2655
        %v2657 = vpop.xlane.xlu0 %2656
        %v2658 = vsel %vm674, %v2636, 0.0
        %2659 = vadd.xlane.f32.xlu0 %v2658
        %v2660 = vpop.xlane.xlu0 %2659
        %v2661 = vmul.f32 %v2639, %v729
        %v2662 = vmul.f32 %v2642, %v729
        %v2663 = vmul.f32 %v2645, %v729
        %v2664 = vmul.f32 %v2648, %v729
        %v2665 = vmul.f32 %v2651, %v729
        %v2666 = vmul.f32 %v2654, %v729
        %v2667 = vmul.f32 %v2657, %v729
        %v2668 = vmul.f32 %v2660, %v729
        %v2669 = vmul.f32 %v2629, %v2629
        %v2670 = vmul.f32 %v2630, %v2630
        %v2671 = vmul.f32 %v2631, %v2631
        %v2672 = vmul.f32 %v2632, %v2632
        %v2673 = vmul.f32 %v2633, %v2633
        %v2674 = vmul.f32 %v2634, %v2634
        %v2675 = vmul.f32 %v2635, %v2635
        %v2676 = vmul.f32 %v2636, %v2636
        %v2677 = vsel %vm674, %v2669, 0.0
        %2678 = vadd.xlane.f32.xlu0 %v2677
        %v2679 = vpop.xlane.xlu0 %2678
        %v2680 = vsel %vm674, %v2670, 0.0
        %2681 = vadd.xlane.f32.xlu0 %v2680
        %v2682 = vpop.xlane.xlu0 %2681
        %v2683 = vsel %vm674, %v2671, 0.0
        %2684 = vadd.xlane.f32.xlu0 %v2683
        %v2685 = vpop.xlane.xlu0 %2684
        %v2686 = vsel %vm674, %v2672, 0.0
        %2687 = vadd.xlane.f32.xlu0 %v2686
        %v2688 = vpop.xlane.xlu0 %2687
        %v2689 = vsel %vm674, %v2673, 0.0
        %2690 = vadd.xlane.f32.xlu0 %v2689
        %v2691 = vpop.xlane.xlu0 %2690
        %v2692 = vsel %vm674, %v2674, 0.0
        %2693 = vadd.xlane.f32.xlu0 %v2692
        %v2694 = vpop.xlane.xlu0 %2693
        %v2695 = vsel %vm674, %v2675, 0.0
        %2696 = vadd.xlane.f32.xlu0 %v2695
        %v2697 = vpop.xlane.xlu0 %2696
        %v2698 = vsel %vm674, %v2676, 0.0
        %2699 = vadd.xlane.f32.xlu0 %v2698
        %v2700 = vpop.xlane.xlu0 %2699
        %v2701 = vmul.f32 %v2679, %v729
        %v2702 = vmul.f32 %v2682, %v729
        %v2703 = vmul.f32 %v2685, %v729
        %v2704 = vmul.f32 %v2688, %v729
        %v2705 = vmul.f32 %v2691, %v729
        %v2706 = vmul.f32 %v2694, %v729
        %v2707 = vmul.f32 %v2697, %v729
        %v2708 = vmul.f32 %v2700, %v729
        %v2709 = vmul.f32 %v2661, %v2661
        %v2710 = vmul.f32 %v2662, %v2662
        %v2711 = vmul.f32 %v2663, %v2663
        %v2712 = vmul.f32 %v2664, %v2664
        %v2713 = vmul.f32 %v2665, %v2665
        %v2714 = vmul.f32 %v2666, %v2666
        %v2715 = vmul.f32 %v2667, %v2667
        %v2716 = vmul.f32 %v2668, %v2668
        %v2717 = vsub.f32 %v2701, %v2709
        %v2718 = vsub.f32 %v2702, %v2710
        %v2719 = vsub.f32 %v2703, %v2711
        %v2720 = vsub.f32 %v2704, %v2712
        %v2721 = vsub.f32 %v2705, %v2713
        %v2722 = vsub.f32 %v2706, %v2714
        %v2723 = vsub.f32 %v2707, %v2715
        %v2724 = vsub.f32 %v2708, %v2716
        %v2725 = vmax.f32 %v2717, 0.0
        %v2726 = vmax.f32 %v2718, 0.0
        %v2727 = vmax.f32 %v2719, 0.0
        %v2728 = vmax.f32 %v2720, 0.0
        %v2729 = vmax.f32 %v2721, 0.0
        %v2730 = vmax.f32 %v2722, 0.0
        %v2731 = vmax.f32 %v2723, 0.0
        %v2732 = vmax.f32 %v2724, 0.0
        %v2733 = vsub.f32 %v2629, %v2661
        %v2734 = vsub.f32 %v2630, %v2662
        %v2735 = vsub.f32 %v2631, %v2663
        %v2736 = vsub.f32 %v2632, %v2664
        %v2737 = vsub.f32 %v2633, %v2665
        %v2738 = vsub.f32 %v2634, %v2666
        %v2739 = vsub.f32 %v2635, %v2667
        %v2740 = vsub.f32 %v2636, %v2668
        %v2741 = vadd.f32 %v2725, 1e-05
        %v2742 = vadd.f32 %v2726, 1e-05
        %v2743 = vadd.f32 %v2727, 1e-05
        %v2744 = vadd.f32 %v2728, 1e-05
        %v2745 = vadd.f32 %v2729, 1e-05
        %v2746 = vadd.f32 %v2730, 1e-05
        %v2747 = vadd.f32 %v2731, 1e-05
        %v2748 = vadd.f32 %v2732, 1e-05
        %v2749 = vrsqrt.pop %v2741
        %v2750 = vmul.f32 %v2749, %v2741
        %v2751 = vmul.f32 %v2750, %v2749
        %v2752 = vmul.f32 0.5, %v2751
        %v2753 = vsub.f32 1.5, %v2752
        %v2754 = vmul.f32 %v2749, %v2753
        %vm2755 = vweird.f32 %v2741
        %vm2756 = vweird.f32 %v2749
        %vm2757 = vmor %vm2755, %vm2756
        %v2758 = vsel %vm2757, %v2749, %v2754
        %v2759 = vrsqrt.pop %v2742
        %v2760 = vmul.f32 %v2759, %v2742
        %v2761 = vmul.f32 %v2760, %v2759
        %v2762 = vmul.f32 0.5, %v2761
        %v2763 = vsub.f32 1.5, %v2762
        %v2764 = vmul.f32 %v2759, %v2763
        %vm2765 = vweird.f32 %v2742
        %vm2766 = vweird.f32 %v2759
        %vm2767 = vmor %vm2765, %vm2766
        %v2768 = vsel %vm2767, %v2759, %v2764
        %v2769 = vrsqrt.pop %v2743
        %v2770 = vmul.f32 %v2769, %v2743
        %v2771 = vmul.f32 %v2770, %v2769
        %v2772 = vmul.f32 0.5, %v2771
        %v2773 = vsub.f32 1.5, %v2772
        %v2774 = vmul.f32 %v2769, %v2773
        %vm2775 = vweird.f32 %v2743
        %vm2776 = vweird.f32 %v2769
        %vm2777 = vmor %vm2775, %vm2776
        %v2778 = vsel %vm2777, %v2769, %v2774
        %v2779 = vrsqrt.pop %v2744
        %v2780 = vmul.f32 %v2779, %v2744
        %v2781 = vmul.f32 %v2780, %v2779
        %v2782 = vmul.f32 0.5, %v2781
        %v2783 = vsub.f32 1.5, %v2782
        %v2784 = vmul.f32 %v2779, %v2783
        %vm2785 = vweird.f32 %v2744
        %vm2786 = vweird.f32 %v2779
        %vm2787 = vmor %vm2785, %vm2786
        %v2788 = vsel %vm2787, %v2779, %v2784
        %v2789 = vrsqrt.pop %v2745
        %v2790 = vmul.f32 %v2789, %v2745
        %v2791 = vmul.f32 %v2790, %v2789
        %v2792 = vmul.f32 0.5, %v2791
        %v2793 = vsub.f32 1.5, %v2792
        %v2794 = vmul.f32 %v2789, %v2793
        %vm2795 = vweird.f32 %v2745
        %vm2796 = vweird.f32 %v2789
        %vm2797 = vmor %vm2795, %vm2796
        %v2798 = vsel %vm2797, %v2789, %v2794
        %v2799 = vrsqrt.pop %v2746
        %v2800 = vmul.f32 %v2799, %v2746
        %v2801 = vmul.f32 %v2800, %v2799
        %v2802 = vmul.f32 0.5, %v2801
        %v2803 = vsub.f32 1.5, %v2802
        %v2804 = vmul.f32 %v2799, %v2803
        %vm2805 = vweird.f32 %v2746
        %vm2806 = vweird.f32 %v2799
        %vm2807 = vmor %vm2805, %vm2806
        %v2808 = vsel %vm2807, %v2799, %v2804
        %v2809 = vrsqrt.pop %v2747
        %v2810 = vmul.f32 %v2809, %v2747
        %v2811 = vmul.f32 %v2810, %v2809
        %v2812 = vmul.f32 0.5, %v2811
        %v2813 = vsub.f32 1.5, %v2812
        %v2814 = vmul.f32 %v2809, %v2813
        %vm2815 = vweird.f32 %v2747
        %vm2816 = vweird.f32 %v2809
        %vm2817 = vmor %vm2815, %vm2816
        %v2818 = vsel %vm2817, %v2809, %v2814
        %v2819 = vrsqrt.pop %v2748
        %v2820 = vmul.f32 %v2819, %v2748
        %v2821 = vmul.f32 %v2820, %v2819
        %v2822 = vmul.f32 0.5, %v2821
        %v2823 = vsub.f32 1.5, %v2822
        %v2824 = vmul.f32 %v2819, %v2823
        %vm2825 = vweird.f32 %v2748
        %vm2826 = vweird.f32 %v2819
        %vm2827 = vmor %vm2825, %vm2826
        %v2828 = vsel %vm2827, %v2819, %v2824
        %v2829 = vmul.f32 %v2733, %v2758
        %v2830 = vmul.f32 %v2734, %v2768
        %v2831 = vmul.f32 %v2735, %v2778
        %v2832 = vmul.f32 %v2736, %v2788
        %v2833 = vmul.f32 %v2737, %v2798
        %v2834 = vmul.f32 %v2738, %v2808
        %v2835 = vmul.f32 %v2739, %v2818
        %v2836 = vmul.f32 %v2740, %v2828
        %v2837 = vperm.slane %v566, 5
        %v2838 = vmul.f32 %v2829, %v2837
        %v2839 = vmul.f32 %v2830, %v2837
        %v2840 = vmul.f32 %v2831, %v2837
        %v2841 = vmul.f32 %v2832, %v2837
        %v2842 = vmul.f32 %v2833, %v2837
        %v2843 = vmul.f32 %v2834, %v2837
        %v2844 = vmul.f32 %v2835, %v2837
        %v2845 = vmul.f32 %v2836, %v2837
        %v2846 = vperm.slane %v566, 6
        %v2847 = vadd.f32 %v2838, %v2846
        %v2848 = vadd.f32 %v2839, %v2846
        %v2849 = vadd.f32 %v2840, %v2846
        %v2850 = vadd.f32 %v2841, %v2846
        %v2851 = vadd.f32 %v2842, %v2846
        %v2852 = vadd.f32 %v2843, %v2846
        %v2853 = vadd.f32 %v2844, %v2846
        %v2854 = vadd.f32 %v2845, %v2846
        %v2855 = vsel %vm674, %v2847, 0.0
        %2856 = vadd.xlane.f32.xlu0 %v2855
        %v2857 = vpop.xlane.xlu0 %2856
        %v2858 = vsel %vm674, %v2848, 0.0
        %2859 = vadd.xlane.f32.xlu0 %v2858
        %v2860 = vpop.xlane.xlu0 %2859
        %v2861 = vsel %vm674, %v2849, 0.0
        %2862 = vadd.xlane.f32.xlu0 %v2861
        %v2863 = vpop.xlane.xlu0 %2862
        %v2864 = vsel %vm674, %v2850, 0.0
        %2865 = vadd.xlane.f32.xlu0 %v2864
        %v2866 = vpop.xlane.xlu0 %2865
        %v2867 = vsel %vm674, %v2851, 0.0
        %2868 = vadd.xlane.f32.xlu0 %v2867
        %v2869 = vpop.xlane.xlu0 %2868
        %v2870 = vsel %vm674, %v2852, 0.0
        %2871 = vadd.xlane.f32.xlu0 %v2870
        %v2872 = vpop.xlane.xlu0 %2871
        %v2873 = vsel %vm674, %v2853, 0.0
        %2874 = vadd.xlane.f32.xlu0 %v2873
        %v2875 = vpop.xlane.xlu0 %2874
        %v2876 = vsel %vm674, %v2854, 0.0
        %2877 = vadd.xlane.f32.xlu0 %v2876
        %v2878 = vpop.xlane.xlu0 %2877
        %v2879 = vmul.f32 %v2857, %v729
        %v2880 = vmul.f32 %v2860, %v729
        %v2881 = vmul.f32 %v2863, %v729
        %v2882 = vmul.f32 %v2866, %v729
        %v2883 = vmul.f32 %v2869, %v729
        %v2884 = vmul.f32 %v2872, %v729
        %v2885 = vmul.f32 %v2875, %v729
        %v2886 = vmul.f32 %v2878, %v729
        %v2887 = vmul.f32 %v2847, %v2847
        %v2888 = vmul.f32 %v2848, %v2848
        %v2889 = vmul.f32 %v2849, %v2849
        %v2890 = vmul.f32 %v2850, %v2850
        %v2891 = vmul.f32 %v2851, %v2851
        %v2892 = vmul.f32 %v2852, %v2852
        %v2893 = vmul.f32 %v2853, %v2853
        %v2894 = vmul.f32 %v2854, %v2854
        %v2895 = vsel %vm674, %v2887, 0.0
        %2896 = vadd.xlane.f32.xlu0 %v2895
        %v2897 = vpop.xlane.xlu0 %2896
        %v2898 = vsel %vm674, %v2888, 0.0
        %2899 = vadd.xlane.f32.xlu0 %v2898
        %v2900 = vpop.xlane.xlu0 %2899
        %v2901 = vsel %vm674, %v2889, 0.0
        %2902 = vadd.xlane.f32.xlu0 %v2901
        %v2903 = vpop.xlane.xlu0 %2902
        %v2904 = vsel %vm674, %v2890, 0.0
        %2905 = vadd.xlane.f32.xlu0 %v2904
        %v2906 = vpop.xlane.xlu0 %2905
        %v2907 = vsel %vm674, %v2891, 0.0
        %2908 = vadd.xlane.f32.xlu0 %v2907
        %v2909 = vpop.xlane.xlu0 %2908
        %v2910 = vsel %vm674, %v2892, 0.0
        %2911 = vadd.xlane.f32.xlu0 %v2910
        %v2912 = vpop.xlane.xlu0 %2911
        %v2913 = vsel %vm674, %v2893, 0.0
        %2914 = vadd.xlane.f32.xlu0 %v2913
        %v2915 = vpop.xlane.xlu0 %2914
        %v2916 = vsel %vm674, %v2894, 0.0
        %2917 = vadd.xlane.f32.xlu0 %v2916
        %v2918 = vpop.xlane.xlu0 %2917
        %v2919 = vmul.f32 %v2897, %v729
        %v2920 = vmul.f32 %v2900, %v729
        %v2921 = vmul.f32 %v2903, %v729
        %v2922 = vmul.f32 %v2906, %v729
        %v2923 = vmul.f32 %v2909, %v729
        %v2924 = vmul.f32 %v2912, %v729
        %v2925 = vmul.f32 %v2915, %v729
        %v2926 = vmul.f32 %v2918, %v729
        %v2927 = vmul.f32 %v2879, %v2879
        %v2928 = vmul.f32 %v2880, %v2880
        %v2929 = vmul.f32 %v2881, %v2881
        %v2930 = vmul.f32 %v2882, %v2882
        %v2931 = vmul.f32 %v2883, %v2883
        %v2932 = vmul.f32 %v2884, %v2884
        %v2933 = vmul.f32 %v2885, %v2885
        %v2934 = vmul.f32 %v2886, %v2886
        %v2935 = vsub.f32 %v2919, %v2927
        %v2936 = vsub.f32 %v2920, %v2928
        %v2937 = vsub.f32 %v2921, %v2929
        %v2938 = vsub.f32 %v2922, %v2930
        %v2939 = vsub.f32 %v2923, %v2931
        %v2940 = vsub.f32 %v2924, %v2932
        %v2941 = vsub.f32 %v2925, %v2933
        %v2942 = vsub.f32 %v2926, %v2934
        %v2943 = vmax.f32 %v2935, 0.0
        %v2944 = vmax.f32 %v2936, 0.0
        %v2945 = vmax.f32 %v2937, 0.0
        %v2946 = vmax.f32 %v2938, 0.0
        %v2947 = vmax.f32 %v2939, 0.0
        %v2948 = vmax.f32 %v2940, 0.0
        %v2949 = vmax.f32 %v2941, 0.0
        %v2950 = vmax.f32 %v2942, 0.0
        %v2951 = vsub.f32 %v2847, %v2879
        %v2952 = vsub.f32 %v2848, %v2880
        %v2953 = vsub.f32 %v2849, %v2881
        %v2954 = vsub.f32 %v2850, %v2882
        %v2955 = vsub.f32 %v2851, %v2883
        %v2956 = vsub.f32 %v2852, %v2884
        %v2957 = vsub.f32 %v2853, %v2885
        %v2958 = vsub.f32 %v2854, %v2886
        %v2959 = vadd.f32 %v2943, 1e-05
        %v2960 = vadd.f32 %v2944, 1e-05
        %v2961 = vadd.f32 %v2945, 1e-05
        %v2962 = vadd.f32 %v2946, 1e-05
        %v2963 = vadd.f32 %v2947, 1e-05
        %v2964 = vadd.f32 %v2948, 1e-05
        %v2965 = vadd.f32 %v2949, 1e-05
        %v2966 = vadd.f32 %v2950, 1e-05
        %v2967 = vrsqrt.pop %v2959
        %v2968 = vmul.f32 %v2967, %v2959
        %v2969 = vmul.f32 %v2968, %v2967
        %v2970 = vmul.f32 0.5, %v2969
        %v2971 = vsub.f32 1.5, %v2970
        %v2972 = vmul.f32 %v2967, %v2971
        %vm2973 = vweird.f32 %v2959
        %vm2974 = vweird.f32 %v2967
        %vm2975 = vmor %vm2973, %vm2974
        %v2976 = vsel %vm2975, %v2967, %v2972
        %v2977 = vrsqrt.pop %v2960
        %v2978 = vmul.f32 %v2977, %v2960
        %v2979 = vmul.f32 %v2978, %v2977
        %v2980 = vmul.f32 0.5, %v2979
        %v2981 = vsub.f32 1.5, %v2980
        %v2982 = vmul.f32 %v2977, %v2981
        %vm2983 = vweird.f32 %v2960
        %vm2984 = vweird.f32 %v2977
        %vm2985 = vmor %vm2983, %vm2984
        %v2986 = vsel %vm2985, %v2977, %v2982
        %v2987 = vrsqrt.pop %v2961
        %v2988 = vmul.f32 %v2987, %v2961
        %v2989 = vmul.f32 %v2988, %v2987
        %v2990 = vmul.f32 0.5, %v2989
        %v2991 = vsub.f32 1.5, %v2990
        %v2992 = vmul.f32 %v2987, %v2991
        %vm2993 = vweird.f32 %v2961
        %vm2994 = vweird.f32 %v2987
        %vm2995 = vmor %vm2993, %vm2994
        %v2996 = vsel %vm2995, %v2987, %v2992
        %v2997 = vrsqrt.pop %v2962
        %v2998 = vmul.f32 %v2997, %v2962
        %v2999 = vmul.f32 %v2998, %v2997
        %v3000 = vmul.f32 0.5, %v2999
        %v3001 = vsub.f32 1.5, %v3000
        %v3002 = vmul.f32 %v2997, %v3001
        %vm3003 = vweird.f32 %v2962
        %vm3004 = vweird.f32 %v2997
        %vm3005 = vmor %vm3003, %vm3004
        %v3006 = vsel %vm3005, %v2997, %v3002
        %v3007 = vrsqrt.pop %v2963
        %v3008 = vmul.f32 %v3007, %v2963
        %v3009 = vmul.f32 %v3008, %v3007
        %v3010 = vmul.f32 0.5, %v3009
        %v3011 = vsub.f32 1.5, %v3010
        %v3012 = vmul.f32 %v3007, %v3011
        %vm3013 = vweird.f32 %v2963
        %vm3014 = vweird.f32 %v3007
        %vm3015 = vmor %vm3013, %vm3014
        %v3016 = vsel %vm3015, %v3007, %v3012
        %v3017 = vrsqrt.pop %v2964
        %v3018 = vmul.f32 %v3017, %v2964
        %v3019 = vmul.f32 %v3018, %v3017
        %v3020 = vmul.f32 0.5, %v3019
        %v3021 = vsub.f32 1.5, %v3020
        %v3022 = vmul.f32 %v3017, %v3021
        %vm3023 = vweird.f32 %v2964
        %vm3024 = vweird.f32 %v3017
        %vm3025 = vmor %vm3023, %vm3024
        %v3026 = vsel %vm3025, %v3017, %v3022
        %v3027 = vrsqrt.pop %v2965
        %v3028 = vmul.f32 %v3027, %v2965
        %v3029 = vmul.f32 %v3028, %v3027
        %v3030 = vmul.f32 0.5, %v3029
        %v3031 = vsub.f32 1.5, %v3030
        %v3032 = vmul.f32 %v3027, %v3031
        %vm3033 = vweird.f32 %v2965
        %vm3034 = vweird.f32 %v3027
        %vm3035 = vmor %vm3033, %vm3034
        %v3036 = vsel %vm3035, %v3027, %v3032
        %v3037 = vrsqrt.pop %v2966
        %v3038 = vmul.f32 %v3037, %v2966
        %v3039 = vmul.f32 %v3038, %v3037
        %v3040 = vmul.f32 0.5, %v3039
        %v3041 = vsub.f32 1.5, %v3040
        %v3042 = vmul.f32 %v3037, %v3041
        %vm3043 = vweird.f32 %v2966
        %vm3044 = vweird.f32 %v3037
        %vm3045 = vmor %vm3043, %vm3044
        %v3046 = vsel %vm3045, %v3037, %v3042
        %v3047 = vmul.f32 %v2951, %v2976
        %v3048 = vmul.f32 %v2952, %v2986
        %v3049 = vmul.f32 %v2953, %v2996
        %v3050 = vmul.f32 %v2954, %v3006
        %v3051 = vmul.f32 %v2955, %v3016
        %v3052 = vmul.f32 %v2956, %v3026
        %v3053 = vmul.f32 %v2957, %v3036
        %v3054 = vmul.f32 %v2958, %v3046
        %v3055 = vperm.slane %v566, 7
        %v3056 = vmul.f32 %v3047, %v3055
        %v3057 = vmul.f32 %v3048, %v3055
        %v3058 = vmul.f32 %v3049, %v3055
        %v3059 = vmul.f32 %v3050, %v3055
        %v3060 = vmul.f32 %v3051, %v3055
        %v3061 = vmul.f32 %v3052, %v3055
        %v3062 = vmul.f32 %v3053, %v3055
        %v3063 = vmul.f32 %v3054, %v3055
        %v3064 = vperm.slane %v567, 0
        %v3065 = vadd.f32 %v3056, %v3064
        %v3066 = vadd.f32 %v3057, %v3064
        %v3067 = vadd.f32 %v3058, %v3064
        %v3068 = vadd.f32 %v3059, %v3064
        %v3069 = vadd.f32 %v3060, %v3064
        %v3070 = vadd.f32 %v3061, %v3064
        %v3071 = vadd.f32 %v3062, %v3064
        %v3072 = vadd.f32 %v3063, %v3064
        %v3073 = vperm.slane %v567, 1
        %v3074 = vmul.f32 %v3065, %v3073
        %v3075 = vmul.f32 %v3066, %v3073
        %v3076 = vmul.f32 %v3067, %v3073
        %v3077 = vmul.f32 %v3068, %v3073
        %v3078 = vmul.f32 %v3069, %v3073
        %v3079 = vmul.f32 %v3070, %v3073
        %v3080 = vmul.f32 %v3071, %v3073
        %v3081 = vmul.f32 %v3072, %v3073
        %v3082 = vsel %vm674, %v3074, 0.0
        %3083 = vadd.xlane.f32.xlu0 %v3082
        %v3084 = vpop.xlane.xlu0 %3083
        %v3085 = vsel %vm674, %v3075, 0.0
        %3086 = vadd.xlane.f32.xlu0 %v3085
        %v3087 = vpop.xlane.xlu0 %3086
        %v3088 = vsel %vm674, %v3076, 0.0
        %3089 = vadd.xlane.f32.xlu0 %v3088
        %v3090 = vpop.xlane.xlu0 %3089
        %v3091 = vsel %vm674, %v3077, 0.0
        %3092 = vadd.xlane.f32.xlu0 %v3091
        %v3093 = vpop.xlane.xlu0 %3092
        %v3094 = vsel %vm674, %v3078, 0.0
        %3095 = vadd.xlane.f32.xlu0 %v3094
        %v3096 = vpop.xlane.xlu0 %3095
        %v3097 = vsel %vm674, %v3079, 0.0
        %3098 = vadd.xlane.f32.xlu0 %v3097
        %v3099 = vpop.xlane.xlu0 %3098
        %v3100 = vsel %vm674, %v3080, 0.0
        %3101 = vadd.xlane.f32.xlu0 %v3100
        %v3102 = vpop.xlane.xlu0 %3101
        %v3103 = vsel %vm674, %v3081, 0.0
        %3104 = vadd.xlane.f32.xlu0 %v3103
        %v3105 = vpop.xlane.xlu0 %3104
        %v3114 = vlaneseq
        %v3115 = vand.u32 %v3114, 127
        %v3116 = vperm.slane %v3084, %v3115
        %v3117 = vperm.slane %v3087, %v3115
        %v3118 = vperm.slane %v3090, %v3115
        %v3119 = vperm.slane %v3093, %v3115
        %v3120 = vperm.slane %v3096, %v3115
        %v3121 = vperm.slane %v3099, %v3115
        %v3122 = vperm.slane %v3102, %v3115
        %v3123 = vperm.slane %v3105, %v3115
        %v3124 = vsel %vm1890, %v3117, %v3116
        %v3125 = vsel %vm1893, %v3118, %v3124
        %v3126 = vsel %vm1896, %v3119, %v3125
        %v3127 = vsel %vm1899, %v3120, %v3126
        %v3128 = vsel %vm1902, %v3121, %v3127
        %v3129 = vsel %vm1905, %v3122, %v3128
        %v3130 = vsel %vm1908, %v3123, %v3129
        %v3132 = vsel %vm1270, %v3130, -inf
        %3133 = vmax.xlane.f32.xlu0 %v3132
        %v3134 = vpop.xlane.xlu0 %3133
        %v3136 = vperm.slane %v3134, 0
        %v3137 = vperm.slane %v3134, 1
        %v3138 = vperm.slane %v3134, 2
        %v3139 = vperm.slane %v3134, 3
        %v3140 = vperm.slane %v3134, 4
        %v3141 = vperm.slane %v3134, 5
        %v3142 = vperm.slane %v3134, 6
        %v3143 = vperm.slane %v3134, 7
        %v3152 = vsub.f32 %v3084, %v3136
        %v3153 = vsub.f32 %v3087, %v3137
        %v3154 = vsub.f32 %v3090, %v3138
        %v3155 = vsub.f32 %v3093, %v3139
        %v3156 = vsub.f32 %v3096, %v3140
        %v3157 = vsub.f32 %v3099, %v3141
        %v3158 = vsub.f32 %v3102, %v3142
        %v3159 = vsub.f32 %v3105, %v3143
        %v3160 = vmul.f32 %v3152, 1.442695
        %v3161 = vpow.pop %v3160
        %v3162 = vmul.f32 %v3153, 1.442695
        %v3163 = vpow.pop %v3162
        %v3164 = vmul.f32 %v3154, 1.442695
        %v3165 = vpow.pop %v3164
        %v3166 = vmul.f32 %v3155, 1.442695
        %v3167 = vpow.pop %v3166
        %v3168 = vmul.f32 %v3156, 1.442695
        %v3169 = vpow.pop %v3168
        %v3170 = vmul.f32 %v3157, 1.442695
        %v3171 = vpow.pop %v3170
        %v3172 = vmul.f32 %v3158, 1.442695
        %v3173 = vpow.pop %v3172
        %v3174 = vmul.f32 %v3159, 1.442695
        %v3175 = vpow.pop %v3174
        %3184 = vset.pattern.permute.xlu0 0
        %3185 = vperm.xlu0 %3184, %v3161
        %v3186 = vpop.permute.xlu0 %3185
        %3187 = vset.pattern.permute.xlu0 0
        %3188 = vperm.xlu0 %3187, %v3163
        %v3189 = vpop.permute.xlu0 %3188
        %3190 = vset.pattern.permute.xlu0 0
        %3191 = vperm.xlu0 %3190, %v3165
        %v3192 = vpop.permute.xlu0 %3191
        %3193 = vset.pattern.permute.xlu0 0
        %3194 = vperm.xlu0 %3193, %v3167
        %v3195 = vpop.permute.xlu0 %3194
        %3196 = vset.pattern.permute.xlu0 0
        %3197 = vperm.xlu0 %3196, %v3169
        %v3198 = vpop.permute.xlu0 %3197
        %3199 = vset.pattern.permute.xlu0 0
        %3200 = vperm.xlu0 %3199, %v3171
        %v3201 = vpop.permute.xlu0 %3200
        %3202 = vset.pattern.permute.xlu0 0
        %3203 = vperm.xlu0 %3202, %v3173
        %v3204 = vpop.permute.xlu0 %3203
        %3205 = vset.pattern.permute.xlu0 0
        %3206 = vperm.xlu0 %3205, %v3175
        %v3207 = vpop.permute.xlu0 %3206
        %v3208 = vperm.slane %v3186, %v3115
        %v3209 = vperm.slane %v3189, %v3115
        %v3210 = vperm.slane %v3192, %v3115
        %v3211 = vperm.slane %v3195, %v3115
        %v3212 = vperm.slane %v3198, %v3115
        %v3213 = vperm.slane %v3201, %v3115
        %v3214 = vperm.slane %v3204, %v3115
        %v3215 = vperm.slane %v3207, %v3115
        %v3216 = vsel %vm1890, %v3209, %v3208
        %v3217 = vsel %vm1893, %v3210, %v3216
        %v3218 = vsel %vm1896, %v3211, %v3217
        %v3219 = vsel %vm1899, %v3212, %v3218
        %v3220 = vsel %vm1902, %v3213, %v3219
        %v3221 = vsel %vm1905, %v3214, %v3220
        %v3222 = vsel %vm1908, %v3215, %v3221
        %v3224 = vsel %vm1270, %v3222, 0.0
        %3225 = vadd.xlane.f32.xlu0 %v3224
        %v3226 = vpop.xlane.xlu0 %3225
        %v3227 = vrcp.pop %v3226
        %v3229 = vperm.slane %v3227, 0
        %v3230 = vperm.slane %v3227, 1
        %v3231 = vperm.slane %v3227, 2
        %v3232 = vperm.slane %v3227, 3
        %v3233 = vperm.slane %v3227, 4
        %v3234 = vperm.slane %v3227, 5
        %v3235 = vperm.slane %v3227, 6
        %v3236 = vperm.slane %v3227, 7
        %v3245 = vmul.f32 %v3161, %v3229
        %v3246 = vmul.f32 %v3163, %v3230
        %v3247 = vmul.f32 %v3165, %v3231
        %v3248 = vmul.f32 %v3167, %v3232
        %v3249 = vmul.f32 %v3169, %v3233
        %v3250 = vmul.f32 %v3171, %v3234
        %v3251 = vmul.f32 %v3173, %v3235
        %v3252 = vmul.f32 %v3175, %v3236
        %3254 = vset.pattern.permute.xlu0 0
        %3255 = vperm.xlu0 %3254, %v3245
        %v3256 = vpop.permute.xlu0 %3255
        %3259 = vset.pattern.permute.xlu0 0
        %3260 = vperm.xlu0 %3259, %v3246
        %v3261 = vpop.permute.xlu0 %3260
        %3264 = vset.pattern.permute.xlu0 0
        %3265 = vperm.xlu0 %3264, %v3247
        %v3266 = vpop.permute.xlu0 %3265
        %3269 = vset.pattern.permute.xlu0 0
        %3270 = vperm.xlu0 %3269, %v3248
        %v3271 = vpop.permute.xlu0 %3270
        %3274 = vset.pattern.permute.xlu0 0
        %3275 = vperm.xlu0 %3274, %v3249
        %v3276 = vpop.permute.xlu0 %3275
        %3279 = vset.pattern.permute.xlu0 0
        %3280 = vperm.xlu0 %3279, %v3250
        %v3281 = vpop.permute.xlu0 %3280
        %3284 = vset.pattern.permute.xlu0 0
        %3285 = vperm.xlu0 %3284, %v3251
        %v3286 = vpop.permute.xlu0 %3285
        %3289 = vset.pattern.permute.xlu0 0
        %3290 = vperm.xlu0 %3289, %v3252
        %v3291 = vpop.permute.xlu0 %3290
        %v3293 = vmul.f32 %v2847, %v3256
        %v3294 = vmul.f32 %v2848, %v3261
        %v3295 = vmul.f32 %v2849, %v3266
        %v3296 = vmul.f32 %v2850, %v3271
        %v3297 = vmul.f32 %v2851, %v3276
        %v3298 = vmul.f32 %v2852, %v3281
        %v3299 = vmul.f32 %v2853, %v3286
        %v3300 = vmul.f32 %v2854, %v3291
        %v3301 = vsel %vm674, %v3293, 0.0
        %v3302 = vrot.slane %v3301, 4
        %v3303 = vadd.f32 %v3301, %v3302
        %v3304 = vrot.slane %v3303, 2
        %v3305 = vadd.f32 %v3303, %v3304
        %v3306 = vrot.slane %v3305, 1
        %v3307 = vadd.f32 %v3305, %v3306
        %v3308 = vsel %vm674, %v3294, 0.0
        %v3309 = vrot.slane %v3308, 4
        %v3310 = vadd.f32 %v3308, %v3309
        %v3311 = vrot.slane %v3310, 2
        %v3312 = vadd.f32 %v3310, %v3311
        %v3313 = vrot.slane %v3312, 1
        %v3314 = vadd.f32 %v3312, %v3313
        %v3315 = vsel %vm674, %v3295, 0.0
        %v3316 = vrot.slane %v3315, 4
        %v3317 = vadd.f32 %v3315, %v3316
        %v3318 = vrot.slane %v3317, 2
        %v3319 = vadd.f32 %v3317, %v3318
        %v3320 = vrot.slane %v3319, 1
        %v3321 = vadd.f32 %v3319, %v3320
        %v3322 = vsel %vm674, %v3296, 0.0
        %v3323 = vrot.slane %v3322, 4
        %v3324 = vadd.f32 %v3322, %v3323
        %v3325 = vrot.slane %v3324, 2
        %v3326 = vadd.f32 %v3324, %v3325
        %v3327 = vrot.slane %v3326, 1
        %v3328 = vadd.f32 %v3326, %v3327
        %v3329 = vsel %vm674, %v3297, 0.0
        %v3330 = vrot.slane %v3329, 4
        %v3331 = vadd.f32 %v3329, %v3330
        %v3332 = vrot.slane %v3331, 2
        %v3333 = vadd.f32 %v3331, %v3332
        %v3334 = vrot.slane %v3333, 1
        %v3335 = vadd.f32 %v3333, %v3334
        %v3336 = vsel %vm674, %v3298, 0.0
        %v3337 = vrot.slane %v3336, 4
        %v3338 = vadd.f32 %v3336, %v3337
        %v3339 = vrot.slane %v3338, 2
        %v3340 = vadd.f32 %v3338, %v3339
        %v3341 = vrot.slane %v3340, 1
        %v3342 = vadd.f32 %v3340, %v3341
        %v3343 = vsel %vm674, %v3299, 0.0
        %v3344 = vrot.slane %v3343, 4
        %v3345 = vadd.f32 %v3343, %v3344
        %v3346 = vrot.slane %v3345, 2
        %v3347 = vadd.f32 %v3345, %v3346
        %v3348 = vrot.slane %v3347, 1
        %v3349 = vadd.f32 %v3347, %v3348
        %v3350 = vsel %vm674, %v3300, 0.0
        %v3351 = vrot.slane %v3350, 4
        %v3352 = vadd.f32 %v3350, %v3351
        %v3353 = vrot.slane %v3352, 2
        %v3354 = vadd.f32 %v3352, %v3353
        %v3355 = vrot.slane %v3354, 1
        %v3356 = vadd.f32 %v3354, %v3355
        %v3357 = vpack.c.bf16 %v3307, %v3307
        %v3358 = vpack.c.bf16 %v3314, %v3314
        %v3359 = vpack.c.bf16 %v3321, %v3321
        %v3360 = vpack.c.bf16 %v3328, %v3328
        %v3361 = vpack.c.bf16 %v3335, %v3335
        %v3362 = vpack.c.bf16 %v3342, %v3342
        %v3363 = vpack.c.bf16 %v3349, %v3349
        %v3364 = vpack.c.bf16 %v3356, %v3356
        %v3366 = vperm.slane %v608, 0
        %v3367 = vperm.slane %v608, 1
        %v3378 = vunpack.c.l.b16 %v3357
        %v3379 = vunpack.c.l.b16 %v3358
        %v3380 = vunpack.c.l.b16 %v3359
        %v3381 = vunpack.c.l.b16 %v3360
        %v3382 = vunpack.c.l.b16 %v3361
        %v3383 = vunpack.c.l.b16 %v3362
        %v3384 = vunpack.c.l.b16 %v3363
        %v3385 = vunpack.c.l.b16 %v3364
        %v3386 = vsel %vm1890, %v3379, %v3378
        %v3387 = vsel %vm1893, %v3380, %v3386
        %v3388 = vsel %vm1896, %v3381, %v3387
        %v3389 = vsel %vm1899, %v3382, %v3388
        %v3390 = vsel %vm1902, %v3383, %v3389
        %v3391 = vsel %vm1905, %v3384, %v3390
        %v3392 = vsel %vm1908, %v3385, %v3391
        %v3393 = vpack.c.b16 %v3392, %v3392
        %v3398 = vunpack.c.l.b16 %v604
        %v3399 = vunpack.c.h.b16 %v604
        %v3400 = vunpack.c.l.b16 %v605
        %v3401 = vunpack.c.h.b16 %v605
        %v3402 = vunpack.c.l.b16 %v606
        %v3403 = vunpack.c.h.b16 %v606
        %v3404 = vunpack.c.l.b16 %v607
        %v3405 = vunpack.c.h.b16 %v607
        %v3406 = vpack.c.b16 %v3400, %v3398
        %v3407 = vpack.c.b16 %v3401, %v3399
        %v3408 = vpack.c.b16 %v3404, %v3402
        %v3409 = vpack.c.b16 %v3405, %v3403
        %v3415 = vsel %vm674, %v3393, 0
        %3417 = vmatpush.bf16.msra.mxu0 0
        %3418 = vmatpush.bf16.msra.mxu0 0
        %3419 = vmatpush.bf16.msra.mxu0 0
        %3420 = vmatpush.bf16.msra.mxu0 0
        %3421 = vmatpush.bf16.msra.mxu0 0
        %3422 = vmatpush.bf16.msra.mxu0 0
        %3423 = vmatpush.bf16.msra.mxu0 %v3408
        %3424 = vmatpush.bf16.msra.mxu0 %v3406
        %3425 = vmatmul.bf16.gmra.mxu0 %v3415
        %v3426 = vpop.f32.mrf.mxu0
        %v3427 = vadd.f32 %v3366, %v3426
        %v3428 = vpop.f32.mrf.mxu0
        %3429 = vdwg.mxu0
        %3430 = vmatpush.bf16.msra.mxu0 0
        %3431 = vmatpush.bf16.msra.mxu0 0
        %3432 = vmatpush.bf16.msra.mxu0 0
        %3433 = vmatpush.bf16.msra.mxu0 0
        %3434 = vmatpush.bf16.msra.mxu0 0
        %3435 = vmatpush.bf16.msra.mxu0 0
        %3436 = vmatpush.bf16.msra.mxu0 %v3409
        %3437 = vmatpush.bf16.msra.mxu0 %v3407
        %3438 = vmatmul.bf16.gmra.mxu0 %v3415
        %v3439 = vpop.f32.mrf.mxu0
        %v3440 = vadd.f32 %v3367, %v3439
        %v3441 = vpop.f32.mrf.mxu0
        %3442 = vdwg.mxu0
        %v3443 = vmax.f32 %v3427, 0.0
        %v3444 = vmax.f32 %v3440, 0.0
        %v3445 = vpack.c.bf16 %v3443, %v3443
        %v3446 = vpack.c.bf16 %v3444, %v3444
        %v3448 = vperm.slane %v641, 0
        %v3482 = vunpack.c.l.b16 %v609
        %v3483 = vunpack.c.l.b16 %v610
        %v3484 = vunpack.c.l.b16 %v611
        %v3485 = vunpack.c.l.b16 %v612
        %v3486 = vunpack.c.l.b16 %v613
        %v3487 = vunpack.c.l.b16 %v614
        %v3488 = vunpack.c.l.b16 %v615
        %v3489 = vunpack.c.l.b16 %v616
        %v3490 = vunpack.c.l.b16 %v617
        %v3491 = vunpack.c.l.b16 %v618
        %v3492 = vunpack.c.l.b16 %v619
        %v3493 = vunpack.c.l.b16 %v620
        %v3494 = vunpack.c.l.b16 %v621
        %v3495 = vunpack.c.l.b16 %v622
        %v3496 = vunpack.c.l.b16 %v623
        %v3497 = vunpack.c.l.b16 %v624
        %v3498 = vunpack.c.l.b16 %v625
        %v3499 = vunpack.c.l.b16 %v626
        %v3500 = vunpack.c.l.b16 %v627
        %v3501 = vunpack.c.l.b16 %v628
        %v3502 = vunpack.c.l.b16 %v629
        %v3503 = vunpack.c.l.b16 %v630
        %v3504 = vunpack.c.l.b16 %v631
        %v3505 = vunpack.c.l.b16 %v632
        %v3506 = vunpack.c.l.b16 %v633
        %v3507 = vunpack.c.l.b16 %v634
        %v3508 = vunpack.c.l.b16 %v635
        %v3509 = vunpack.c.l.b16 %v636
        %v3510 = vunpack.c.l.b16 %v637
        %v3511 = vunpack.c.l.b16 %v638
        %v3512 = vunpack.c.l.b16 %v639
        %v3513 = vunpack.c.l.b16 %v640
        %v3514 = vpack.c.b16 %v3483, %v3482
        %v3515 = vpack.c.b16 %v3485, %v3484
        %v3516 = vpack.c.b16 %v3487, %v3486
        %v3517 = vpack.c.b16 %v3489, %v3488
        %v3518 = vpack.c.b16 %v3491, %v3490
        %v3519 = vpack.c.b16 %v3493, %v3492
        %v3520 = vpack.c.b16 %v3495, %v3494
        %v3521 = vpack.c.b16 %v3497, %v3496
        %v3522 = vpack.c.b16 %v3499, %v3498
        %v3523 = vpack.c.b16 %v3501, %v3500
        %v3524 = vpack.c.b16 %v3503, %v3502
        %v3525 = vpack.c.b16 %v3505, %v3504
        %v3526 = vpack.c.b16 %v3507, %v3506
        %v3527 = vpack.c.b16 %v3509, %v3508
        %v3528 = vpack.c.b16 %v3511, %v3510
        %v3529 = vpack.c.b16 %v3513, %v3512
        %3546 = vmatpush.bf16.msra.mxu0 %v3521
        %3547 = vmatpush.bf16.msra.mxu0 %v3520
        %3548 = vmatpush.bf16.msra.mxu0 %v3519
        %3549 = vmatpush.bf16.msra.mxu0 %v3518
        %3550 = vmatpush.bf16.msra.mxu0 %v3517
        %3551 = vmatpush.bf16.msra.mxu0 %v3516
        %3552 = vmatpush.bf16.msra.mxu0 %v3515
        %3553 = vmatpush.bf16.msra.mxu0 %v3514
        %3554 = vmatmul.bf16.gmra.mxu0 %v3445
        %v3555 = vpop.f32.mrf.mxu0
        %v3556 = vadd.f32 %v3448, %v3555
        %v3557 = vpop.f32.mrf.mxu0
        %3558 = vdwg.mxu0
        %3559 = vmatpush.bf16.msra.mxu0 %v3529
        %3560 = vmatpush.bf16.msra.mxu0 %v3528
        %3561 = vmatpush.bf16.msra.mxu0 %v3527
        %3562 = vmatpush.bf16.msra.mxu0 %v3526
        %3563 = vmatpush.bf16.msra.mxu0 %v3525
        %3564 = vmatpush.bf16.msra.mxu0 %v3524
        %3565 = vmatpush.bf16.msra.mxu0 %v3523
        %3566 = vmatpush.bf16.msra.mxu0 %v3522
        %3567 = vmatmul.bf16.gmra.mxu0 %v3446
        %v3568 = vpop.f32.mrf.mxu0
        %v3569 = vadd.f32 %v3556, %v3568
        %v3570 = vpop.f32.mrf.mxu0
        %3571 = vdwg.mxu0
        %3572 = vst [vmem:[%s563] sm:$0xff] %v3569
        %s3573 = sand.u32 %s362, 1
        %s3574 = scalar_lea.sflag [#allocation4], %s3573
        %s3575 = sand.u32 %s362, 1
        %s3576 = smul.addr %s3575, 8
        %s3577 = scalar_lea.vmem [#allocation10], %s3576
        // Predicated region
        $region97: #{tpu_custom_call.1} parent=79 // pred_check
          %p3578 = pneg %p372
        $region98: #{tpu_custom_call.1} parent=79 // pred_check_branch
          %3580 = sbr.rel (%p3578) target = $region100
        $region99: #{tpu_custom_call.1} parent=79 // pred_region
          %3582 = vsyncadd %s3574, 0
          %s3583 = smul.addr %s34, 8
          %s3584 = scalar_lea.hbm %s15, %s3583
          %s3586 = sshll.u32 %s3577, 4
          %s3587 = int_to_ptr.vmem [resolvable:$true] %s3586
          %s3588 = sshll.u32 %s3584, 4
          %s3589 = int_to_ptr.hbm [resolvable:$true] %s3588
          %3591 = dma.vmem_to_hbm [thread:$0]  %s3587, 128, %s3589, %s3574
        $region100: #{tpu_custom_call.1} parent=79 // pred_fallthru
          _
      $region80: #{tpu_custom_call.1} parent=5 // pred_fallthru
        _
      %p3592 = scmp.le.s32.totalorder 2, %s29
      // Predicated region
      $region101: #{tpu_custom_call.1} parent=5 // pred_check
        %p3593 = pneg %p3592
      $region102: #{tpu_custom_call.1} parent=5 // pred_check_branch
        %3595 = sbr.rel (%p3593) target = $region104
      $region103: #{tpu_custom_call.1} parent=5 // pred_region
        %s3596 = ssub.s32 %s29, 2
        // Predicated region
        $region105: #{tpu_custom_call.1} parent=103 // pred_check
          %p3597 = pneg %p378
        $region106: #{tpu_custom_call.1} parent=103 // pred_check_branch
          %3599 = sbr.rel (%p3597) target = $region108
        $region107: #{tpu_custom_call.1} parent=103 // pred_region
          %s3600 = sand.u32 %s363, 1
          %s3601 = scalar_lea.sflag [#allocation4], %s3600
          %s3602 = sand.u32 %s363, 1
          %s3603 = smul.addr %s3602, 8
          %s3604 = scalar_lea.vmem [#allocation10], %s3603
          %3606 = dma.done %s3601, 128
        $region108: #{tpu_custom_call.1} parent=103 // pred_fallthru
          _
      $region104: #{tpu_custom_call.1} parent=5 // pred_fallthru
        _
    $region6: #{tpu_custom_call.1} parent=1 // loop_footer
      %s33 = sadd.s32 1, %s29
    $region7: #{tpu_custom_call.1} parent=1 // loop_footer_branch
      %28 = sbr.rel target = $region3
    $region8: #{tpu_custom_call.1} parent=1 // loop_exit
      _
    %3607 = vsyncpa [#allocation3], 1
    %s3608 = scalar_lea.sflag [#allocation3], 1
    %3609 = vsyncpa %s3608, 1
    %3610 = vsyncpa [#allocation6], 1
    %3611 = vsyncpa [#allocation9], 1
    %3612 = vsyncpa [#allocation4], 1
    %s3613 = scalar_lea.sflag [#allocation4], 1
    %3614 = vsyncpa %s3613, 1

</llo_original>
